<compile_context>
chip_gen: v6e
topology: v6e:2x2x1
jax: 0.10.0
libtpu: 0.0.40
codegen_flags: <defaults>
</compile_context>

<pallas_src>
import functools

import jax
import jax.numpy as jnp
from jax.experimental import pallas as pl
from jax.experimental.pallas import tpu as pltpu


# ---------------------------------------------------------------------------
# Wrapper-side layout helpers ("row layout" = [B*N*T, C]).  These reproduce the
# PyTorch  x.permute(0,3,1,2).contiguous().view(B*N, C, T)  raw reinterpretation
# exactly (including the dimension mixing it causes when N != T).
# ---------------------------------------------------------------------------
def _to_rows(x):
    """[B, T, N, C] -> [B*N*T, C] in the module's conv-row order."""
    B, T, N, C = x.shape
    xt = jnp.transpose(x, (0, 3, 1, 2)).reshape(B * N, C, T)   # raw view(B*N, C, T)
    return jnp.transpose(xt, (0, 2, 1)).reshape(B * N * T, C)


def _from_rows(y, B, T, N):
    """[B*N*T, C] (rows ordered (m, t)) -> logical [B, T, N, C].

    Matches the module's  out.view(B, N, C, T).permute(0, 3, 1, 2)."""
    C = y.shape[-1]
    return jnp.transpose(y.reshape(B, N, T, C), (0, 2, 1, 3))


def _row_onehots(B, T, N):
    """Static one-hot encodings of each row's (node, batch, time, adj-slot)."""
    MT = B * N * T
    r = jnp.arange(MT)
    m = r // T                       # PyTorch conv-row index (= b * N + n)
    t = r % T
    b = m // N
    n = m % N
    f32 = jnp.float32
    ind_n = (n[:, None] == jnp.arange(N)[None, :]).astype(f32)   # [MT, N]
    ind_b = (b[:, None] == jnp.arange(B)[None, :]).astype(f32)   # [MT, B]
    ind_t = (t[:, None] == jnp.arange(T)[None, :]).astype(f32)   # [MT, T]
    # flattened (b, t) slice i = b*T + t uses adj[i % B]  (the adj.repeat quirk)
    sel = (((b * T + t) % B)[:, None] == jnp.arange(B)[None, :]).astype(f32)
    return ind_n, ind_b, ind_t, sel


def _cat_taps(w3):
    """[3, Cin, Cout] -> [Cin, 3*Cout]: one matmul computes all three taps."""
    return jnp.concatenate([w3[0], w3[1], w3[2]], axis=1)


# ---------------------------------------------------------------------------
# In-kernel building blocks
# ---------------------------------------------------------------------------
def _abT(a, b):
    """a @ b.T as a single dot_general (no explicit transpose/relayout)."""
    return jax.lax.dot_general(a, b, (((1,), (1,)), ((), ())),
                               preferred_element_type=jnp.float32)


def _conv3(h, w_cat, b, not_first, not_last):
    """Conv1d(k=3, pad=1) over the row layout as ONE MXU matmul.

    w_cat = [W_{t-1} | W_t | W_{t+1}] ([Cin, 3*Cout]); the +-1 time shifts are
    applied to the matmul OUTPUT taps with jnp.roll + boundary masks (the masks
    also kill the roll wrap-around / cross-row contamination)."""
    cout = b.shape[-1]
    y = jnp.dot(h, w_cat, preferred_element_type=jnp.float32)    # [MT, 3*Cout]
    y_prev = jnp.roll(y[:, :cout], 1, axis=0) * not_first        # tap from t-1
    y_next = jnp.roll(y[:, 2 * cout:], -1, axis=0) * not_last    # tap from t+1
    return y_prev + y[:, cout:2 * cout] + y_next + b


def _temporal_stage(x, not_first, not_last, w1, b1, w2, b2, wd, bd):
    """conv(k=3) -> ReLU -> conv(k=3) -> ReLU -> (+ 1x1 residual) -> ReLU."""
    h1 = jnp.maximum(_conv3(x, w1, b1, not_first, not_last), 0.0)
    h2 = jnp.maximum(_conv3(h1, w2, b2, not_first, not_last), 0.0)
    if wd is None:                       # in_channels == out_channels:
        res = x                          # identity residual, skip the matmul
    else:
        res = jnp.dot(x, wd, preferred_element_type=jnp.float32) + bd
    return jnp.maximum(h2 + res, 0.0)


def _rows_from_nodes(ind_n, v_1n):
    """Broadcast a per-node [1, N] value to per-row [MT, 1]."""
    return jnp.sum(ind_n * v_1n, axis=1, keepdims=True)


# ---------------------------------------------------------------------------
# Kernel 1: temporal block 1 -> graph convolution -> BatchNorm2d(num_nodes)
# ---------------------------------------------------------------------------
def _stgcn_part1_kernel(has_down, x_ref, adj_ref, ind_n_ref, ind_b_ref,
                        ind_t_ref, sel_ref, w1_ref, b1_ref, w2_ref, b2_ref,
                        *rest):
    if has_down:
        wd_ref, bd_ref, gcw_ref, gcb_ref, gamma_ref, beta_ref, o_ref = rest
    else:
        gcw_ref, gcb_ref, gamma_ref, beta_ref, o_ref = rest
        wd_ref = bd_ref = None

    x = jnp.nan_to_num(x_ref[...])            # module's nan_to_num, fused in
    ind_n = ind_n_ref[...]
    ind_b = ind_b_ref[...]
    ind_t = ind_t_ref[...]
    sel = sel_ref[...]
    B = ind_b.shape[1]
    T = ind_t.shape[1]
    not_first = 1.0 - ind_t[:, 0:1]           # zero on rows with t == 0
    not_last = 1.0 - ind_t[:, T - 1:T]        # zero on rows with t == T-1

    # ---- temporal block 1 ----
    out1 = _temporal_stage(x, not_first, not_last,
                           w1_ref[...], b1_ref[...], w2_ref[...], b2_ref[...],
                           None if wd_ref is None else wd_ref[...],
                           None if bd_ref is None else bd_ref[...])

    # ---- graph convolution:  per (b, t) slice  (adj^T @ X) @ W + bias ----
    # Row-space operator G[ro, ri] = adj[(b*T+t) % B][n(ri), n(ro)] when the two
    # rows share (b, t), else 0 -- exactly the module's adj.repeat pairing --
    # built in VMEM from the raw [B, N, N] adjacency (no T-times tiled copy).
    same_bt = _abT(ind_b, ind_b) * _abT(ind_t, ind_t)            # [MT, MT]
    gsum = None
    for rr in range(B):                                          # static, small B
        a_rr = jnp.nan_to_num(adj_ref[rr])                       # [N, N]
        q = _abT(_abT(ind_n, a_rr), ind_n)                       # adj[rr][n(ri), n(ro)]
        term = sel[:, rr:rr + 1] * q
        gsum = term if gsum is None else gsum + term
    g_op = same_bt * gsum
    hg = jnp.dot(g_op, out1, preferred_element_type=jnp.float32)          # node mixing
    hgc = jnp.dot(hg, gcw_ref[...], preferred_element_type=jnp.float32) + gcb_ref[...]

    # ---- BatchNorm2d(num_nodes), training-mode (biased) batch statistics ----
    S = hgc.shape[1]
    cnt = float(B * T * S)                                       # elements per node
    row_sum = jnp.sum(hgc, axis=1, keepdims=True)                        # [MT, 1]
    node_mean = jnp.sum(ind_n * row_sum, axis=0, keepdims=True) / cnt    # [1, N]
    cen = hgc - _rows_from_nodes(ind_n, node_mean)
    row_ss = jnp.sum(cen * cen, axis=1, keepdims=True)
    node_var = jnp.sum(ind_n * row_ss, axis=0, keepdims=True) / cnt      # [1, N]
    scale = gamma_ref[...] * jax.lax.rsqrt(node_var + 1e-5)              # [1, N]
    o_ref[...] = (cen * _rows_from_nodes(ind_n, scale)
                  + _rows_from_nodes(ind_n, beta_ref[...]))


# ---------------------------------------------------------------------------
# Kernel 2: temporal block 2
# ---------------------------------------------------------------------------
def _stgcn_part2_kernel(has_down, x_ref, ind_t_ref, w1_ref, b1_ref, w2_ref,
                        b2_ref, *rest):
    if has_down:
        wd_ref, bd_ref, o_ref = rest
    else:
        (o_ref,) = rest
        wd_ref = bd_ref = None
    ind_t = ind_t_ref[...]
    T = ind_t.shape[1]
    not_first = 1.0 - ind_t[:, 0:1]
    not_last = 1.0 - ind_t[:, T - 1:T]
    x = jnp.nan_to_num(x_ref[...])
    o_ref[...] = _temporal_stage(x, not_first, not_last,
                                 w1_ref[...], b1_ref[...], w2_ref[...], b2_ref[...],
                                 None if wd_ref is None else wd_ref[...],
                                 None if bd_ref is None else bd_ref[...])


# ---------------------------------------------------------------------------
# Full STGCNBlock forward (two fused pallas_calls, everything VMEM resident)
# ---------------------------------------------------------------------------
def _vmem_spec():
    return pl.BlockSpec(memory_space=pltpu.MemorySpace.VMEM)


def stgcn_block_forward(x, adj, params):
    """x: [B, T, N, Cin], adj: [B, N, N] -> [B, T, N, Cout]."""
    B, T, N, Cin = x.shape
    MT = B * N * T
    ind_n, ind_b, ind_t, sel = _row_onehots(B, T, N)

    w1, b1, w2, b2, wd, bd = params["t1"]
    Cout = w1.shape[-1]
    gc_w, gc_b = params["gc_w"], params["gc_b"]
    S = gc_w.shape[-1]
    gamma = params["bn_gamma"].reshape(1, N)
    beta = params["bn_beta"].reshape(1, N)
    w1b, b1b, w2b, b2b, wdb, bdb = params["t2"]

    # ---- fused kernel 1: temporal1 -> graph conv -> batch norm ----
    has_down1 = wd is not None
    args1 = [_to_rows(x), adj, ind_n, ind_b, ind_t, sel,
             _cat_taps(w1), b1, _cat_taps(w2), b2]
    if has_down1:
        args1 += [wd, bd]
    args1 += [gc_w, gc_b, gamma, beta]

    h_rows = pl.pallas_call(
        functools.partial(_stgcn_part1_kernel, has_down1),
        out_shape=jax.ShapeDtypeStruct((MT, S), jnp.float32),
        in_specs=[_vmem_spec() for _ in args1],
        out_specs=_vmem_spec(),
    )(*args1)

    # The module re-applies the raw  permute(0,3,1,2).view(B*N, C, T)  scramble
    # at the entrance of temporal2; that bijection mixes channels with (t, n),
    # so it is done as one tiny XLA shuffle between the two fused kernels.
    x2_rows = _to_rows(_from_rows(h_rows, B, T, N))

    # ---- fused kernel 2: temporal block 2 ----
    has_down2 = wdb is not None
    args2 = [x2_rows, ind_t, _cat_taps(w1b), b1b, _cat_taps(w2b), b2b]
    if has_down2:
        args2 += [wdb, bdb]

    out_rows = pl.pallas_call(
        functools.partial(_stgcn_part2_kernel, has_down2),
        out_shape=jax.ShapeDtypeStruct((MT, Cout), jnp.float32),
        in_specs=[_vmem_spec() for _ in args2],
        out_specs=_vmem_spec(),
    )(*args2)

    return _from_rows(out_rows, B, T, N)


# ---------------------------------------------------------------------------
# Pure-JAX reference (for the correctness check)
# ---------------------------------------------------------------------------
def _ref_temporal(x, params):
    B, T, N, Cin = x.shape
    w1, b1, w2, b2, wd, bd = params
    Cout = w1.shape[-1]
    M = B * N
    h = jnp.transpose(jnp.transpose(x, (0, 3, 1, 2)).reshape(M, Cin, T), (0, 2, 1))

    def conv(h, w3, b):
        zero = jnp.zeros_like(h[:, :1, :])
        hp = jnp.concatenate([zero, h[:, :-1]], axis=1)
        hn = jnp.concatenate([h[:, 1:], zero], axis=1)
        return (jnp.einsum("mtc,co->mto", hp, w3[0])
                + jnp.einsum("mtc,co->mto", h, w3[1])
                + jnp.einsum("mtc,co->mto", hn, w3[2]) + b)

    h1 = jax.nn.relu(conv(h, w1, b1))
    h2 = jax.nn.relu(conv(h1, w2, b2))
    if wd is None:
        res = h
    else:
        res = jnp.einsum("mtc,co->mto", h, wd) + bd
    out = jax.nn.relu(h2 + res)
    out = jnp.transpose(out, (0, 2, 1)).reshape(B, N, Cout, T)
    return jnp.transpose(out, (0, 3, 1, 2))


def _ref_forward(x, adj, params):
    h = _ref_temporal(x, params["t1"])
    B, T, N, F = h.shape
    bt = h.reshape(B * T, N, F)
    adj_rep = jnp.tile(adj, (T, 1, 1))
    tmp = jnp.einsum("ijf,ijn->inf", bt, adj_rep)
    h = (jnp.einsum("inf,fs->ins", tmp, params["gc_w"]) + params["gc_b"]).reshape(B, T, N, -1)
    hb = jnp.transpose(h, (0, 2, 1, 3))               # [B, N, T, S]
    m = jnp.mean(hb, axis=(0, 2, 3), keepdims=True)
    v = jnp.mean(jnp.square(hb - m), axis=(0, 2, 3), keepdims=True)
    hb = (hb - m) * jax.lax.rsqrt(v + 1e-5)
    hb = hb * params["bn_gamma"][None, :, None, None] + params["bn_beta"][None, :, None, None]
    h = jnp.transpose(hb, (0, 2, 1, 3))
    return _ref_temporal(h, params["t2"])


# ---------------------------------------------------------------------------
# Deterministic parameter init (shapes from the module __init__)
# ---------------------------------------------------------------------------
def init_temporal_params(key, cin, cout):
    ks = jax.random.split(key, 6)
    w1 = 0.01 * jax.random.normal(ks[0], (3, cin, cout), jnp.float32)
    b1 = 0.01 * jax.random.normal(ks[1], (1, cout), jnp.float32)
    w2 = 0.01 * jax.random.normal(ks[2], (3, cout, cout), jnp.float32)
    b2 = 0.01 * jax.random.normal(ks[3], (1, cout), jnp.float32)
    if cin != cout:
        wd = 0.01 * jax.random.normal(ks[4], (cin, cout), jnp.float32)
        bd = 0.01 * jax.random.normal(ks[5], (1, cout), jnp.float32)
    else:
        wd = None                       # identity residual (no downsample conv)
        bd = None
    return (w1, b1, w2, b2, wd, bd)


def init_params(key, cin, cout, spatial, num_nodes):
    k1, k2, k3, k4 = jax.random.split(key, 4)
    stdv = 1.0 / jnp.sqrt(jnp.float32(spatial))
    return {
        "t1": init_temporal_params(k1, cin, cout),
        "gc_w": jax.random.uniform(k2, (cout, spatial), jnp.float32, -stdv, stdv),
        "gc_b": jax.random.uniform(k3, (1, spatial), jnp.float32, -stdv, stdv),
        "bn_gamma": jnp.ones((num_nodes,), jnp.float32),
        "bn_beta": jnp.zeros((num_nodes,), jnp.float32),
        "t2": init_temporal_params(k4, spatial, cout),
    }


if __name__ == "__main__":
    B, T, N = 2, 8, 6                  # batch, time_steps, num_nodes
    Cin, Cout, S = 4, 8, 16            # in_channels, out_channels, spatial_channels

    root = jax.random.PRNGKey(0)
    kx, ka, kp = jax.random.split(root, 3)
    x = jax.random.normal(kx, (B, T, N, Cin), jnp.float32)
    adj = jax.nn.softmax(jax.random.normal(ka, (B, N, N), jnp.float32), axis=-1)
    params = init_params(kp, Cin, Cout, S, N)

    fwd = jax.jit(functools.partial(stgcn_block_forward, params=params))
    out = fwd(x, adj)
    jax.block_until_ready(out)

    ref = _ref_forward(x, adj, params)
    assert out.shape == (B, T, N, Cout), out.shape
    max_err = float(jnp.max(jnp.abs(out - ref)))
    if not (max_err <= 1e-3):
        raise AssertionError(f"Pallas output mismatch vs reference, max_err={max_err}")

    print("KERNEL_OK")
</pallas_src>

<mosaic_0001>
module attributes {stable_mosaic.version = 11 : i64} {
  func.func @_stgcn_part1_kernel(%arg0: memref<96x4xf32, #tpu.memory_space<vmem>>, %arg1: memref<2x6x6xf32, #tpu.memory_space<vmem>>, %arg2: memref<96x6xf32, #tpu.memory_space<vmem>>, %arg3: memref<96x2xf32, #tpu.memory_space<vmem>>, %arg4: memref<96x8xf32, #tpu.memory_space<vmem>>, %arg5: memref<96x2xf32, #tpu.memory_space<vmem>>, %arg6: memref<4x24xf32, #tpu.memory_space<vmem>>, %arg7: memref<1x8xf32, #tpu.memory_space<vmem>>, %arg8: memref<8x24xf32, #tpu.memory_space<vmem>>, %arg9: memref<1x8xf32, #tpu.memory_space<vmem>>, %arg10: memref<4x8xf32, #tpu.memory_space<vmem>>, %arg11: memref<1x8xf32, #tpu.memory_space<vmem>>, %arg12: memref<8x16xf32, #tpu.memory_space<vmem>>, %arg13: memref<1x16xf32, #tpu.memory_space<vmem>>, %arg14: memref<1x6xf32, #tpu.memory_space<vmem>>, %arg15: memref<1x6xf32, #tpu.memory_space<vmem>>, %arg16: memref<96x16xf32, #tpu.memory_space<vmem>>) attributes {dimension_semantics = [], scalar_prefetch = 0 : i64, scratch_operands = 0 : i64, tpu.core_type = #tpu.core_type<tc>} {
    %c0 = arith.constant 0 : index
    %c0_0 = arith.constant 0 : index
    %0 = vector.load %arg0[%c0, %c0_0] : memref<96x4xf32, #tpu.memory_space<vmem>>, vector<96x4xf32>
    %1 = arith.cmpf one, %0, %0 : vector<96x4xf32>
    %cst = arith.constant 0.000000e+00 : f32
    %2 = vector.broadcast %cst : f32 to vector<96x4xf32>
    %3 = arith.select %1, %2, %0 : vector<96x4xi1>, vector<96x4xf32>
    %cst_1 = arith.constant 0x7F800000 : f32
    %4 = vector.broadcast %cst_1 : f32 to vector<96x4xf32>
    %5 = arith.cmpf oeq, %3, %4 : vector<96x4xf32>
    %cst_2 = arith.constant 3.40282347E+38 : f32
    %6 = vector.broadcast %cst_2 : f32 to vector<96x4xf32>
    %7 = arith.select %5, %6, %3 : vector<96x4xi1>, vector<96x4xf32>
    %cst_3 = arith.constant 0xFF800000 : f32
    %8 = vector.broadcast %cst_3 : f32 to vector<96x4xf32>
    %9 = arith.cmpf oeq, %7, %8 : vector<96x4xf32>
    %cst_4 = arith.constant -3.40282347E+38 : f32
    %10 = vector.broadcast %cst_4 : f32 to vector<96x4xf32>
    %11 = arith.select %9, %10, %7 : vector<96x4xi1>, vector<96x4xf32>
    %c0_5 = arith.constant 0 : index
    %c0_6 = arith.constant 0 : index
    %12 = vector.load %arg2[%c0_5, %c0_6] : memref<96x6xf32, #tpu.memory_space<vmem>>, vector<96x6xf32>
    %c0_7 = arith.constant 0 : index
    %c0_8 = arith.constant 0 : index
    %13 = vector.load %arg3[%c0_7, %c0_8] : memref<96x2xf32, #tpu.memory_space<vmem>>, vector<96x2xf32>
    %c0_9 = arith.constant 0 : index
    %c0_10 = arith.constant 0 : index
    %14 = vector.load %arg4[%c0_9, %c0_10] : memref<96x8xf32, #tpu.memory_space<vmem>>, vector<96x8xf32>
    %c0_11 = arith.constant 0 : index
    %c0_12 = arith.constant 0 : index
    %15 = vector.load %arg5[%c0_11, %c0_12] : memref<96x2xf32, #tpu.memory_space<vmem>>, vector<96x2xf32>
    %16 = vector.extract_strided_slice %14 {offsets = [0, 0], sizes = [96, 1], strides = [1, 1]} : vector<96x8xf32> to vector<96x1xf32>
    %cst_13 = arith.constant 1.000000e+00 : f32
    %17 = vector.broadcast %cst_13 : f32 to vector<96x1xf32>
    %18 = arith.subf %17, %16 : vector<96x1xf32>
    %19 = vector.extract_strided_slice %14 {offsets = [0, 7], sizes = [96, 1], strides = [1, 1]} : vector<96x8xf32> to vector<96x1xf32>
    %cst_14 = arith.constant 1.000000e+00 : f32
    %20 = vector.broadcast %cst_14 : f32 to vector<96x1xf32>
    %21 = arith.subf %20, %19 : vector<96x1xf32>
    %c0_15 = arith.constant 0 : index
    %c0_16 = arith.constant 0 : index
    %22 = vector.load %arg6[%c0_15, %c0_16] : memref<4x24xf32, #tpu.memory_space<vmem>>, vector<4x24xf32>
    %c0_17 = arith.constant 0 : index
    %c0_18 = arith.constant 0 : index
    %23 = vector.load %arg7[%c0_17, %c0_18] : memref<1x8xf32, #tpu.memory_space<vmem>>, vector<1x8xf32>
    %c0_19 = arith.constant 0 : index
    %c0_20 = arith.constant 0 : index
    %24 = vector.load %arg8[%c0_19, %c0_20] : memref<8x24xf32, #tpu.memory_space<vmem>>, vector<8x24xf32>
    %c0_21 = arith.constant 0 : index
    %c0_22 = arith.constant 0 : index
    %25 = vector.load %arg9[%c0_21, %c0_22] : memref<1x8xf32, #tpu.memory_space<vmem>>, vector<1x8xf32>
    %c0_23 = arith.constant 0 : index
    %c0_24 = arith.constant 0 : index
    %26 = vector.load %arg10[%c0_23, %c0_24] : memref<4x8xf32, #tpu.memory_space<vmem>>, vector<4x8xf32>
    %c0_25 = arith.constant 0 : index
    %c0_26 = arith.constant 0 : index
    %27 = vector.load %arg11[%c0_25, %c0_26] : memref<1x8xf32, #tpu.memory_space<vmem>>, vector<1x8xf32>
    %cst_27 = arith.constant dense<0.000000e+00> : vector<96x24xf32>
    %28 = tpu.matmul %11, %22, %cst_27 {dimension_numbers = #tpu.dot_dimension_numbers<[1], [0], [0], [1], [0, 0, 1, 1], [], []>} : vector<96x4xf32>, vector<4x24xf32>, vector<96x24xf32> -> vector<96x24xf32>
    %29 = vector.extract_strided_slice %28 {offsets = [0, 0], sizes = [96, 8], strides = [1, 1]} : vector<96x24xf32> to vector<96x8xf32>
    %30 = vector.extract_strided_slice %29 {offsets = [95, 0], sizes = [1, 8], strides = [1, 1]} : vector<96x8xf32> to vector<1x8xf32>
    %31 = vector.extract_strided_slice %29 {offsets = [0, 0], sizes = [95, 8], strides = [1, 1]} : vector<96x8xf32> to vector<95x8xf32>
    %32 = tpu.concatenate %30, %31 in 0 : vector<1x8xf32>, vector<95x8xf32> -> vector<96x8xf32>
    %33 = vector.broadcast %18 : vector<96x1xf32> to vector<96x8xf32>
    %34 = arith.mulf %32, %33 : vector<96x8xf32>
    %35 = vector.extract_strided_slice %28 {offsets = [0, 16], sizes = [96, 8], strides = [1, 1]} : vector<96x24xf32> to vector<96x8xf32>
    %36 = vector.extract_strided_slice %35 {offsets = [1, 0], sizes = [95, 8], strides = [1, 1]} : vector<96x8xf32> to vector<95x8xf32>
    %37 = vector.extract_strided_slice %35 {offsets = [0, 0], sizes = [1, 8], strides = [1, 1]} : vector<96x8xf32> to vector<1x8xf32>
    %38 = tpu.concatenate %36, %37 in 0 : vector<95x8xf32>, vector<1x8xf32> -> vector<96x8xf32>
    %39 = vector.broadcast %21 : vector<96x1xf32> to vector<96x8xf32>
    %40 = arith.mulf %38, %39 : vector<96x8xf32>
    %41 = vector.extract_strided_slice %28 {offsets = [0, 8], sizes = [96, 8], strides = [1, 1]} : vector<96x24xf32> to vector<96x8xf32>
    %42 = arith.addf %34, %41 : vector<96x8xf32>
    %43 = arith.addf %42, %40 : vector<96x8xf32>
    %44 = vector.broadcast %23 : vector<1x8xf32> to vector<96x8xf32>
    %45 = arith.addf %43, %44 : vector<96x8xf32>
    %cst_28 = arith.constant 0.000000e+00 : f32
    %46 = vector.broadcast %cst_28 : f32 to vector<96x8xf32>
    %47 = arith.maximumf %45, %46 : vector<96x8xf32>
    %cst_29 = arith.constant dense<0.000000e+00> : vector<96x24xf32>
    %48 = tpu.matmul %47, %24, %cst_29 {dimension_numbers = #tpu.dot_dimension_numbers<[1], [0], [0], [1], [0, 0, 1, 1], [], []>} : vector<96x8xf32>, vector<8x24xf32>, vector<96x24xf32> -> vector<96x24xf32>
    %49 = vector.extract_strided_slice %48 {offsets = [0, 0], sizes = [96, 8], strides = [1, 1]} : vector<96x24xf32> to vector<96x8xf32>
    %50 = vector.extract_strided_slice %49 {offsets = [95, 0], sizes = [1, 8], strides = [1, 1]} : vector<96x8xf32> to vector<1x8xf32>
    %51 = vector.extract_strided_slice %49 {offsets = [0, 0], sizes = [95, 8], strides = [1, 1]} : vector<96x8xf32> to vector<95x8xf32>
    %52 = tpu.concatenate %50, %51 in 0 : vector<1x8xf32>, vector<95x8xf32> -> vector<96x8xf32>
    %53 = vector.broadcast %18 : vector<96x1xf32> to vector<96x8xf32>
    %54 = arith.mulf %52, %53 : vector<96x8xf32>
    %55 = vector.extract_strided_slice %48 {offsets = [0, 16], sizes = [96, 8], strides = [1, 1]} : vector<96x24xf32> to vector<96x8xf32>
    %56 = vector.extract_strided_slice %55 {offsets = [1, 0], sizes = [95, 8], strides = [1, 1]} : vector<96x8xf32> to vector<95x8xf32>
    %57 = vector.extract_strided_slice %55 {offsets = [0, 0], sizes = [1, 8], strides = [1, 1]} : vector<96x8xf32> to vector<1x8xf32>
    %58 = tpu.concatenate %56, %57 in 0 : vector<95x8xf32>, vector<1x8xf32> -> vector<96x8xf32>
    %59 = vector.broadcast %21 : vector<96x1xf32> to vector<96x8xf32>
    %60 = arith.mulf %58, %59 : vector<96x8xf32>
    %61 = vector.extract_strided_slice %48 {offsets = [0, 8], sizes = [96, 8], strides = [1, 1]} : vector<96x24xf32> to vector<96x8xf32>
    %62 = arith.addf %54, %61 : vector<96x8xf32>
    %63 = arith.addf %62, %60 : vector<96x8xf32>
    %64 = vector.broadcast %25 : vector<1x8xf32> to vector<96x8xf32>
    %65 = arith.addf %63, %64 : vector<96x8xf32>
    %cst_30 = arith.constant 0.000000e+00 : f32
    %66 = vector.broadcast %cst_30 : f32 to vector<96x8xf32>
    %67 = arith.maximumf %65, %66 : vector<96x8xf32>
    %cst_31 = arith.constant dense<0.000000e+00> : vector<96x8xf32>
    %68 = tpu.matmul %11, %26, %cst_31 {dimension_numbers = #tpu.dot_dimension_numbers<[1], [0], [0], [1], [0, 0, 1, 1], [], []>} : vector<96x4xf32>, vector<4x8xf32>, vector<96x8xf32> -> vector<96x8xf32>
    %69 = vector.broadcast %27 : vector<1x8xf32> to vector<96x8xf32>
    %70 = arith.addf %68, %69 : vector<96x8xf32>
    %71 = arith.addf %67, %70 : vector<96x8xf32>
    %cst_32 = arith.constant 0.000000e+00 : f32
    %72 = vector.broadcast %cst_32 : f32 to vector<96x8xf32>
    %73 = arith.maximumf %71, %72 : vector<96x8xf32>
    %cst_33 = arith.constant dense<0.000000e+00> : vector<96x96xf32>
    %74 = tpu.matmul %13, %13, %cst_33 {dimension_numbers = #tpu.dot_dimension_numbers<[1], [1], [0], [0], [0, 0, 1, 0], [], []>} : vector<96x2xf32>, vector<96x2xf32>, vector<96x96xf32> -> vector<96x96xf32>
    %cst_34 = arith.constant dense<0.000000e+00> : vector<96x96xf32>
    %75 = tpu.matmul %14, %14, %cst_34 {dimension_numbers = #tpu.dot_dimension_numbers<[1], [1], [0], [0], [0, 0, 1, 0], [], []>} : vector<96x8xf32>, vector<96x8xf32>, vector<96x96xf32> -> vector<96x96xf32>
    %76 = arith.mulf %74, %75 : vector<96x96xf32>
    %c0_35 = arith.constant 0 : index
    %c0_36 = arith.constant 0 : index
    %c0_37 = arith.constant 0 : index
    %77 = vector.load %arg1[%c0_35, %c0_36, %c0_37] : memref<2x6x6xf32, #tpu.memory_space<vmem>>, vector<1x6x6xf32>
    %78 = vector.shape_cast %77 : vector<1x6x6xf32> to vector<6x6xf32>
    %79 = arith.cmpf one, %78, %78 : vector<6x6xf32>
    %cst_38 = arith.constant 0.000000e+00 : f32
    %80 = vector.broadcast %cst_38 : f32 to vector<6x6xf32>
    %81 = arith.select %79, %80, %78 : vector<6x6xi1>, vector<6x6xf32>
    %cst_39 = arith.constant 0x7F800000 : f32
    %82 = vector.broadcast %cst_39 : f32 to vector<6x6xf32>
    %83 = arith.cmpf oeq, %81, %82 : vector<6x6xf32>
    %cst_40 = arith.constant 3.40282347E+38 : f32
    %84 = vector.broadcast %cst_40 : f32 to vector<6x6xf32>
    %85 = arith.select %83, %84, %81 : vector<6x6xi1>, vector<6x6xf32>
    %cst_41 = arith.constant 0xFF800000 : f32
    %86 = vector.broadcast %cst_41 : f32 to vector<6x6xf32>
    %87 = arith.cmpf oeq, %85, %86 : vector<6x6xf32>
    %cst_42 = arith.constant -3.40282347E+38 : f32
    %88 = vector.broadcast %cst_42 : f32 to vector<6x6xf32>
    %89 = arith.select %87, %88, %85 : vector<6x6xi1>, vector<6x6xf32>
    %cst_43 = arith.constant dense<0.000000e+00> : vector<96x6xf32>
    %90 = tpu.matmul %12, %89, %cst_43 {dimension_numbers = #tpu.dot_dimension_numbers<[1], [1], [0], [0], [0, 0, 1, 0], [], []>} : vector<96x6xf32>, vector<6x6xf32>, vector<96x6xf32> -> vector<96x6xf32>
    %cst_44 = arith.constant dense<0.000000e+00> : vector<96x96xf32>
    %91 = tpu.matmul %90, %12, %cst_44 {dimension_numbers = #tpu.dot_dimension_numbers<[1], [1], [0], [0], [0, 0, 1, 0], [], []>} : vector<96x6xf32>, vector<96x6xf32>, vector<96x96xf32> -> vector<96x96xf32>
    %92 = vector.extract_strided_slice %15 {offsets = [0, 0], sizes = [96, 1], strides = [1, 1]} : vector<96x2xf32> to vector<96x1xf32>
    %93 = vector.broadcast %92 : vector<96x1xf32> to vector<96x96xf32>
    %94 = arith.mulf %93, %91 : vector<96x96xf32>
    %c1 = arith.constant 1 : index
    %c0_45 = arith.constant 0 : index
    %c0_46 = arith.constant 0 : index
    %95 = vector.load %arg1[%c1, %c0_45, %c0_46] : memref<2x6x6xf32, #tpu.memory_space<vmem>>, vector<1x6x6xf32>
    %96 = vector.shape_cast %95 : vector<1x6x6xf32> to vector<6x6xf32>
    %97 = arith.cmpf one, %96, %96 : vector<6x6xf32>
    %cst_47 = arith.constant 0.000000e+00 : f32
    %98 = vector.broadcast %cst_47 : f32 to vector<6x6xf32>
    %99 = arith.select %97, %98, %96 : vector<6x6xi1>, vector<6x6xf32>
    %cst_48 = arith.constant 0x7F800000 : f32
    %100 = vector.broadcast %cst_48 : f32 to vector<6x6xf32>
    %101 = arith.cmpf oeq, %99, %100 : vector<6x6xf32>
    %cst_49 = arith.constant 3.40282347E+38 : f32
    %102 = vector.broadcast %cst_49 : f32 to vector<6x6xf32>
    %103 = arith.select %101, %102, %99 : vector<6x6xi1>, vector<6x6xf32>
    %cst_50 = arith.constant 0xFF800000 : f32
    %104 = vector.broadcast %cst_50 : f32 to vector<6x6xf32>
    %105 = arith.cmpf oeq, %103, %104 : vector<6x6xf32>
    %cst_51 = arith.constant -3.40282347E+38 : f32
    %106 = vector.broadcast %cst_51 : f32 to vector<6x6xf32>
    %107 = arith.select %105, %106, %103 : vector<6x6xi1>, vector<6x6xf32>
    %cst_52 = arith.constant dense<0.000000e+00> : vector<96x6xf32>
    %108 = tpu.matmul %12, %107, %cst_52 {dimension_numbers = #tpu.dot_dimension_numbers<[1], [1], [0], [0], [0, 0, 1, 0], [], []>} : vector<96x6xf32>, vector<6x6xf32>, vector<96x6xf32> -> vector<96x6xf32>
    %cst_53 = arith.constant dense<0.000000e+00> : vector<96x96xf32>
    %109 = tpu.matmul %108, %12, %cst_53 {dimension_numbers = #tpu.dot_dimension_numbers<[1], [1], [0], [0], [0, 0, 1, 0], [], []>} : vector<96x6xf32>, vector<96x6xf32>, vector<96x96xf32> -> vector<96x96xf32>
    %110 = vector.extract_strided_slice %15 {offsets = [0, 1], sizes = [96, 1], strides = [1, 1]} : vector<96x2xf32> to vector<96x1xf32>
    %111 = vector.broadcast %110 : vector<96x1xf32> to vector<96x96xf32>
    %112 = arith.mulf %111, %109 : vector<96x96xf32>
    %113 = arith.addf %94, %112 : vector<96x96xf32>
    %114 = arith.mulf %76, %113 : vector<96x96xf32>
    %cst_54 = arith.constant dense<0.000000e+00> : vector<96x8xf32>
    %115 = tpu.matmul %114, %73, %cst_54 {dimension_numbers = #tpu.dot_dimension_numbers<[1], [0], [0], [1], [0, 0, 1, 1], [], []>} : vector<96x96xf32>, vector<96x8xf32>, vector<96x8xf32> -> vector<96x8xf32>
    %c0_55 = arith.constant 0 : index
    %c0_56 = arith.constant 0 : index
    %116 = vector.load %arg12[%c0_55, %c0_56] : memref<8x16xf32, #tpu.memory_space<vmem>>, vector<8x16xf32>
    %cst_57 = arith.constant dense<0.000000e+00> : vector<96x16xf32>
    %117 = tpu.matmul %115, %116, %cst_57 {dimension_numbers = #tpu.dot_dimension_numbers<[1], [0], [0], [1], [0, 0, 1, 1], [], []>} : vector<96x8xf32>, vector<8x16xf32>, vector<96x16xf32> -> vector<96x16xf32>
    %c0_58 = arith.constant 0 : index
    %c0_59 = arith.constant 0 : index
    %118 = vector.load %arg13[%c0_58, %c0_59] : memref<1x16xf32, #tpu.memory_space<vmem>>, vector<1x16xf32>
    %119 = vector.broadcast %118 : vector<1x16xf32> to vector<96x16xf32>
    %120 = arith.addf %117, %119 : vector<96x16xf32>
    %cst_60 = arith.constant dense<0.000000e+00> : vector<96xf32>
    %121 = vector.multi_reduction <add>, %120, %cst_60 [1] : vector<96x16xf32> to vector<96xf32>
    %122 = vector.shape_cast %121 : vector<96xf32> to vector<96x1xf32>
    %123 = vector.broadcast %122 : vector<96x1xf32> to vector<96x6xf32>
    %124 = arith.mulf %12, %123 : vector<96x6xf32>
    %cst_61 = arith.constant dense<0.000000e+00> : vector<6xf32>
    %125 = vector.multi_reduction <add>, %124, %cst_61 [0] : vector<96x6xf32> to vector<6xf32>
    %126 = vector.shape_cast %125 : vector<6xf32> to vector<1x6xf32>
    %cst_62 = arith.constant 2.560000e+02 : f32
    %127 = vector.broadcast %cst_62 : f32 to vector<1x6xf32>
    %128 = arith.divf %126, %127 : vector<1x6xf32>
    %129 = vector.broadcast %128 : vector<1x6xf32> to vector<96x6xf32>
    %130 = arith.mulf %12, %129 : vector<96x6xf32>
    %cst_63 = arith.constant dense<0.000000e+00> : vector<96xf32>
    %131 = vector.multi_reduction <add>, %130, %cst_63 [1] : vector<96x6xf32> to vector<96xf32>
    %132 = vector.shape_cast %131 : vector<96xf32> to vector<96x1xf32>
    %133 = vector.broadcast %132 : vector<96x1xf32> to vector<96x16xf32>
    %134 = arith.subf %120, %133 : vector<96x16xf32>
    %135 = arith.mulf %134, %134 : vector<96x16xf32>
    %cst_64 = arith.constant dense<0.000000e+00> : vector<96xf32>
    %136 = vector.multi_reduction <add>, %135, %cst_64 [1] : vector<96x16xf32> to vector<96xf32>
    %137 = vector.shape_cast %136 : vector<96xf32> to vector<96x1xf32>
    %138 = vector.broadcast %137 : vector<96x1xf32> to vector<96x6xf32>
    %139 = arith.mulf %12, %138 : vector<96x6xf32>
    %cst_65 = arith.constant dense<0.000000e+00> : vector<6xf32>
    %140 = vector.multi_reduction <add>, %139, %cst_65 [0] : vector<96x6xf32> to vector<6xf32>
    %141 = vector.shape_cast %140 : vector<6xf32> to vector<1x6xf32>
    %cst_66 = arith.constant 2.560000e+02 : f32
    %142 = vector.broadcast %cst_66 : f32 to vector<1x6xf32>
    %143 = arith.divf %141, %142 : vector<1x6xf32>
    %c0_67 = arith.constant 0 : index
    %c0_68 = arith.constant 0 : index
    %144 = vector.load %arg14[%c0_67, %c0_68] : memref<1x6xf32, #tpu.memory_space<vmem>>, vector<1x6xf32>
    %cst_69 = arith.constant 9.99999974E-6 : f32
    %145 = vector.broadcast %cst_69 : f32 to vector<1x6xf32>
    %146 = arith.addf %143, %145 : vector<1x6xf32>
    %147 = math.rsqrt %146 : vector<1x6xf32>
    %148 = arith.mulf %144, %147 : vector<1x6xf32>
    %149 = vector.broadcast %148 : vector<1x6xf32> to vector<96x6xf32>
    %150 = arith.mulf %12, %149 : vector<96x6xf32>
    %cst_70 = arith.constant dense<0.000000e+00> : vector<96xf32>
    %151 = vector.multi_reduction <add>, %150, %cst_70 [1] : vector<96x6xf32> to vector<96xf32>
    %152 = vector.shape_cast %151 : vector<96xf32> to vector<96x1xf32>
    %153 = vector.broadcast %152 : vector<96x1xf32> to vector<96x16xf32>
    %154 = arith.mulf %134, %153 : vector<96x16xf32>
    %c0_71 = arith.constant 0 : index
    %c0_72 = arith.constant 0 : index
    %155 = vector.load %arg15[%c0_71, %c0_72] : memref<1x6xf32, #tpu.memory_space<vmem>>, vector<1x6xf32>
    %156 = vector.broadcast %155 : vector<1x6xf32> to vector<96x6xf32>
    %157 = arith.mulf %12, %156 : vector<96x6xf32>
    %cst_73 = arith.constant dense<0.000000e+00> : vector<96xf32>
    %158 = vector.multi_reduction <add>, %157, %cst_73 [1] : vector<96x6xf32> to vector<96xf32>
    %159 = vector.shape_cast %158 : vector<96xf32> to vector<96x1xf32>
    %160 = vector.broadcast %159 : vector<96x1xf32> to vector<96x16xf32>
    %161 = arith.addf %154, %160 : vector<96x16xf32>
    %c0_74 = arith.constant 0 : index
    %c0_75 = arith.constant 0 : index
    %162 = vector.load %arg16[%c0_74, %c0_75] : memref<96x16xf32, #tpu.memory_space<vmem>>, vector<96x16xf32>
    tpu.vector_store %arg16[%c0_74, %c0_75], %161 {strides = array<i32>} : memref<96x16xf32, #tpu.memory_space<vmem>>, vector<96x16xf32>,
    return
  }
}

module attributes {stable_mosaic.version = 11 : i64} {
  func.func @_stgcn_part2_kernel(%arg0: memref<96x16xf32, #tpu.memory_space<vmem>>, %arg1: memref<96x8xf32, #tpu.memory_space<vmem>>, %arg2: memref<16x24xf32, #tpu.memory_space<vmem>>, %arg3: memref<1x8xf32, #tpu.memory_space<vmem>>, %arg4: memref<8x24xf32, #tpu.memory_space<vmem>>, %arg5: memref<1x8xf32, #tpu.memory_space<vmem>>, %arg6: memref<16x8xf32, #tpu.memory_space<vmem>>, %arg7: memref<1x8xf32, #tpu.memory_space<vmem>>, %arg8: memref<96x8xf32, #tpu.memory_space<vmem>>) attributes {dimension_semantics = [], scalar_prefetch = 0 : i64, scratch_operands = 0 : i64, tpu.core_type = #tpu.core_type<tc>} {
    %c0 = arith.constant 0 : index
    %c0_0 = arith.constant 0 : index
    %0 = vector.load %arg1[%c0, %c0_0] : memref<96x8xf32, #tpu.memory_space<vmem>>, vector<96x8xf32>
    %1 = vector.extract_strided_slice %0 {offsets = [0, 0], sizes = [96, 1], strides = [1, 1]} : vector<96x8xf32> to vector<96x1xf32>
    %cst = arith.constant 1.000000e+00 : f32
    %2 = vector.broadcast %cst : f32 to vector<96x1xf32>
    %3 = arith.subf %2, %1 : vector<96x1xf32>
    %4 = vector.extract_strided_slice %0 {offsets = [0, 7], sizes = [96, 1], strides = [1, 1]} : vector<96x8xf32> to vector<96x1xf32>
    %cst_1 = arith.constant 1.000000e+00 : f32
    %5 = vector.broadcast %cst_1 : f32 to vector<96x1xf32>
    %6 = arith.subf %5, %4 : vector<96x1xf32>
    %c0_2 = arith.constant 0 : index
    %c0_3 = arith.constant 0 : index
    %7 = vector.load %arg0[%c0_2, %c0_3] : memref<96x16xf32, #tpu.memory_space<vmem>>, vector<96x16xf32>
    %8 = arith.cmpf one, %7, %7 : vector<96x16xf32>
    %cst_4 = arith.constant 0.000000e+00 : f32
    %9 = vector.broadcast %cst_4 : f32 to vector<96x16xf32>
    %10 = arith.select %8, %9, %7 : vector<96x16xi1>, vector<96x16xf32>
    %cst_5 = arith.constant 0x7F800000 : f32
    %11 = vector.broadcast %cst_5 : f32 to vector<96x16xf32>
    %12 = arith.cmpf oeq, %10, %11 : vector<96x16xf32>
    %cst_6 = arith.constant 3.40282347E+38 : f32
    %13 = vector.broadcast %cst_6 : f32 to vector<96x16xf32>
    %14 = arith.select %12, %13, %10 : vector<96x16xi1>, vector<96x16xf32>
    %cst_7 = arith.constant 0xFF800000 : f32
    %15 = vector.broadcast %cst_7 : f32 to vector<96x16xf32>
    %16 = arith.cmpf oeq, %14, %15 : vector<96x16xf32>
    %cst_8 = arith.constant -3.40282347E+38 : f32
    %17 = vector.broadcast %cst_8 : f32 to vector<96x16xf32>
    %18 = arith.select %16, %17, %14 : vector<96x16xi1>, vector<96x16xf32>
    %c0_9 = arith.constant 0 : index
    %c0_10 = arith.constant 0 : index
    %19 = vector.load %arg2[%c0_9, %c0_10] : memref<16x24xf32, #tpu.memory_space<vmem>>, vector<16x24xf32>
    %c0_11 = arith.constant 0 : index
    %c0_12 = arith.constant 0 : index
    %20 = vector.load %arg3[%c0_11, %c0_12] : memref<1x8xf32, #tpu.memory_space<vmem>>, vector<1x8xf32>
    %c0_13 = arith.constant 0 : index
    %c0_14 = arith.constant 0 : index
    %21 = vector.load %arg4[%c0_13, %c0_14] : memref<8x24xf32, #tpu.memory_space<vmem>>, vector<8x24xf32>
    %c0_15 = arith.constant 0 : index
    %c0_16 = arith.constant 0 : index
    %22 = vector.load %arg5[%c0_15, %c0_16] : memref<1x8xf32, #tpu.memory_space<vmem>>, vector<1x8xf32>
    %c0_17 = arith.constant 0 : index
    %c0_18 = arith.constant 0 : index
    %23 = vector.load %arg6[%c0_17, %c0_18] : memref<16x8xf32, #tpu.memory_space<vmem>>, vector<16x8xf32>
    %c0_19 = arith.constant 0 : index
    %c0_20 = arith.constant 0 : index
    %24 = vector.load %arg7[%c0_19, %c0_20] : memref<1x8xf32, #tpu.memory_space<vmem>>, vector<1x8xf32>
    %cst_21 = arith.constant dense<0.000000e+00> : vector<96x24xf32>
    %25 = tpu.matmul %18, %19, %cst_21 {dimension_numbers = #tpu.dot_dimension_numbers<[1], [0], [0], [1], [0, 0, 1, 1], [], []>} : vector<96x16xf32>, vector<16x24xf32>, vector<96x24xf32> -> vector<96x24xf32>
    %26 = vector.extract_strided_slice %25 {offsets = [0, 0], sizes = [96, 8], strides = [1, 1]} : vector<96x24xf32> to vector<96x8xf32>
    %27 = vector.extract_strided_slice %26 {offsets = [95, 0], sizes = [1, 8], strides = [1, 1]} : vector<96x8xf32> to vector<1x8xf32>
    %28 = vector.extract_strided_slice %26 {offsets = [0, 0], sizes = [95, 8], strides = [1, 1]} : vector<96x8xf32> to vector<95x8xf32>
    %29 = tpu.concatenate %27, %28 in 0 : vector<1x8xf32>, vector<95x8xf32> -> vector<96x8xf32>
    %30 = vector.broadcast %3 : vector<96x1xf32> to vector<96x8xf32>
    %31 = arith.mulf %29, %30 : vector<96x8xf32>
    %32 = vector.extract_strided_slice %25 {offsets = [0, 16], sizes = [96, 8], strides = [1, 1]} : vector<96x24xf32> to vector<96x8xf32>
    %33 = vector.extract_strided_slice %32 {offsets = [1, 0], sizes = [95, 8], strides = [1, 1]} : vector<96x8xf32> to vector<95x8xf32>
    %34 = vector.extract_strided_slice %32 {offsets = [0, 0], sizes = [1, 8], strides = [1, 1]} : vector<96x8xf32> to vector<1x8xf32>
    %35 = tpu.concatenate %33, %34 in 0 : vector<95x8xf32>, vector<1x8xf32> -> vector<96x8xf32>
    %36 = vector.broadcast %6 : vector<96x1xf32> to vector<96x8xf32>
    %37 = arith.mulf %35, %36 : vector<96x8xf32>
    %38 = vector.extract_strided_slice %25 {offsets = [0, 8], sizes = [96, 8], strides = [1, 1]} : vector<96x24xf32> to vector<96x8xf32>
    %39 = arith.addf %31, %38 : vector<96x8xf32>
    %40 = arith.addf %39, %37 : vector<96x8xf32>
    %41 = vector.broadcast %20 : vector<1x8xf32> to vector<96x8xf32>
    %42 = arith.addf %40, %41 : vector<96x8xf32>
    %cst_22 = arith.constant 0.000000e+00 : f32
    %43 = vector.broadcast %cst_22 : f32 to vector<96x8xf32>
    %44 = arith.maximumf %42, %43 : vector<96x8xf32>
    %cst_23 = arith.constant dense<0.000000e+00> : vector<96x24xf32>
    %45 = tpu.matmul %44, %21, %cst_23 {dimension_numbers = #tpu.dot_dimension_numbers<[1], [0], [0], [1], [0, 0, 1, 1], [], []>} : vector<96x8xf32>, vector<8x24xf32>, vector<96x24xf32> -> vector<96x24xf32>
    %46 = vector.extract_strided_slice %45 {offsets = [0, 0], sizes = [96, 8], strides = [1, 1]} : vector<96x24xf32> to vector<96x8xf32>
    %47 = vector.extract_strided_slice %46 {offsets = [95, 0], sizes = [1, 8], strides = [1, 1]} : vector<96x8xf32> to vector<1x8xf32>
    %48 = vector.extract_strided_slice %46 {offsets = [0, 0], sizes = [95, 8], strides = [1, 1]} : vector<96x8xf32> to vector<95x8xf32>
    %49 = tpu.concatenate %47, %48 in 0 : vector<1x8xf32>, vector<95x8xf32> -> vector<96x8xf32>
    %50 = vector.broadcast %3 : vector<96x1xf32> to vector<96x8xf32>
    %51 = arith.mulf %49, %50 : vector<96x8xf32>
    %52 = vector.extract_strided_slice %45 {offsets = [0, 16], sizes = [96, 8], strides = [1, 1]} : vector<96x24xf32> to vector<96x8xf32>
    %53 = vector.extract_strided_slice %52 {offsets = [1, 0], sizes = [95, 8], strides = [1, 1]} : vector<96x8xf32> to vector<95x8xf32>
    %54 = vector.extract_strided_slice %52 {offsets = [0, 0], sizes = [1, 8], strides = [1, 1]} : vector<96x8xf32> to vector<1x8xf32>
    %55 = tpu.concatenate %53, %54 in 0 : vector<95x8xf32>, vector<1x8xf32> -> vector<96x8xf32>
    %56 = vector.broadcast %6 : vector<96x1xf32> to vector<96x8xf32>
    %57 = arith.mulf %55, %56 : vector<96x8xf32>
    %58 = vector.extract_strided_slice %45 {offsets = [0, 8], sizes = [96, 8], strides = [1, 1]} : vector<96x24xf32> to vector<96x8xf32>
    %59 = arith.addf %51, %58 : vector<96x8xf32>
    %60 = arith.addf %59, %57 : vector<96x8xf32>
    %61 = vector.broadcast %22 : vector<1x8xf32> to vector<96x8xf32>
    %62 = arith.addf %60, %61 : vector<96x8xf32>
    %cst_24 = arith.constant 0.000000e+00 : f32
    %63 = vector.broadcast %cst_24 : f32 to vector<96x8xf32>
    %64 = arith.maximumf %62, %63 : vector<96x8xf32>
    %cst_25 = arith.constant dense<0.000000e+00> : vector<96x8xf32>
    %65 = tpu.matmul %18, %23, %cst_25 {dimension_numbers = #tpu.dot_dimension_numbers<[1], [0], [0], [1], [0, 0, 1, 1], [], []>} : vector<96x16xf32>, vector<16x8xf32>, vector<96x8xf32> -> vector<96x8xf32>
    %66 = vector.broadcast %24 : vector<1x8xf32> to vector<96x8xf32>
    %67 = arith.addf %65, %66 : vector<96x8xf32>
    %68 = arith.addf %64, %67 : vector<96x8xf32>
    %cst_26 = arith.constant 0.000000e+00 : f32
    %69 = vector.broadcast %cst_26 : f32 to vector<96x8xf32>
    %70 = arith.maximumf %68, %69 : vector<96x8xf32>
    %c0_27 = arith.constant 0 : index
    %c0_28 = arith.constant 0 : index
    %71 = vector.load %arg8[%c0_27, %c0_28] : memref<96x8xf32, #tpu.memory_space<vmem>>, vector<96x8xf32>
    tpu.vector_store %arg8[%c0_27, %c0_28], %70 {strides = array<i32>} : memref<96x8xf32, #tpu.memory_space<vmem>>, vector<96x8xf32>,
    return
  }
}

</mosaic_0001>

<llo_original>
// kernel: stgcn_block_forward.3
$region0: #{stgcn_block_forward.3}
  #allocation0 [shape = 'u32[]', space=smem, size = 0x4, offset = 0x4, fixed_abs, tag = 'smem constant byte address 0x4 - core index']
  #allocation1 [shape = 'u32[144,128]{1,0:T(1,128)}', space=vmem, size = 0x12000, scoped, tag = 'internal scratch']
  %s0 = inlined_call_operand.vmem [shape: f32[96,16], index: 0, kind: input, shape index: {}]
  %s1 = inlined_call_operand.vmem [shape: f32[96,8], index: 1, kind: input, shape index: {}]
  %s2 = inlined_call_operand.vmem [shape: f32[16,24], index: 2, kind: input, shape index: {}]
  %s3 = inlined_call_operand.vmem [shape: f32[1,8], index: 3, kind: input, shape index: {}]
  %s4 = inlined_call_operand.vmem [shape: f32[8,24], index: 4, kind: input, shape index: {}]
  %s5 = inlined_call_operand.vmem [shape: f32[1,8], index: 5, kind: input, shape index: {}]
  %s6 = inlined_call_operand.vmem [shape: f32[16,8], index: 6, kind: input, shape index: {}]
  %s7 = inlined_call_operand.vmem [shape: f32[1,8], index: 7, kind: input, shape index: {}]
  %s8 = inlined_call_operand.hbm [shape: f32[96,8], index: 8, kind: output, shape index: {}]
  %s9 = sld [smem:[#allocation0]]
  $region42: #{stgcn_block_forward.3} parent=0
    _
  %s11 = ssub.s32 1, %s9
  %s12 = scalar_select 0, %s11, %s9
  $region1: #{stgcn_block_forward.3} parent=0
    #allocation2 [shape = 'u8[49152]{0}', space=vmem, size = 0xc000, scoped, tag = 'output window, operand 0, single buffered']
    #allocation3 [shape = 's32[1]{0}', space=sflag, size = 0x4, scoped, tag = 'scoped memory for stgcn_block_forward.3']
    %13 = vsyncpa [#allocation3], 0
    // Predicated region
    $region2: #{stgcn_block_forward.3} parent=1 // pred_check
      _
    $region3: #{stgcn_block_forward.3} parent=1 // pred_check_branch
      %15 = sbr.rel (0) target = $region5
    $region4: #{stgcn_block_forward.3} parent=1 // pred_region
      _
    $region5: #{stgcn_block_forward.3} parent=1 // pred_fallthru
      _
    // Predicated region
    $region6: #{stgcn_block_forward.3} parent=1 // pred_check
      _
    $region7: #{stgcn_block_forward.3} parent=1 // pred_check_branch
      %17 = sbr.rel (0) target = $region9
    $region8: #{stgcn_block_forward.3} parent=1 // pred_region
      _
    $region9: #{stgcn_block_forward.3} parent=1 // pred_fallthru
      _
    // Predicated region
    $region10: #{stgcn_block_forward.3} parent=1 // pred_check
      _
    $region11: #{stgcn_block_forward.3} parent=1 // pred_check_branch
      %19 = sbr.rel (0) target = $region13
    $region12: #{stgcn_block_forward.3} parent=1 // pred_region
      _
    $region13: #{stgcn_block_forward.3} parent=1 // pred_fallthru
      _
    // Predicated region
    $region14: #{stgcn_block_forward.3} parent=1 // pred_check
      _
    $region15: #{stgcn_block_forward.3} parent=1 // pred_check_branch
      %21 = sbr.rel (0) target = $region17
    $region16: #{stgcn_block_forward.3} parent=1 // pred_region
      _
    $region17: #{stgcn_block_forward.3} parent=1 // pred_fallthru
      _
    // Predicated region
    $region18: #{stgcn_block_forward.3} parent=1 // pred_check
      _
    $region19: #{stgcn_block_forward.3} parent=1 // pred_check_branch
      %23 = sbr.rel (0) target = $region21
    $region20: #{stgcn_block_forward.3} parent=1 // pred_region
      _
    $region21: #{stgcn_block_forward.3} parent=1 // pred_fallthru
      _
    // Predicated region
    $region22: #{stgcn_block_forward.3} parent=1 // pred_check
      _
    $region23: #{stgcn_block_forward.3} parent=1 // pred_check_branch
      %25 = sbr.rel (0) target = $region25
    $region24: #{stgcn_block_forward.3} parent=1 // pred_region
      _
    $region25: #{stgcn_block_forward.3} parent=1 // pred_fallthru
      _
    // Predicated region
    $region26: #{stgcn_block_forward.3} parent=1 // pred_check
      _
    $region27: #{stgcn_block_forward.3} parent=1 // pred_check_branch
      %27 = sbr.rel (0) target = $region29
    $region28: #{stgcn_block_forward.3} parent=1 // pred_region
      _
    $region29: #{stgcn_block_forward.3} parent=1 // pred_fallthru
      _
    // Predicated region
    $region30: #{stgcn_block_forward.3} parent=1 // pred_check
      _
    $region31: #{stgcn_block_forward.3} parent=1 // pred_check_branch
      %29 = sbr.rel (0) target = $region33
    $region32: #{stgcn_block_forward.3} parent=1 // pred_region
      _
    $region33: #{stgcn_block_forward.3} parent=1 // pred_fallthru
      _
    %v30 = vld [vmem:[%s1] sm:$0xff]
    %v31 = vld [vmem:[%s1 + $0x8] sm:$0xff]
    %v32 = vld [vmem:[%s1 + $0x10] sm:$0xff]
    %v33 = vld [vmem:[%s1 + $0x18] sm:$0xff]
    %v34 = vld [vmem:[%s1 + $0x20] sm:$0xff]
    %v35 = vld [vmem:[%s1 + $0x28] sm:$0xff]
    %v36 = vld [vmem:[%s1 + $0x30] sm:$0xff]
    %v37 = vld [vmem:[%s1 + $0x38] sm:$0xff]
    %v38 = vld [vmem:[%s1 + $0x40] sm:$0xff]
    %v39 = vld [vmem:[%s1 + $0x48] sm:$0xff]
    %v40 = vld [vmem:[%s1 + $0x50] sm:$0xff]
    %v41 = vld [vmem:[%s1 + $0x58] sm:$0xff]
    %v42 = vsub.f32 1.0, %v30
    %v43 = vsub.f32 1.0, %v31
    %v44 = vsub.f32 1.0, %v32
    %v45 = vsub.f32 1.0, %v33
    %v46 = vsub.f32 1.0, %v34
    %v47 = vsub.f32 1.0, %v35
    %v48 = vsub.f32 1.0, %v36
    %v49 = vsub.f32 1.0, %v37
    %v50 = vsub.f32 1.0, %v38
    %v51 = vsub.f32 1.0, %v39
    %v52 = vsub.f32 1.0, %v40
    %v53 = vsub.f32 1.0, %v41
    %v54 = vld [vmem:[%s0] sm:$0xff]
    %v55 = vld [vmem:[%s0 + $0x8] sm:$0xff]
    %v56 = vld [vmem:[%s0 + $0x10] sm:$0xff]
    %v57 = vld [vmem:[%s0 + $0x18] sm:$0xff]
    %v58 = vld [vmem:[%s0 + $0x20] sm:$0xff]
    %v59 = vld [vmem:[%s0 + $0x28] sm:$0xff]
    %v60 = vld [vmem:[%s0 + $0x30] sm:$0xff]
    %v61 = vld [vmem:[%s0 + $0x38] sm:$0xff]
    %v62 = vld [vmem:[%s0 + $0x40] sm:$0xff]
    %v63 = vld [vmem:[%s0 + $0x48] sm:$0xff]
    %v64 = vld [vmem:[%s0 + $0x50] sm:$0xff]
    %v65 = vld [vmem:[%s0 + $0x58] sm:$0xff]
    %vm66 = vcmp.ne.f32.partialorder %v54, %v54
    %vm67 = vcmp.ne.f32.partialorder %v55, %v55
    %vm68 = vcmp.ne.f32.partialorder %v56, %v56
    %vm69 = vcmp.ne.f32.partialorder %v57, %v57
    %vm70 = vcmp.ne.f32.partialorder %v58, %v58
    %vm71 = vcmp.ne.f32.partialorder %v59, %v59
    %vm72 = vcmp.ne.f32.partialorder %v60, %v60
    %vm73 = vcmp.ne.f32.partialorder %v61, %v61
    %vm74 = vcmp.ne.f32.partialorder %v62, %v62
    %vm75 = vcmp.ne.f32.partialorder %v63, %v63
    %vm76 = vcmp.ne.f32.partialorder %v64, %v64
    %vm77 = vcmp.ne.f32.partialorder %v65, %v65
    %v78 = vsel %vm66, 0.0, %v54
    %v79 = vsel %vm67, 0.0, %v55
    %v80 = vsel %vm68, 0.0, %v56
    %v81 = vsel %vm69, 0.0, %v57
    %v82 = vsel %vm70, 0.0, %v58
    %v83 = vsel %vm71, 0.0, %v59
    %v84 = vsel %vm72, 0.0, %v60
    %v85 = vsel %vm73, 0.0, %v61
    %v86 = vsel %vm74, 0.0, %v62
    %v87 = vsel %vm75, 0.0, %v63
    %v88 = vsel %vm76, 0.0, %v64
    %v89 = vsel %vm77, 0.0, %v65
    %vm90 = vcmp.eq.f32.partialorder %v78, inf
    %vm91 = vcmp.eq.f32.partialorder %v79, inf
    %vm92 = vcmp.eq.f32.partialorder %v80, inf
    %vm93 = vcmp.eq.f32.partialorder %v81, inf
    %vm94 = vcmp.eq.f32.partialorder %v82, inf
    %vm95 = vcmp.eq.f32.partialorder %v83, inf
    %vm96 = vcmp.eq.f32.partialorder %v84, inf
    %vm97 = vcmp.eq.f32.partialorder %v85, inf
    %vm98 = vcmp.eq.f32.partialorder %v86, inf
    %vm99 = vcmp.eq.f32.partialorder %v87, inf
    %vm100 = vcmp.eq.f32.partialorder %v88, inf
    %vm101 = vcmp.eq.f32.partialorder %v89, inf
    %v102 = vsel %vm90, 3.4028235e+38, %v78
    %v103 = vsel %vm91, 3.4028235e+38, %v79
    %v104 = vsel %vm92, 3.4028235e+38, %v80
    %v105 = vsel %vm93, 3.4028235e+38, %v81
    %v106 = vsel %vm94, 3.4028235e+38, %v82
    %v107 = vsel %vm95, 3.4028235e+38, %v83
    %v108 = vsel %vm96, 3.4028235e+38, %v84
    %v109 = vsel %vm97, 3.4028235e+38, %v85
    %v110 = vsel %vm98, 3.4028235e+38, %v86
    %v111 = vsel %vm99, 3.4028235e+38, %v87
    %v112 = vsel %vm100, 3.4028235e+38, %v88
    %v113 = vsel %vm101, 3.4028235e+38, %v89
    %vm114 = vcmp.eq.f32.partialorder %v102, -inf
    %vm115 = vcmp.eq.f32.partialorder %v103, -inf
    %vm116 = vcmp.eq.f32.partialorder %v104, -inf
    %vm117 = vcmp.eq.f32.partialorder %v105, -inf
    %vm118 = vcmp.eq.f32.partialorder %v106, -inf
    %vm119 = vcmp.eq.f32.partialorder %v107, -inf
    %vm120 = vcmp.eq.f32.partialorder %v108, -inf
    %vm121 = vcmp.eq.f32.partialorder %v109, -inf
    %vm122 = vcmp.eq.f32.partialorder %v110, -inf
    %vm123 = vcmp.eq.f32.partialorder %v111, -inf
    %vm124 = vcmp.eq.f32.partialorder %v112, -inf
    %vm125 = vcmp.eq.f32.partialorder %v113, -inf
    %v126 = vsel %vm114, -3.4028235e+38, %v102
    %v127 = vsel %vm115, -3.4028235e+38, %v103
    %v128 = vsel %vm116, -3.4028235e+38, %v104
    %v129 = vsel %vm117, -3.4028235e+38, %v105
    %v130 = vsel %vm118, -3.4028235e+38, %v106
    %v131 = vsel %vm119, -3.4028235e+38, %v107
    %v132 = vsel %vm120, -3.4028235e+38, %v108
    %v133 = vsel %vm121, -3.4028235e+38, %v109
    %v134 = vsel %vm122, -3.4028235e+38, %v110
    %v135 = vsel %vm123, -3.4028235e+38, %v111
    %v136 = vsel %vm124, -3.4028235e+38, %v112
    %v137 = vsel %vm125, -3.4028235e+38, %v113
    %v138 = vld [vmem:[%s2] sm:$0xff]
    %v139 = vld [vmem:[%s2 + $0x8] sm:$0xff]
    %v140 = vld [vmem:[%s3] sm:$0x1]
    %v141 = vld [vmem:[%s4] sm:$0xff]
    %v142 = vld [vmem:[%s5] sm:$0x1]
    %v143 = vld [vmem:[%s6] sm:$0xff]
    %v144 = vld [vmem:[%s6 + $0x8] sm:$0xff]
    %v145 = vld [vmem:[%s7] sm:$0x1]
    %vm146 = vcmask 130048
    %v148 = vsel %vm146, %v126, 0
    %v151 = vsel %vm146, %v127, 0
    %v154 = vsel %vm146, %v128, 0
    %v157 = vsel %vm146, %v129, 0
    %v160 = vsel %vm146, %v130, 0
    %v163 = vsel %vm146, %v131, 0
    %v166 = vsel %vm146, %v132, 0
    %v169 = vsel %vm146, %v133, 0
    %v172 = vsel %vm146, %v134, 0
    %v175 = vsel %vm146, %v135, 0
    %v178 = vsel %vm146, %v136, 0
    %v181 = vsel %vm146, %v137, 0
    %183 = vmatprep.subr.mxu0 0.0
    %184 = vmatpush1.msra.mxu0 0.0
    %185 = vmatprep.subr.mxu0 0.0
    %186 = vmatpush1.msra.mxu0 0.0
    %187 = vmatprep.subr.mxu0 0.0
    %188 = vmatpush1.msra.mxu0 0.0
    %189 = vmatprep.subr.mxu0 0.0
    %190 = vmatpush1.msra.mxu0 0.0
    %191 = vmatprep.subr.mxu0 0.0
    %192 = vmatpush1.msra.mxu0 0.0
    %193 = vmatprep.subr.mxu0 0.0
    %194 = vmatpush1.msra.mxu0 0.0
    %195 = vmatprep.subr.mxu0 0.0
    %196 = vmatpush1.msra.mxu0 0.0
    %197 = vmatprep.subr.mxu0 0.0
    %198 = vmatpush1.msra.mxu0 0.0
    %199 = vmatprep.subr.mxu0 0.0
    %200 = vmatpush1.msra.mxu0 0.0
    %201 = vmatprep.subr.mxu0 0.0
    %202 = vmatpush1.msra.mxu0 0.0
    %203 = vmatprep.subr.mxu0 0.0
    %204 = vmatpush1.msra.mxu0 0.0
    %205 = vmatprep.subr.mxu0 0.0
    %206 = vmatpush1.msra.mxu0 0.0
    %207 = vmatprep.subr.mxu0 0.0
    %208 = vmatpush1.msra.mxu0 0.0
    %209 = vmatprep.subr.mxu0 0.0
    %210 = vmatpush1.msra.mxu0 0.0
    %211 = vmatprep.subr.mxu0 0.0
    %212 = vmatpush1.msra.mxu0 %v139
    %213 = vmatprep.subr.mxu0 0.0
    %214 = vmatpush1.msra.mxu0 %v138
    %215 = vmatprep.subr.mxu0 0.0
    %216 = vmatpush2.msra.mxu0 0.0
    %217 = vmatprep.subr.mxu0 0.0
    %218 = vmatpush2.msra.mxu0 0.0
    %219 = vmatprep.subr.mxu0 0.0
    %220 = vmatpush2.msra.mxu0 0.0
    %221 = vmatprep.subr.mxu0 0.0
    %222 = vmatpush2.msra.mxu0 0.0
    %223 = vmatprep.subr.mxu0 0.0
    %224 = vmatpush2.msra.mxu0 0.0
    %225 = vmatprep.subr.mxu0 0.0
    %226 = vmatpush2.msra.mxu0 0.0
    %227 = vmatprep.subr.mxu0 0.0
    %228 = vmatpush2.msra.mxu0 0.0
    %229 = vmatprep.subr.mxu0 0.0
    %230 = vmatpush2.msra.mxu0 0.0
    %231 = vmatprep.subr.mxu0 0.0
    %232 = vmatpush2.msra.mxu0 0.0
    %233 = vmatprep.subr.mxu0 0.0
    %234 = vmatpush2.msra.mxu0 0.0
    %235 = vmatprep.subr.mxu0 0.0
    %236 = vmatpush2.msra.mxu0 0.0
    %237 = vmatprep.subr.mxu0 0.0
    %238 = vmatpush2.msra.mxu0 0.0
    %239 = vmatprep.subr.mxu0 0.0
    %240 = vmatpush2.msra.mxu0 0.0
    %241 = vmatprep.subr.mxu0 0.0
    %242 = vmatpush2.msra.mxu0 0.0
    %243 = vmatprep.subr.mxu0 0.0
    %244 = vmatpush2.msra.mxu0 0.0
    %245 = vmatprep.subr.mxu0 0.0
    %246 = vmatpush2.msra.mxu0 0.0
    %247 = vmatprep.mubr.f32.mxu0 0.0
    %248 = vmatmul.mubr.f32.gmra.mxu0 %v148
    %v249 = vpop.f32.mrf.mxu0
    %v250 = vadd.f32 0.0, %v249
    %v251 = vpop.f32.mrf.mxu0
    %252 = vmatprep.mubr.f32.mxu0 0.0
    %253 = vmatmul.mubr.f32.gmra.mxu0 %v151
    %v254 = vpop.f32.mrf.mxu0
    %v255 = vadd.f32 0.0, %v254
    %v256 = vpop.f32.mrf.mxu0
    %257 = vmatprep.mubr.f32.mxu0 0.0
    %258 = vmatmul.mubr.f32.gmra.mxu0 %v154
    %v259 = vpop.f32.mrf.mxu0
    %v260 = vadd.f32 0.0, %v259
    %v261 = vpop.f32.mrf.mxu0
    %262 = vmatprep.mubr.f32.mxu0 0.0
    %263 = vmatmul.mubr.f32.gmra.mxu0 %v157
    %v264 = vpop.f32.mrf.mxu0
    %v265 = vadd.f32 0.0, %v264
    %v266 = vpop.f32.mrf.mxu0
    %267 = vmatprep.mubr.f32.mxu0 0.0
    %268 = vmatmul.mubr.f32.gmra.mxu0 %v160
    %v269 = vpop.f32.mrf.mxu0
    %v270 = vadd.f32 0.0, %v269
    %v271 = vpop.f32.mrf.mxu0
    %272 = vmatprep.mubr.f32.mxu0 0.0
    %273 = vmatmul.mubr.f32.gmra.mxu0 %v163
    %v274 = vpop.f32.mrf.mxu0
    %v275 = vadd.f32 0.0, %v274
    %v276 = vpop.f32.mrf.mxu0
    %277 = vmatprep.mubr.f32.mxu0 0.0
    %278 = vmatmul.mubr.f32.gmra.mxu0 %v166
    %v279 = vpop.f32.mrf.mxu0
    %v280 = vadd.f32 0.0, %v279
    %v281 = vpop.f32.mrf.mxu0
    %282 = vmatprep.mubr.f32.mxu0 0.0
    %283 = vmatmul.mubr.f32.gmra.mxu0 %v169
    %v284 = vpop.f32.mrf.mxu0
    %v285 = vadd.f32 0.0, %v284
    %v286 = vpop.f32.mrf.mxu0
    %287 = vmatprep.mubr.f32.mxu0 0.0
    %288 = vmatmul.mubr.f32.gmra.mxu0 %v172
    %v289 = vpop.f32.mrf.mxu0
    %v290 = vadd.f32 0.0, %v289
    %v291 = vpop.f32.mrf.mxu0
    %292 = vmatprep.mubr.f32.mxu0 0.0
    %293 = vmatmul.mubr.f32.gmra.mxu0 %v175
    %v294 = vpop.f32.mrf.mxu0
    %v295 = vadd.f32 0.0, %v294
    %v296 = vpop.f32.mrf.mxu0
    %297 = vmatprep.mubr.f32.mxu0 0.0
    %298 = vmatmul.mubr.f32.gmra.mxu0 %v178
    %v299 = vpop.f32.mrf.mxu0
    %v300 = vadd.f32 0.0, %v299
    %v301 = vpop.f32.mrf.mxu0
    %302 = vmatprep.mubr.f32.mxu0 0.0
    %303 = vmatmul.mubr.f32.gmra.mxu0 %v181
    %v304 = vpop.f32.mrf.mxu0
    %v305 = vadd.f32 0.0, %v304
    %v306 = vpop.f32.mrf.mxu0
    %307 = vdwg.mxu0
    %v309 = vrot.slane %v305, 7
    %vm322 = vcmask 1040384
    %v323 = vrot.slane %v250, 7
    %v324 = vrot.slane %v255, 7
    %v325 = vsel %vm322, %v323, %v324
    %v326 = vrot.slane %v260, 7
    %v327 = vsel %vm322, %v324, %v326
    %v328 = vrot.slane %v265, 7
    %v329 = vsel %vm322, %v326, %v328
    %v330 = vrot.slane %v270, 7
    %v331 = vsel %vm322, %v328, %v330
    %v332 = vrot.slane %v275, 7
    %v333 = vsel %vm322, %v330, %v332
    %v334 = vrot.slane %v280, 7
    %v335 = vsel %vm322, %v332, %v334
    %v336 = vrot.slane %v285, 7
    %v337 = vsel %vm322, %v334, %v336
    %v338 = vrot.slane %v290, 7
    %v339 = vsel %vm322, %v336, %v338
    %v340 = vrot.slane %v295, 7
    %v341 = vsel %vm322, %v338, %v340
    %v342 = vrot.slane %v300, 7
    %v343 = vsel %vm322, %v340, %v342
    %v344 = vsel %vm322, %v342, %v309
    %v357 = vsel %vm322, %v309, %v323
    %359 = vset.pattern.permute.xlu0 0
    %360 = vperm.xlu0 %359, %v42
    %v361 = vpop.permute.xlu0 %360
    %364 = vset.pattern.permute.xlu0 0
    %365 = vperm.xlu0 %364, %v43
    %v366 = vpop.permute.xlu0 %365
    %369 = vset.pattern.permute.xlu0 0
    %370 = vperm.xlu0 %369, %v44
    %v371 = vpop.permute.xlu0 %370
    %374 = vset.pattern.permute.xlu0 0
    %375 = vperm.xlu0 %374, %v45
    %v376 = vpop.permute.xlu0 %375
    %379 = vset.pattern.permute.xlu0 0
    %380 = vperm.xlu0 %379, %v46
    %v381 = vpop.permute.xlu0 %380
    %384 = vset.pattern.permute.xlu0 0
    %385 = vperm.xlu0 %384, %v47
    %v386 = vpop.permute.xlu0 %385
    %389 = vset.pattern.permute.xlu0 0
    %390 = vperm.xlu0 %389, %v48
    %v391 = vpop.permute.xlu0 %390
    %394 = vset.pattern.permute.xlu0 0
    %395 = vperm.xlu0 %394, %v49
    %v396 = vpop.permute.xlu0 %395
    %399 = vset.pattern.permute.xlu0 0
    %400 = vperm.xlu0 %399, %v50
    %v401 = vpop.permute.xlu0 %400
    %404 = vset.pattern.permute.xlu0 0
    %405 = vperm.xlu0 %404, %v51
    %v406 = vpop.permute.xlu0 %405
    %409 = vset.pattern.permute.xlu0 0
    %410 = vperm.xlu0 %409, %v52
    %v411 = vpop.permute.xlu0 %410
    %414 = vset.pattern.permute.xlu0 0
    %415 = vperm.xlu0 %414, %v53
    %v416 = vpop.permute.xlu0 %415
    %v418 = vmul.f32 %v357, %v361
    %v419 = vmul.f32 %v325, %v366
    %v420 = vmul.f32 %v327, %v371
    %v421 = vmul.f32 %v329, %v376
    %v422 = vmul.f32 %v331, %v381
    %v423 = vmul.f32 %v333, %v386
    %v424 = vmul.f32 %v335, %v391
    %v425 = vmul.f32 %v337, %v396
    %v426 = vmul.f32 %v339, %v401
    %v427 = vmul.f32 %v341, %v406
    %v428 = vmul.f32 %v343, %v411
    %v429 = vmul.f32 %v344, %v416
    %vm430 = vcmask 1046528
    %v431 = vrot.slane %v250, 1
    %v432 = vrot.slane %v255, 1
    %v433 = vsel %vm430, %v431, %v432
    %v434 = vrot.slane %v260, 1
    %v435 = vsel %vm430, %v432, %v434
    %v436 = vrot.slane %v265, 1
    %v437 = vsel %vm430, %v434, %v436
    %v438 = vrot.slane %v270, 1
    %v439 = vsel %vm430, %v436, %v438
    %v440 = vrot.slane %v275, 1
    %v441 = vsel %vm430, %v438, %v440
    %v442 = vrot.slane %v280, 1
    %v443 = vsel %vm430, %v440, %v442
    %v444 = vrot.slane %v285, 1
    %v445 = vsel %vm430, %v442, %v444
    %v446 = vrot.slane %v290, 1
    %v447 = vsel %vm430, %v444, %v446
    %v448 = vrot.slane %v295, 1
    %v449 = vsel %vm430, %v446, %v448
    %v450 = vrot.slane %v300, 1
    %v451 = vsel %vm430, %v448, %v450
    %v452 = vrot.slane %v305, 1
    %v453 = vsel %vm430, %v450, %v452
    %v467 = vsel %vm430, %v452, %v431
    %468 = vset.pattern.permute.xlu0 7
    %469 = vperm.xlu0 %468, %v42
    %v470 = vpop.permute.xlu0 %469
    %472 = vset.pattern.permute.xlu0 7
    %473 = vperm.xlu0 %472, %v43
    %v474 = vpop.permute.xlu0 %473
    %476 = vset.pattern.permute.xlu0 7
    %477 = vperm.xlu0 %476, %v44
    %v478 = vpop.permute.xlu0 %477
    %480 = vset.pattern.permute.xlu0 7
    %481 = vperm.xlu0 %480, %v45
    %v482 = vpop.permute.xlu0 %481
    %484 = vset.pattern.permute.xlu0 7
    %485 = vperm.xlu0 %484, %v46
    %v486 = vpop.permute.xlu0 %485
    %488 = vset.pattern.permute.xlu0 7
    %489 = vperm.xlu0 %488, %v47
    %v490 = vpop.permute.xlu0 %489
    %492 = vset.pattern.permute.xlu0 7
    %493 = vperm.xlu0 %492, %v48
    %v494 = vpop.permute.xlu0 %493
    %496 = vset.pattern.permute.xlu0 7
    %497 = vperm.xlu0 %496, %v49
    %v498 = vpop.permute.xlu0 %497
    %500 = vset.pattern.permute.xlu0 7
    %501 = vperm.xlu0 %500, %v50
    %v502 = vpop.permute.xlu0 %501
    %504 = vset.pattern.permute.xlu0 7
    %505 = vperm.xlu0 %504, %v51
    %v506 = vpop.permute.xlu0 %505
    %508 = vset.pattern.permute.xlu0 7
    %509 = vperm.xlu0 %508, %v52
    %v510 = vpop.permute.xlu0 %509
    %512 = vset.pattern.permute.xlu0 7
    %513 = vperm.xlu0 %512, %v53
    %v514 = vpop.permute.xlu0 %513
    %v516 = vmul.f32 %v433, %v470
    %v517 = vmul.f32 %v435, %v474
    %v518 = vmul.f32 %v437, %v478
    %v519 = vmul.f32 %v439, %v482
    %v520 = vmul.f32 %v441, %v486
    %v521 = vmul.f32 %v443, %v490
    %v522 = vmul.f32 %v445, %v494
    %v523 = vmul.f32 %v447, %v498
    %v524 = vmul.f32 %v449, %v502
    %v525 = vmul.f32 %v451, %v506
    %v526 = vmul.f32 %v453, %v510
    %v527 = vmul.f32 %v467, %v514
    %528 = vrot.lane.b32.xlu0 %v250, 120
    %v529 = vpop.permute.xlu0 %528
    %530 = vrot.lane.b32.xlu0 %v255, 120
    %v531 = vpop.permute.xlu0 %530
    %532 = vrot.lane.b32.xlu0 %v260, 120
    %v533 = vpop.permute.xlu0 %532
    %534 = vrot.lane.b32.xlu0 %v265, 120
    %v535 = vpop.permute.xlu0 %534
    %536 = vrot.lane.b32.xlu0 %v270, 120
    %v537 = vpop.permute.xlu0 %536
    %538 = vrot.lane.b32.xlu0 %v275, 120
    %v539 = vpop.permute.xlu0 %538
    %540 = vrot.lane.b32.xlu0 %v280, 120
    %v541 = vpop.permute.xlu0 %540
    %542 = vrot.lane.b32.xlu0 %v285, 120
    %v543 = vpop.permute.xlu0 %542
    %544 = vrot.lane.b32.xlu0 %v290, 120
    %v545 = vpop.permute.xlu0 %544
    %546 = vrot.lane.b32.xlu0 %v295, 120
    %v547 = vpop.permute.xlu0 %546
    %548 = vrot.lane.b32.xlu0 %v300, 120
    %v549 = vpop.permute.xlu0 %548
    %550 = vrot.lane.b32.xlu0 %v305, 120
    %v551 = vpop.permute.xlu0 %550
    %v564 = vadd.f32 %v418, %v529
    %v565 = vadd.f32 %v419, %v531
    %v566 = vadd.f32 %v420, %v533
    %v567 = vadd.f32 %v421, %v535
    %v568 = vadd.f32 %v422, %v537
    %v569 = vadd.f32 %v423, %v539
    %v570 = vadd.f32 %v424, %v541
    %v571 = vadd.f32 %v425, %v543
    %v572 = vadd.f32 %v426, %v545
    %v573 = vadd.f32 %v427, %v547
    %v574 = vadd.f32 %v428, %v549
    %v575 = vadd.f32 %v429, %v551
    %588 = vrot.lane.b32.xlu0 %v516, 112
    %v589 = vpop.permute.xlu0 %588
    %590 = vrot.lane.b32.xlu0 %v517, 112
    %v591 = vpop.permute.xlu0 %590
    %592 = vrot.lane.b32.xlu0 %v518, 112
    %v593 = vpop.permute.xlu0 %592
    %594 = vrot.lane.b32.xlu0 %v519, 112
    %v595 = vpop.permute.xlu0 %594
    %596 = vrot.lane.b32.xlu0 %v520, 112
    %v597 = vpop.permute.xlu0 %596
    %598 = vrot.lane.b32.xlu0 %v521, 112
    %v599 = vpop.permute.xlu0 %598
    %600 = vrot.lane.b32.xlu0 %v522, 112
    %v601 = vpop.permute.xlu0 %600
    %602 = vrot.lane.b32.xlu0 %v523, 112
    %v603 = vpop.permute.xlu0 %602
    %604 = vrot.lane.b32.xlu0 %v524, 112
    %v605 = vpop.permute.xlu0 %604
    %606 = vrot.lane.b32.xlu0 %v525, 112
    %v607 = vpop.permute.xlu0 %606
    %608 = vrot.lane.b32.xlu0 %v526, 112
    %v609 = vpop.permute.xlu0 %608
    %610 = vrot.lane.b32.xlu0 %v527, 112
    %v611 = vpop.permute.xlu0 %610
    %v624 = vadd.f32 %v564, %v589
    %v625 = vadd.f32 %v565, %v591
    %v626 = vadd.f32 %v566, %v593
    %v627 = vadd.f32 %v567, %v595
    %v628 = vadd.f32 %v568, %v597
    %v629 = vadd.f32 %v569, %v599
    %v630 = vadd.f32 %v570, %v601
    %v631 = vadd.f32 %v571, %v603
    %v632 = vadd.f32 %v572, %v605
    %v633 = vadd.f32 %v573, %v607
    %v634 = vadd.f32 %v574, %v609
    %v635 = vadd.f32 %v575, %v611
    %v637 = vlaneseq
    %v638 = vshrl.u32 %v637, 7
    %v639 = vsub.s32 0, %v638
    %v640 = vrot.slane %v140, %v639
    %v642 = vadd.f32 %v624, %v640
    %v643 = vadd.f32 %v625, %v640
    %v644 = vadd.f32 %v626, %v640
    %v645 = vadd.f32 %v627, %v640
    %v646 = vadd.f32 %v628, %v640
    %v647 = vadd.f32 %v629, %v640
    %v648 = vadd.f32 %v630, %v640
    %v649 = vadd.f32 %v631, %v640
    %v650 = vadd.f32 %v632, %v640
    %v651 = vadd.f32 %v633, %v640
    %v652 = vadd.f32 %v634, %v640
    %v653 = vadd.f32 %v635, %v640
    %v654 = vmax.f32 %v642, 0.0
    %v655 = vmax.f32 %v643, 0.0
    %v656 = vmax.f32 %v644, 0.0
    %v657 = vmax.f32 %v645, 0.0
    %v658 = vmax.f32 %v646, 0.0
    %v659 = vmax.f32 %v647, 0.0
    %v660 = vmax.f32 %v648, 0.0
    %v661 = vmax.f32 %v649, 0.0
    %v662 = vmax.f32 %v650, 0.0
    %v663 = vmax.f32 %v651, 0.0
    %v664 = vmax.f32 %v652, 0.0
    %v665 = vmax.f32 %v653, 0.0
    %vm666 = vcmask 64512
    %v668 = vsel %vm666, %v654, 0
    %v671 = vsel %vm666, %v655, 0
    %v674 = vsel %vm666, %v656, 0
    %v677 = vsel %vm666, %v657, 0
    %v680 = vsel %vm666, %v658, 0
    %v683 = vsel %vm666, %v659, 0
    %v686 = vsel %vm666, %v660, 0
    %v689 = vsel %vm666, %v661, 0
    %v692 = vsel %vm666, %v662, 0
    %v695 = vsel %vm666, %v663, 0
    %v698 = vsel %vm666, %v664, 0
    %v701 = vsel %vm666, %v665, 0
    %703 = vmatprep.subr.mxu0 0.0
    %704 = vmatpush1.msra.mxu0 0.0
    %705 = vmatprep.subr.mxu0 0.0
    %706 = vmatpush1.msra.mxu0 0.0
    %707 = vmatprep.subr.mxu0 0.0
    %708 = vmatpush1.msra.mxu0 0.0
    %709 = vmatprep.subr.mxu0 0.0
    %710 = vmatpush1.msra.mxu0 0.0
    %711 = vmatprep.subr.mxu0 0.0
    %712 = vmatpush1.msra.mxu0 0.0
    %713 = vmatprep.subr.mxu0 0.0
    %714 = vmatpush1.msra.mxu0 0.0
    %715 = vmatprep.subr.mxu0 0.0
    %716 = vmatpush1.msra.mxu0 0.0
    %717 = vmatprep.subr.mxu0 0.0
    %718 = vmatpush1.msra.mxu0 0.0
    %719 = vmatprep.subr.mxu0 0.0
    %720 = vmatpush1.msra.mxu0 0.0
    %721 = vmatprep.subr.mxu0 0.0
    %722 = vmatpush1.msra.mxu0 0.0
    %723 = vmatprep.subr.mxu0 0.0
    %724 = vmatpush1.msra.mxu0 0.0
    %725 = vmatprep.subr.mxu0 0.0
    %726 = vmatpush1.msra.mxu0 0.0
    %727 = vmatprep.subr.mxu0 0.0
    %728 = vmatpush1.msra.mxu0 0.0
    %729 = vmatprep.subr.mxu0 0.0
    %730 = vmatpush1.msra.mxu0 0.0
    %731 = vmatprep.subr.mxu0 0.0
    %732 = vmatpush1.msra.mxu0 0.0
    %733 = vmatprep.subr.mxu0 0.0
    %734 = vmatpush1.msra.mxu0 %v141
    %735 = vmatprep.subr.mxu0 0.0
    %736 = vmatpush2.msra.mxu0 0.0
    %737 = vmatprep.subr.mxu0 0.0
    %738 = vmatpush2.msra.mxu0 0.0
    %739 = vmatprep.subr.mxu0 0.0
    %740 = vmatpush2.msra.mxu0 0.0
    %741 = vmatprep.subr.mxu0 0.0
    %742 = vmatpush2.msra.mxu0 0.0
    %743 = vmatprep.subr.mxu0 0.0
    %744 = vmatpush2.msra.mxu0 0.0
    %745 = vmatprep.subr.mxu0 0.0
    %746 = vmatpush2.msra.mxu0 0.0
    %747 = vmatprep.subr.mxu0 0.0
    %748 = vmatpush2.msra.mxu0 0.0
    %749 = vmatprep.subr.mxu0 0.0
    %750 = vmatpush2.msra.mxu0 0.0
    %751 = vmatprep.subr.mxu0 0.0
    %752 = vmatpush2.msra.mxu0 0.0
    %753 = vmatprep.subr.mxu0 0.0
    %754 = vmatpush2.msra.mxu0 0.0
    %755 = vmatprep.subr.mxu0 0.0
    %756 = vmatpush2.msra.mxu0 0.0
    %757 = vmatprep.subr.mxu0 0.0
    %758 = vmatpush2.msra.mxu0 0.0
    %759 = vmatprep.subr.mxu0 0.0
    %760 = vmatpush2.msra.mxu0 0.0
    %761 = vmatprep.subr.mxu0 0.0
    %762 = vmatpush2.msra.mxu0 0.0
    %763 = vmatprep.subr.mxu0 0.0
    %764 = vmatpush2.msra.mxu0 0.0
    %765 = vmatprep.subr.mxu0 0.0
    %766 = vmatpush2.msra.mxu0 0.0
    %767 = vmatprep.mubr.f32.mxu0 0.0
    %768 = vmatmul.mubr.f32.gmra.mxu0 %v668
    %v769 = vpop.f32.mrf.mxu0
    %v770 = vadd.f32 0.0, %v769
    %v771 = vpop.f32.mrf.mxu0
    %772 = vmatprep.mubr.f32.mxu0 0.0
    %773 = vmatmul.mubr.f32.gmra.mxu0 %v671
    %v774 = vpop.f32.mrf.mxu0
    %v775 = vadd.f32 0.0, %v774
    %v776 = vpop.f32.mrf.mxu0
    %777 = vmatprep.mubr.f32.mxu0 0.0
    %778 = vmatmul.mubr.f32.gmra.mxu0 %v674
    %v779 = vpop.f32.mrf.mxu0
    %v780 = vadd.f32 0.0, %v779
    %v781 = vpop.f32.mrf.mxu0
    %782 = vmatprep.mubr.f32.mxu0 0.0
    %783 = vmatmul.mubr.f32.gmra.mxu0 %v677
    %v784 = vpop.f32.mrf.mxu0
    %v785 = vadd.f32 0.0, %v784
    %v786 = vpop.f32.mrf.mxu0
    %787 = vmatprep.mubr.f32.mxu0 0.0
    %788 = vmatmul.mubr.f32.gmra.mxu0 %v680
    %v789 = vpop.f32.mrf.mxu0
    %v790 = vadd.f32 0.0, %v789
    %v791 = vpop.f32.mrf.mxu0
    %792 = vmatprep.mubr.f32.mxu0 0.0
    %793 = vmatmul.mubr.f32.gmra.mxu0 %v683
    %v794 = vpop.f32.mrf.mxu0
    %v795 = vadd.f32 0.0, %v794
    %v796 = vpop.f32.mrf.mxu0
    %797 = vmatprep.mubr.f32.mxu0 0.0
    %798 = vmatmul.mubr.f32.gmra.mxu0 %v686
    %v799 = vpop.f32.mrf.mxu0
    %v800 = vadd.f32 0.0, %v799
    %v801 = vpop.f32.mrf.mxu0
    %802 = vmatprep.mubr.f32.mxu0 0.0
    %803 = vmatmul.mubr.f32.gmra.mxu0 %v689
    %v804 = vpop.f32.mrf.mxu0
    %v805 = vadd.f32 0.0, %v804
    %v806 = vpop.f32.mrf.mxu0
    %807 = vmatprep.mubr.f32.mxu0 0.0
    %808 = vmatmul.mubr.f32.gmra.mxu0 %v692
    %v809 = vpop.f32.mrf.mxu0
    %v810 = vadd.f32 0.0, %v809
    %v811 = vpop.f32.mrf.mxu0
    %812 = vmatprep.mubr.f32.mxu0 0.0
    %813 = vmatmul.mubr.f32.gmra.mxu0 %v695
    %v814 = vpop.f32.mrf.mxu0
    %v815 = vadd.f32 0.0, %v814
    %v816 = vpop.f32.mrf.mxu0
    %817 = vmatprep.mubr.f32.mxu0 0.0
    %818 = vmatmul.mubr.f32.gmra.mxu0 %v698
    %v819 = vpop.f32.mrf.mxu0
    %v820 = vadd.f32 0.0, %v819
    %v821 = vpop.f32.mrf.mxu0
    %822 = vmatprep.mubr.f32.mxu0 0.0
    %823 = vmatmul.mubr.f32.gmra.mxu0 %v701
    %v824 = vpop.f32.mrf.mxu0
    %v825 = vadd.f32 0.0, %v824
    %v826 = vpop.f32.mrf.mxu0
    %827 = vdwg.mxu0
    %v829 = vrot.slane %v825, 7
    %v842 = vrot.slane %v770, 7
    %v843 = vrot.slane %v775, 7
    %v844 = vsel %vm322, %v842, %v843
    %v845 = vrot.slane %v780, 7
    %v846 = vsel %vm322, %v843, %v845
    %v847 = vrot.slane %v785, 7
    %v848 = vsel %vm322, %v845, %v847
    %v849 = vrot.slane %v790, 7
    %v850 = vsel %vm322, %v847, %v849
    %v851 = vrot.slane %v795, 7
    %v852 = vsel %vm322, %v849, %v851
    %v853 = vrot.slane %v800, 7
    %v854 = vsel %vm322, %v851, %v853
    %v855 = vrot.slane %v805, 7
    %v856 = vsel %vm322, %v853, %v855
    %v857 = vrot.slane %v810, 7
    %v858 = vsel %vm322, %v855, %v857
    %v859 = vrot.slane %v815, 7
    %v860 = vsel %vm322, %v857, %v859
    %v861 = vrot.slane %v820, 7
    %v862 = vsel %vm322, %v859, %v861
    %v863 = vsel %vm322, %v861, %v829
    %v876 = vsel %vm322, %v829, %v842
    %v877 = vmul.f32 %v876, %v361
    %v878 = vmul.f32 %v844, %v366
    %v879 = vmul.f32 %v846, %v371
    %v880 = vmul.f32 %v848, %v376
    %v881 = vmul.f32 %v850, %v381
    %v882 = vmul.f32 %v852, %v386
    %v883 = vmul.f32 %v854, %v391
    %v884 = vmul.f32 %v856, %v396
    %v885 = vmul.f32 %v858, %v401
    %v886 = vmul.f32 %v860, %v406
    %v887 = vmul.f32 %v862, %v411
    %v888 = vmul.f32 %v863, %v416
    %v889 = vrot.slane %v770, 1
    %v890 = vrot.slane %v775, 1
    %v891 = vsel %vm430, %v889, %v890
    %v892 = vrot.slane %v780, 1
    %v893 = vsel %vm430, %v890, %v892
    %v894 = vrot.slane %v785, 1
    %v895 = vsel %vm430, %v892, %v894
    %v896 = vrot.slane %v790, 1
    %v897 = vsel %vm430, %v894, %v896
    %v898 = vrot.slane %v795, 1
    %v899 = vsel %vm430, %v896, %v898
    %v900 = vrot.slane %v800, 1
    %v901 = vsel %vm430, %v898, %v900
    %v902 = vrot.slane %v805, 1
    %v903 = vsel %vm430, %v900, %v902
    %v904 = vrot.slane %v810, 1
    %v905 = vsel %vm430, %v902, %v904
    %v906 = vrot.slane %v815, 1
    %v907 = vsel %vm430, %v904, %v906
    %v908 = vrot.slane %v820, 1
    %v909 = vsel %vm430, %v906, %v908
    %v910 = vrot.slane %v825, 1
    %v911 = vsel %vm430, %v908, %v910
    %v925 = vsel %vm430, %v910, %v889
    %v926 = vmul.f32 %v891, %v470
    %v927 = vmul.f32 %v893, %v474
    %v928 = vmul.f32 %v895, %v478
    %v929 = vmul.f32 %v897, %v482
    %v930 = vmul.f32 %v899, %v486
    %v931 = vmul.f32 %v901, %v490
    %v932 = vmul.f32 %v903, %v494
    %v933 = vmul.f32 %v905, %v498
    %v934 = vmul.f32 %v907, %v502
    %v935 = vmul.f32 %v909, %v506
    %v936 = vmul.f32 %v911, %v510
    %v937 = vmul.f32 %v925, %v514
    %938 = vrot.lane.b32.xlu0 %v770, 120
    %v939 = vpop.permute.xlu0 %938
    %940 = vrot.lane.b32.xlu0 %v775, 120
    %v941 = vpop.permute.xlu0 %940
    %942 = vrot.lane.b32.xlu0 %v780, 120
    %v943 = vpop.permute.xlu0 %942
    %944 = vrot.lane.b32.xlu0 %v785, 120
    %v945 = vpop.permute.xlu0 %944
    %946 = vrot.lane.b32.xlu0 %v790, 120
    %v947 = vpop.permute.xlu0 %946
    %948 = vrot.lane.b32.xlu0 %v795, 120
    %v949 = vpop.permute.xlu0 %948
    %950 = vrot.lane.b32.xlu0 %v800, 120
    %v951 = vpop.permute.xlu0 %950
    %952 = vrot.lane.b32.xlu0 %v805, 120
    %v953 = vpop.permute.xlu0 %952
    %954 = vrot.lane.b32.xlu0 %v810, 120
    %v955 = vpop.permute.xlu0 %954
    %956 = vrot.lane.b32.xlu0 %v815, 120
    %v957 = vpop.permute.xlu0 %956
    %958 = vrot.lane.b32.xlu0 %v820, 120
    %v959 = vpop.permute.xlu0 %958
    %960 = vrot.lane.b32.xlu0 %v825, 120
    %v961 = vpop.permute.xlu0 %960
    %v974 = vadd.f32 %v877, %v939
    %v975 = vadd.f32 %v878, %v941
    %v976 = vadd.f32 %v879, %v943
    %v977 = vadd.f32 %v880, %v945
    %v978 = vadd.f32 %v881, %v947
    %v979 = vadd.f32 %v882, %v949
    %v980 = vadd.f32 %v883, %v951
    %v981 = vadd.f32 %v884, %v953
    %v982 = vadd.f32 %v885, %v955
    %v983 = vadd.f32 %v886, %v957
    %v984 = vadd.f32 %v887, %v959
    %v985 = vadd.f32 %v888, %v961
    %998 = vrot.lane.b32.xlu0 %v926, 112
    %v999 = vpop.permute.xlu0 %998
    %1000 = vrot.lane.b32.xlu0 %v927, 112
    %v1001 = vpop.permute.xlu0 %1000
    %1002 = vrot.lane.b32.xlu0 %v928, 112
    %v1003 = vpop.permute.xlu0 %1002
    %1004 = vrot.lane.b32.xlu0 %v929, 112
    %v1005 = vpop.permute.xlu0 %1004
    %1006 = vrot.lane.b32.xlu0 %v930, 112
    %v1007 = vpop.permute.xlu0 %1006
    %1008 = vrot.lane.b32.xlu0 %v931, 112
    %v1009 = vpop.permute.xlu0 %1008
    %1010 = vrot.lane.b32.xlu0 %v932, 112
    %v1011 = vpop.permute.xlu0 %1010
    %1012 = vrot.lane.b32.xlu0 %v933, 112
    %v1013 = vpop.permute.xlu0 %1012
    %1014 = vrot.lane.b32.xlu0 %v934, 112
    %v1015 = vpop.permute.xlu0 %1014
    %1016 = vrot.lane.b32.xlu0 %v935, 112
    %v1017 = vpop.permute.xlu0 %1016
    %1018 = vrot.lane.b32.xlu0 %v936, 112
    %v1019 = vpop.permute.xlu0 %1018
    %1020 = vrot.lane.b32.xlu0 %v937, 112
    %v1021 = vpop.permute.xlu0 %1020
    %v1034 = vadd.f32 %v974, %v999
    %v1035 = vadd.f32 %v975, %v1001
    %v1036 = vadd.f32 %v976, %v1003
    %v1037 = vadd.f32 %v977, %v1005
    %v1038 = vadd.f32 %v978, %v1007
    %v1039 = vadd.f32 %v979, %v1009
    %v1040 = vadd.f32 %v980, %v1011
    %v1041 = vadd.f32 %v981, %v1013
    %v1042 = vadd.f32 %v982, %v1015
    %v1043 = vadd.f32 %v983, %v1017
    %v1044 = vadd.f32 %v984, %v1019
    %v1045 = vadd.f32 %v985, %v1021
    %v1047 = vlaneseq
    %v1048 = vshrl.u32 %v1047, 7
    %v1049 = vsub.s32 0, %v1048
    %v1050 = vrot.slane %v142, %v1049
    %v1052 = vadd.f32 %v1034, %v1050
    %v1053 = vadd.f32 %v1035, %v1050
    %v1054 = vadd.f32 %v1036, %v1050
    %v1055 = vadd.f32 %v1037, %v1050
    %v1056 = vadd.f32 %v1038, %v1050
    %v1057 = vadd.f32 %v1039, %v1050
    %v1058 = vadd.f32 %v1040, %v1050
    %v1059 = vadd.f32 %v1041, %v1050
    %v1060 = vadd.f32 %v1042, %v1050
    %v1061 = vadd.f32 %v1043, %v1050
    %v1062 = vadd.f32 %v1044, %v1050
    %v1063 = vadd.f32 %v1045, %v1050
    %v1064 = vmax.f32 %v1052, 0.0
    %v1065 = vmax.f32 %v1053, 0.0
    %v1066 = vmax.f32 %v1054, 0.0
    %v1067 = vmax.f32 %v1055, 0.0
    %v1068 = vmax.f32 %v1056, 0.0
    %v1069 = vmax.f32 %v1057, 0.0
    %v1070 = vmax.f32 %v1058, 0.0
    %v1071 = vmax.f32 %v1059, 0.0
    %v1072 = vmax.f32 %v1060, 0.0
    %v1073 = vmax.f32 %v1061, 0.0
    %v1074 = vmax.f32 %v1062, 0.0
    %v1075 = vmax.f32 %v1063, 0.0
    %v1077 = vlaneseq
    %v1078 = vshrl.u32 %v1077, 7
    %v1079 = vsub.s32 0, %v1078
    %v1080 = vrot.slane %v145, %v1079
    %1082 = vmatprep.subr.mxu0 0.0
    %1083 = vmatpush1.msra.mxu0 0.0
    %1084 = vmatprep.subr.mxu0 0.0
    %1085 = vmatpush1.msra.mxu0 0.0
    %1086 = vmatprep.subr.mxu0 0.0
    %1087 = vmatpush1.msra.mxu0 0.0
    %1088 = vmatprep.subr.mxu0 0.0
    %1089 = vmatpush1.msra.mxu0 0.0
    %1090 = vmatprep.subr.mxu0 0.0
    %1091 = vmatpush1.msra.mxu0 0.0
    %1092 = vmatprep.subr.mxu0 0.0
    %1093 = vmatpush1.msra.mxu0 0.0
    %1094 = vmatprep.subr.mxu0 0.0
    %1095 = vmatpush1.msra.mxu0 0.0
    %1096 = vmatprep.subr.mxu0 0.0
    %1097 = vmatpush1.msra.mxu0 0.0
    %1098 = vmatprep.subr.mxu0 0.0
    %1099 = vmatpush1.msra.mxu0 0.0
    %1100 = vmatprep.subr.mxu0 0.0
    %1101 = vmatpush1.msra.mxu0 0.0
    %1102 = vmatprep.subr.mxu0 0.0
    %1103 = vmatpush1.msra.mxu0 0.0
    %1104 = vmatprep.subr.mxu0 0.0
    %1105 = vmatpush1.msra.mxu0 0.0
    %1106 = vmatprep.subr.mxu0 0.0
    %1107 = vmatpush1.msra.mxu0 0.0
    %1108 = vmatprep.subr.mxu0 0.0
    %1109 = vmatpush1.msra.mxu0 0.0
    %1110 = vmatprep.subr.mxu0 0.0
    %1111 = vmatpush1.msra.mxu0 %v144
    %1112 = vmatprep.subr.mxu0 0.0
    %1113 = vmatpush1.msra.mxu0 %v143
    %1114 = vmatprep.subr.mxu0 0.0
    %1115 = vmatpush2.msra.mxu0 0.0
    %1116 = vmatprep.subr.mxu0 0.0
    %1117 = vmatpush2.msra.mxu0 0.0
    %1118 = vmatprep.subr.mxu0 0.0
    %1119 = vmatpush2.msra.mxu0 0.0
    %1120 = vmatprep.subr.mxu0 0.0
    %1121 = vmatpush2.msra.mxu0 0.0
    %1122 = vmatprep.subr.mxu0 0.0
    %1123 = vmatpush2.msra.mxu0 0.0
    %1124 = vmatprep.subr.mxu0 0.0
    %1125 = vmatpush2.msra.mxu0 0.0
    %1126 = vmatprep.subr.mxu0 0.0
    %1127 = vmatpush2.msra.mxu0 0.0
    %1128 = vmatprep.subr.mxu0 0.0
    %1129 = vmatpush2.msra.mxu0 0.0
    %1130 = vmatprep.subr.mxu0 0.0
    %1131 = vmatpush2.msra.mxu0 0.0
    %1132 = vmatprep.subr.mxu0 0.0
    %1133 = vmatpush2.msra.mxu0 0.0
    %1134 = vmatprep.subr.mxu0 0.0
    %1135 = vmatpush2.msra.mxu0 0.0
    %1136 = vmatprep.subr.mxu0 0.0
    %1137 = vmatpush2.msra.mxu0 0.0
    %1138 = vmatprep.subr.mxu0 0.0
    %1139 = vmatpush2.msra.mxu0 0.0
    %1140 = vmatprep.subr.mxu0 0.0
    %1141 = vmatpush2.msra.mxu0 0.0
    %1142 = vmatprep.subr.mxu0 0.0
    %1143 = vmatpush2.msra.mxu0 0.0
    %1144 = vmatprep.subr.mxu0 0.0
    %1145 = vmatpush2.msra.mxu0 0.0
    %1146 = vmatprep.mubr.f32.mxu0 0.0
    %1147 = vmatmul.mubr.f32.gmra.mxu0 %v148
    %v1148 = vpop.f32.mrf.mxu0
    %v1149 = vadd.f32 %v1080, %v1148
    %v1150 = vpop.f32.mrf.mxu0
    %1151 = vmatprep.mubr.f32.mxu0 0.0
    %1152 = vmatmul.mubr.f32.gmra.mxu0 %v151
    %v1153 = vpop.f32.mrf.mxu0
    %v1154 = vadd.f32 %v1080, %v1153
    %v1155 = vpop.f32.mrf.mxu0
    %1156 = vmatprep.mubr.f32.mxu0 0.0
    %1157 = vmatmul.mubr.f32.gmra.mxu0 %v154
    %v1158 = vpop.f32.mrf.mxu0
    %v1159 = vadd.f32 %v1080, %v1158
    %v1160 = vpop.f32.mrf.mxu0
    %1161 = vmatprep.mubr.f32.mxu0 0.0
    %1162 = vmatmul.mubr.f32.gmra.mxu0 %v157
    %v1163 = vpop.f32.mrf.mxu0
    %v1164 = vadd.f32 %v1080, %v1163
    %v1165 = vpop.f32.mrf.mxu0
    %1166 = vmatprep.mubr.f32.mxu0 0.0
    %1167 = vmatmul.mubr.f32.gmra.mxu0 %v160
    %v1168 = vpop.f32.mrf.mxu0
    %v1169 = vadd.f32 %v1080, %v1168
    %v1170 = vpop.f32.mrf.mxu0
    %1171 = vmatprep.mubr.f32.mxu0 0.0
    %1172 = vmatmul.mubr.f32.gmra.mxu0 %v163
    %v1173 = vpop.f32.mrf.mxu0
    %v1174 = vadd.f32 %v1080, %v1173
    %v1175 = vpop.f32.mrf.mxu0
    %1176 = vmatprep.mubr.f32.mxu0 0.0
    %1177 = vmatmul.mubr.f32.gmra.mxu0 %v166
    %v1178 = vpop.f32.mrf.mxu0
    %v1179 = vadd.f32 %v1080, %v1178
    %v1180 = vpop.f32.mrf.mxu0
    %1181 = vmatprep.mubr.f32.mxu0 0.0
    %1182 = vmatmul.mubr.f32.gmra.mxu0 %v169
    %v1183 = vpop.f32.mrf.mxu0
    %v1184 = vadd.f32 %v1080, %v1183
    %v1185 = vpop.f32.mrf.mxu0
    %1186 = vmatprep.mubr.f32.mxu0 0.0
    %1187 = vmatmul.mubr.f32.gmra.mxu0 %v172
    %v1188 = vpop.f32.mrf.mxu0
    %v1189 = vadd.f32 %v1080, %v1188
    %v1190 = vpop.f32.mrf.mxu0
    %1191 = vmatprep.mubr.f32.mxu0 0.0
    %1192 = vmatmul.mubr.f32.gmra.mxu0 %v175
    %v1193 = vpop.f32.mrf.mxu0
    %v1194 = vadd.f32 %v1080, %v1193
    %v1195 = vpop.f32.mrf.mxu0
    %1196 = vmatprep.mubr.f32.mxu0 0.0
    %1197 = vmatmul.mubr.f32.gmra.mxu0 %v178
    %v1198 = vpop.f32.mrf.mxu0
    %v1199 = vadd.f32 %v1080, %v1198
    %v1200 = vpop.f32.mrf.mxu0
    %1201 = vmatprep.mubr.f32.mxu0 0.0
    %1202 = vmatmul.mubr.f32.gmra.mxu0 %v181
    %v1203 = vpop.f32.mrf.mxu0
    %v1204 = vadd.f32 %v1080, %v1203
    %v1205 = vpop.f32.mrf.mxu0
    %1206 = vdwg.mxu0
    %v1207 = vadd.f32 %v1064, %v1149
    %v1208 = vadd.f32 %v1065, %v1154
    %v1209 = vadd.f32 %v1066, %v1159
    %v1210 = vadd.f32 %v1067, %v1164
    %v1211 = vadd.f32 %v1068, %v1169
    %v1212 = vadd.f32 %v1069, %v1174
    %v1213 = vadd.f32 %v1070, %v1179
    %v1214 = vadd.f32 %v1071, %v1184
    %v1215 = vadd.f32 %v1072, %v1189
    %v1216 = vadd.f32 %v1073, %v1194
    %v1217 = vadd.f32 %v1074, %v1199
    %v1218 = vadd.f32 %v1075, %v1204
    %v1219 = vmax.f32 %v1207, 0.0
    %v1220 = vmax.f32 %v1208, 0.0
    %v1221 = vmax.f32 %v1209, 0.0
    %v1222 = vmax.f32 %v1210, 0.0
    %v1223 = vmax.f32 %v1211, 0.0
    %v1224 = vmax.f32 %v1212, 0.0
    %v1225 = vmax.f32 %v1213, 0.0
    %v1226 = vmax.f32 %v1214, 0.0
    %v1227 = vmax.f32 %v1215, 0.0
    %v1228 = vmax.f32 %v1216, 0.0
    %v1229 = vmax.f32 %v1217, 0.0
    %v1230 = vmax.f32 %v1218, 0.0
    %1231 = vst.msk [vmem:[#allocation2] sm:$0xff] %vm666, %v1219
    %1232 = vst.msk [vmem:[#allocation2 + $0x8] sm:$0xff] %vm666, %v1220
    %1233 = vst.msk [vmem:[#allocation2 + $0x10] sm:$0xff] %vm666, %v1221
    %1234 = vst.msk [vmem:[#allocation2 + $0x18] sm:$0xff] %vm666, %v1222
    %1235 = vst.msk [vmem:[#allocation2 + $0x20] sm:$0xff] %vm666, %v1223
    %1236 = vst.msk [vmem:[#allocation2 + $0x28] sm:$0xff] %vm666, %v1224
    %1237 = vst.msk [vmem:[#allocation2 + $0x30] sm:$0xff] %vm666, %v1225
    %1238 = vst.msk [vmem:[#allocation2 + $0x38] sm:$0xff] %vm666, %v1226
    %1239 = vst.msk [vmem:[#allocation2 + $0x40] sm:$0xff] %vm666, %v1227
    %1240 = vst.msk [vmem:[#allocation2 + $0x48] sm:$0xff] %vm666, %v1228
    %1241 = vst.msk [vmem:[#allocation2 + $0x50] sm:$0xff] %vm666, %v1229
    %1242 = vst.msk [vmem:[#allocation2 + $0x58] sm:$0xff] %vm666, %v1230
    // Predicated region
    $region34: #{stgcn_block_forward.3} parent=1 // pred_check
      _
    $region35: #{stgcn_block_forward.3} parent=1 // pred_check_branch
      %1244 = sbr.rel (0) target = $region37
    $region36: #{stgcn_block_forward.3} parent=1 // pred_region
      %s1246 = ssub.s32 1536, 1536
      %1247 = vsyncadd [#allocation3], %s1246
      %s1248 = sshll.u32 [#allocation2], 4
      %s1249 = int_to_ptr.vmem [resolvable:$true] %s1248
      %1254 = dma.vmem_to_hbm [thread:$0]  %s1249, 1536, %s8, [#allocation3], 128, 128, 8
    $region37: #{stgcn_block_forward.3} parent=1 // pred_fallthru
      _
    // Predicated region
    $region38: #{stgcn_block_forward.3} parent=1 // pred_check
      _
    $region39: #{stgcn_block_forward.3} parent=1 // pred_check_branch
      %1256 = sbr.rel (0) target = $region41
    $region40: #{stgcn_block_forward.3} parent=1 // pred_region
      %1257 = dma.done [#allocation3], 1536
    $region41: #{stgcn_block_forward.3} parent=1 // pred_fallthru
      _
    %1258 = vsyncpa [#allocation3], 1

// kernel: stgcn_block_forward.2
$region0: #{stgcn_block_forward.2}
  #allocation0 [shape = 'u32[]', space=smem, size = 0x4, offset = 0x4, fixed_abs, tag = 'smem constant byte address 0x4 - core index']
  #allocation1 [shape = 'u32[144,128]{1,0:T(1,128)}', space=vmem, size = 0x12000, scoped, tag = 'internal scratch']
  %s0 = inlined_call_operand.vmem [shape: f32[96,4], index: 0, kind: input, shape index: {}]
  %s1 = inlined_call_operand.vmem [shape: f32[2,6,6], index: 1, kind: input, shape index: {}]
  %s2 = inlined_call_operand.vmem [shape: f32[96,6], index: 2, kind: input, shape index: {}]
  %s3 = inlined_call_operand.vmem [shape: f32[96,2], index: 3, kind: input, shape index: {}]
  %s4 = inlined_call_operand.vmem [shape: f32[96,8], index: 4, kind: input, shape index: {}]
  %s5 = inlined_call_operand.vmem [shape: f32[96,2], index: 5, kind: input, shape index: {}]
  %s6 = inlined_call_operand.vmem [shape: f32[4,24], index: 6, kind: input, shape index: {}]
  %s7 = inlined_call_operand.vmem [shape: f32[1,8], index: 7, kind: input, shape index: {}]
  %s8 = inlined_call_operand.vmem [shape: f32[8,24], index: 8, kind: input, shape index: {}]
  %s9 = inlined_call_operand.vmem [shape: f32[1,8], index: 9, kind: input, shape index: {}]
  %s10 = inlined_call_operand.vmem [shape: f32[4,8], index: 10, kind: input, shape index: {}]
  %s11 = inlined_call_operand.vmem [shape: f32[1,8], index: 11, kind: input, shape index: {}]
  %s12 = inlined_call_operand.vmem [shape: f32[8,16], index: 12, kind: input, shape index: {}]
  %s13 = inlined_call_operand.vmem [shape: f32[1,16], index: 13, kind: input, shape index: {}]
  %s14 = inlined_call_operand.vmem [shape: f32[1,6], index: 14, kind: input, shape index: {}]
  %s15 = inlined_call_operand.vmem [shape: f32[1,6], index: 15, kind: input, shape index: {}]
  %s16 = inlined_call_operand.vmem [shape: f32[96,16], index: 16, kind: output, shape index: {}]
  %s17 = sld [smem:[#allocation0]]
  $region74: #{stgcn_block_forward.2} parent=0
    _
  %s19 = ssub.s32 1, %s17
  %s20 = scalar_select 0, %s19, %s17
  // Predicated region
  $region2: #{stgcn_block_forward.2} parent=0 // pred_check
    _
  $region3: #{stgcn_block_forward.2} parent=0 // pred_check_branch
    %22 = sbr.rel (0) target = $region5
  $region4: #{stgcn_block_forward.2} parent=0 // pred_region
    _
  $region5: #{stgcn_block_forward.2} parent=0 // pred_fallthru
    _
  // Predicated region
  $region6: #{stgcn_block_forward.2} parent=0 // pred_check
    _
  $region7: #{stgcn_block_forward.2} parent=0 // pred_check_branch
    %24 = sbr.rel (0) target = $region9
  $region8: #{stgcn_block_forward.2} parent=0 // pred_region
    _
  $region9: #{stgcn_block_forward.2} parent=0 // pred_fallthru
    _
  // Predicated region
  $region10: #{stgcn_block_forward.2} parent=0 // pred_check
    _
  $region11: #{stgcn_block_forward.2} parent=0 // pred_check_branch
    %26 = sbr.rel (0) target = $region13
  $region12: #{stgcn_block_forward.2} parent=0 // pred_region
    _
  $region13: #{stgcn_block_forward.2} parent=0 // pred_fallthru
    _
  // Predicated region
  $region14: #{stgcn_block_forward.2} parent=0 // pred_check
    _
  $region15: #{stgcn_block_forward.2} parent=0 // pred_check_branch
    %28 = sbr.rel (0) target = $region17
  $region16: #{stgcn_block_forward.2} parent=0 // pred_region
    _
  $region17: #{stgcn_block_forward.2} parent=0 // pred_fallthru
    _
  // Predicated region
  $region18: #{stgcn_block_forward.2} parent=0 // pred_check
    _
  $region19: #{stgcn_block_forward.2} parent=0 // pred_check_branch
    %30 = sbr.rel (0) target = $region21
  $region20: #{stgcn_block_forward.2} parent=0 // pred_region
    _
  $region21: #{stgcn_block_forward.2} parent=0 // pred_fallthru
    _
  // Predicated region
  $region22: #{stgcn_block_forward.2} parent=0 // pred_check
    _
  $region23: #{stgcn_block_forward.2} parent=0 // pred_check_branch
    %32 = sbr.rel (0) target = $region25
  $region24: #{stgcn_block_forward.2} parent=0 // pred_region
    _
  $region25: #{stgcn_block_forward.2} parent=0 // pred_fallthru
    _
  // Predicated region
  $region26: #{stgcn_block_forward.2} parent=0 // pred_check
    _
  $region27: #{stgcn_block_forward.2} parent=0 // pred_check_branch
    %34 = sbr.rel (0) target = $region29
  $region28: #{stgcn_block_forward.2} parent=0 // pred_region
    _
  $region29: #{stgcn_block_forward.2} parent=0 // pred_fallthru
    _
  // Predicated region
  $region30: #{stgcn_block_forward.2} parent=0 // pred_check
    _
  $region31: #{stgcn_block_forward.2} parent=0 // pred_check_branch
    %36 = sbr.rel (0) target = $region33
  $region32: #{stgcn_block_forward.2} parent=0 // pred_region
    _
  $region33: #{stgcn_block_forward.2} parent=0 // pred_fallthru
    _
  // Predicated region
  $region34: #{stgcn_block_forward.2} parent=0 // pred_check
    _
  $region35: #{stgcn_block_forward.2} parent=0 // pred_check_branch
    %38 = sbr.rel (0) target = $region37
  $region36: #{stgcn_block_forward.2} parent=0 // pred_region
    _
  $region37: #{stgcn_block_forward.2} parent=0 // pred_fallthru
    _
  // Predicated region
  $region38: #{stgcn_block_forward.2} parent=0 // pred_check
    _
  $region39: #{stgcn_block_forward.2} parent=0 // pred_check_branch
    %40 = sbr.rel (0) target = $region41
  $region40: #{stgcn_block_forward.2} parent=0 // pred_region
    _
  $region41: #{stgcn_block_forward.2} parent=0 // pred_fallthru
    _
  // Predicated region
  $region42: #{stgcn_block_forward.2} parent=0 // pred_check
    _
  $region43: #{stgcn_block_forward.2} parent=0 // pred_check_branch
    %42 = sbr.rel (0) target = $region45
  $region44: #{stgcn_block_forward.2} parent=0 // pred_region
    _
  $region45: #{stgcn_block_forward.2} parent=0 // pred_fallthru
    _
  // Predicated region
  $region46: #{stgcn_block_forward.2} parent=0 // pred_check
    _
  $region47: #{stgcn_block_forward.2} parent=0 // pred_check_branch
    %44 = sbr.rel (0) target = $region49
  $region48: #{stgcn_block_forward.2} parent=0 // pred_region
    _
  $region49: #{stgcn_block_forward.2} parent=0 // pred_fallthru
    _
  // Predicated region
  $region50: #{stgcn_block_forward.2} parent=0 // pred_check
    _
  $region51: #{stgcn_block_forward.2} parent=0 // pred_check_branch
    %46 = sbr.rel (0) target = $region53
  $region52: #{stgcn_block_forward.2} parent=0 // pred_region
    _
  $region53: #{stgcn_block_forward.2} parent=0 // pred_fallthru
    _
  // Predicated region
  $region54: #{stgcn_block_forward.2} parent=0 // pred_check
    _
  $region55: #{stgcn_block_forward.2} parent=0 // pred_check_branch
    %48 = sbr.rel (0) target = $region57
  $region56: #{stgcn_block_forward.2} parent=0 // pred_region
    _
  $region57: #{stgcn_block_forward.2} parent=0 // pred_fallthru
    _
  // Predicated region
  $region58: #{stgcn_block_forward.2} parent=0 // pred_check
    _
  $region59: #{stgcn_block_forward.2} parent=0 // pred_check_branch
    %50 = sbr.rel (0) target = $region61
  $region60: #{stgcn_block_forward.2} parent=0 // pred_region
    _
  $region61: #{stgcn_block_forward.2} parent=0 // pred_fallthru
    _
  // Predicated region
  $region62: #{stgcn_block_forward.2} parent=0 // pred_check
    _
  $region63: #{stgcn_block_forward.2} parent=0 // pred_check_branch
    %52 = sbr.rel (0) target = $region65
  $region64: #{stgcn_block_forward.2} parent=0 // pred_region
    _
  $region65: #{stgcn_block_forward.2} parent=0 // pred_fallthru
    _
  %v53 = vld [vmem:[%s0] sm:$0xff]
  %v54 = vld [vmem:[%s0 + $0x8] sm:$0xff]
  %v55 = vld [vmem:[%s0 + $0x10] sm:$0xff]
  %v56 = vld [vmem:[%s0 + $0x18] sm:$0xff]
  %v57 = vld [vmem:[%s0 + $0x20] sm:$0xff]
  %v58 = vld [vmem:[%s0 + $0x28] sm:$0xff]
  %v59 = vld [vmem:[%s0 + $0x30] sm:$0xff]
  %v60 = vld [vmem:[%s0 + $0x38] sm:$0xff]
  %v61 = vld [vmem:[%s0 + $0x40] sm:$0xff]
  %v62 = vld [vmem:[%s0 + $0x48] sm:$0xff]
  %v63 = vld [vmem:[%s0 + $0x50] sm:$0xff]
  %v64 = vld [vmem:[%s0 + $0x58] sm:$0xff]
  %vm65 = vcmp.ne.f32.partialorder %v53, %v53
  %vm66 = vcmp.ne.f32.partialorder %v54, %v54
  %vm67 = vcmp.ne.f32.partialorder %v55, %v55
  %vm68 = vcmp.ne.f32.partialorder %v56, %v56
  %vm69 = vcmp.ne.f32.partialorder %v57, %v57
  %vm70 = vcmp.ne.f32.partialorder %v58, %v58
  %vm71 = vcmp.ne.f32.partialorder %v59, %v59
  %vm72 = vcmp.ne.f32.partialorder %v60, %v60
  %vm73 = vcmp.ne.f32.partialorder %v61, %v61
  %vm74 = vcmp.ne.f32.partialorder %v62, %v62
  %vm75 = vcmp.ne.f32.partialorder %v63, %v63
  %vm76 = vcmp.ne.f32.partialorder %v64, %v64
  %v77 = vsel %vm65, 0.0, %v53
  %v78 = vsel %vm66, 0.0, %v54
  %v79 = vsel %vm67, 0.0, %v55
  %v80 = vsel %vm68, 0.0, %v56
  %v81 = vsel %vm69, 0.0, %v57
  %v82 = vsel %vm70, 0.0, %v58
  %v83 = vsel %vm71, 0.0, %v59
  %v84 = vsel %vm72, 0.0, %v60
  %v85 = vsel %vm73, 0.0, %v61
  %v86 = vsel %vm74, 0.0, %v62
  %v87 = vsel %vm75, 0.0, %v63
  %v88 = vsel %vm76, 0.0, %v64
  %vm89 = vcmp.eq.f32.partialorder %v77, inf
  %vm90 = vcmp.eq.f32.partialorder %v78, inf
  %vm91 = vcmp.eq.f32.partialorder %v79, inf
  %vm92 = vcmp.eq.f32.partialorder %v80, inf
  %vm93 = vcmp.eq.f32.partialorder %v81, inf
  %vm94 = vcmp.eq.f32.partialorder %v82, inf
  %vm95 = vcmp.eq.f32.partialorder %v83, inf
  %vm96 = vcmp.eq.f32.partialorder %v84, inf
  %vm97 = vcmp.eq.f32.partialorder %v85, inf
  %vm98 = vcmp.eq.f32.partialorder %v86, inf
  %vm99 = vcmp.eq.f32.partialorder %v87, inf
  %vm100 = vcmp.eq.f32.partialorder %v88, inf
  %v101 = vsel %vm89, 3.4028235e+38, %v77
  %v102 = vsel %vm90, 3.4028235e+38, %v78
  %v103 = vsel %vm91, 3.4028235e+38, %v79
  %v104 = vsel %vm92, 3.4028235e+38, %v80
  %v105 = vsel %vm93, 3.4028235e+38, %v81
  %v106 = vsel %vm94, 3.4028235e+38, %v82
  %v107 = vsel %vm95, 3.4028235e+38, %v83
  %v108 = vsel %vm96, 3.4028235e+38, %v84
  %v109 = vsel %vm97, 3.4028235e+38, %v85
  %v110 = vsel %vm98, 3.4028235e+38, %v86
  %v111 = vsel %vm99, 3.4028235e+38, %v87
  %v112 = vsel %vm100, 3.4028235e+38, %v88
  %vm113 = vcmp.eq.f32.partialorder %v101, -inf
  %vm114 = vcmp.eq.f32.partialorder %v102, -inf
  %vm115 = vcmp.eq.f32.partialorder %v103, -inf
  %vm116 = vcmp.eq.f32.partialorder %v104, -inf
  %vm117 = vcmp.eq.f32.partialorder %v105, -inf
  %vm118 = vcmp.eq.f32.partialorder %v106, -inf
  %vm119 = vcmp.eq.f32.partialorder %v107, -inf
  %vm120 = vcmp.eq.f32.partialorder %v108, -inf
  %vm121 = vcmp.eq.f32.partialorder %v109, -inf
  %vm122 = vcmp.eq.f32.partialorder %v110, -inf
  %vm123 = vcmp.eq.f32.partialorder %v111, -inf
  %vm124 = vcmp.eq.f32.partialorder %v112, -inf
  %v125 = vsel %vm113, -3.4028235e+38, %v101
  %v126 = vsel %vm114, -3.4028235e+38, %v102
  %v127 = vsel %vm115, -3.4028235e+38, %v103
  %v128 = vsel %vm116, -3.4028235e+38, %v104
  %v129 = vsel %vm117, -3.4028235e+38, %v105
  %v130 = vsel %vm118, -3.4028235e+38, %v106
  %v131 = vsel %vm119, -3.4028235e+38, %v107
  %v132 = vsel %vm120, -3.4028235e+38, %v108
  %v133 = vsel %vm121, -3.4028235e+38, %v109
  %v134 = vsel %vm122, -3.4028235e+38, %v110
  %v135 = vsel %vm123, -3.4028235e+38, %v111
  %v136 = vsel %vm124, -3.4028235e+38, %v112
  %v137 = vld [vmem:[%s2] sm:$0xff]
  %v138 = vld [vmem:[%s2 + $0x8] sm:$0xff]
  %v139 = vld [vmem:[%s2 + $0x10] sm:$0xff]
  %v140 = vld [vmem:[%s2 + $0x18] sm:$0xff]
  %v141 = vld [vmem:[%s2 + $0x20] sm:$0xff]
  %v142 = vld [vmem:[%s2 + $0x28] sm:$0xff]
  %v143 = vld [vmem:[%s2 + $0x30] sm:$0xff]
  %v144 = vld [vmem:[%s2 + $0x38] sm:$0xff]
  %v145 = vld [vmem:[%s2 + $0x40] sm:$0xff]
  %v146 = vld [vmem:[%s2 + $0x48] sm:$0xff]
  %v147 = vld [vmem:[%s2 + $0x50] sm:$0xff]
  %v148 = vld [vmem:[%s2 + $0x58] sm:$0xff]
  %v149 = vld [vmem:[%s3] sm:$0xff]
  %v150 = vld [vmem:[%s3 + $0x8] sm:$0xff]
  %v151 = vld [vmem:[%s3 + $0x10] sm:$0xff]
  %v152 = vld [vmem:[%s3 + $0x18] sm:$0xff]
  %v153 = vld [vmem:[%s3 + $0x20] sm:$0xff]
  %v154 = vld [vmem:[%s3 + $0x28] sm:$0xff]
  %v155 = vld [vmem:[%s3 + $0x30] sm:$0xff]
  %v156 = vld [vmem:[%s3 + $0x38] sm:$0xff]
  %v157 = vld [vmem:[%s3 + $0x40] sm:$0xff]
  %v158 = vld [vmem:[%s3 + $0x48] sm:$0xff]
  %v159 = vld [vmem:[%s3 + $0x50] sm:$0xff]
  %v160 = vld [vmem:[%s3 + $0x58] sm:$0xff]
  %v161 = vld [vmem:[%s4] sm:$0xff]
  %v162 = vld [vmem:[%s4 + $0x8] sm:$0xff]
  %v163 = vld [vmem:[%s4 + $0x10] sm:$0xff]
  %v164 = vld [vmem:[%s4 + $0x18] sm:$0xff]
  %v165 = vld [vmem:[%s4 + $0x20] sm:$0xff]
  %v166 = vld [vmem:[%s4 + $0x28] sm:$0xff]
  %v167 = vld [vmem:[%s4 + $0x30] sm:$0xff]
  %v168 = vld [vmem:[%s4 + $0x38] sm:$0xff]
  %v169 = vld [vmem:[%s4 + $0x40] sm:$0xff]
  %v170 = vld [vmem:[%s4 + $0x48] sm:$0xff]
  %v171 = vld [vmem:[%s4 + $0x50] sm:$0xff]
  %v172 = vld [vmem:[%s4 + $0x58] sm:$0xff]
  %v173 = vld [vmem:[%s5] sm:$0xff]
  %v174 = vld [vmem:[%s5 + $0x8] sm:$0xff]
  %v175 = vld [vmem:[%s5 + $0x10] sm:$0xff]
  %v176 = vld [vmem:[%s5 + $0x18] sm:$0xff]
  %v177 = vld [vmem:[%s5 + $0x20] sm:$0xff]
  %v178 = vld [vmem:[%s5 + $0x28] sm:$0xff]
  %v179 = vld [vmem:[%s5 + $0x30] sm:$0xff]
  %v180 = vld [vmem:[%s5 + $0x38] sm:$0xff]
  %v181 = vld [vmem:[%s5 + $0x40] sm:$0xff]
  %v182 = vld [vmem:[%s5 + $0x48] sm:$0xff]
  %v183 = vld [vmem:[%s5 + $0x50] sm:$0xff]
  %v184 = vld [vmem:[%s5 + $0x58] sm:$0xff]
  %v185 = vsub.f32 1.0, %v161
  %v186 = vsub.f32 1.0, %v162
  %v187 = vsub.f32 1.0, %v163
  %v188 = vsub.f32 1.0, %v164
  %v189 = vsub.f32 1.0, %v165
  %v190 = vsub.f32 1.0, %v166
  %v191 = vsub.f32 1.0, %v167
  %v192 = vsub.f32 1.0, %v168
  %v193 = vsub.f32 1.0, %v169
  %v194 = vsub.f32 1.0, %v170
  %v195 = vsub.f32 1.0, %v171
  %v196 = vsub.f32 1.0, %v172
  %v197 = vld [vmem:[%s6] sm:$0xf]
  %v198 = vld [vmem:[%s7] sm:$0x1]
  %v199 = vld [vmem:[%s8] sm:$0xff]
  %v200 = vld [vmem:[%s9] sm:$0x1]
  %v201 = vld [vmem:[%s10] sm:$0xf]
  %v202 = vld [vmem:[%s11] sm:$0x1]
  %vm203 = vcmask 31744
  %v205 = vsel %vm203, %v125, 0
  %v208 = vsel %vm203, %v126, 0
  %v211 = vsel %vm203, %v127, 0
  %v214 = vsel %vm203, %v128, 0
  %v217 = vsel %vm203, %v129, 0
  %v220 = vsel %vm203, %v130, 0
  %v223 = vsel %vm203, %v131, 0
  %v226 = vsel %vm203, %v132, 0
  %v229 = vsel %vm203, %v133, 0
  %v232 = vsel %vm203, %v134, 0
  %v235 = vsel %vm203, %v135, 0
  %v238 = vsel %vm203, %v136, 0
  %vm240 = vcmask 1043456
  %v242 = vsel %vm240, %v197, 0
  %244 = vmatprep.subr.mxu0 0.0
  %245 = vmatpush1.msra.mxu0 0.0
  %246 = vmatprep.subr.mxu0 0.0
  %247 = vmatpush1.msra.mxu0 0.0
  %248 = vmatprep.subr.mxu0 0.0
  %249 = vmatpush1.msra.mxu0 0.0
  %250 = vmatprep.subr.mxu0 0.0
  %251 = vmatpush1.msra.mxu0 0.0
  %252 = vmatprep.subr.mxu0 0.0
  %253 = vmatpush1.msra.mxu0 0.0
  %254 = vmatprep.subr.mxu0 0.0
  %255 = vmatpush1.msra.mxu0 0.0
  %256 = vmatprep.subr.mxu0 0.0
  %257 = vmatpush1.msra.mxu0 0.0
  %258 = vmatprep.subr.mxu0 0.0
  %259 = vmatpush1.msra.mxu0 0.0
  %260 = vmatprep.subr.mxu0 0.0
  %261 = vmatpush1.msra.mxu0 0.0
  %262 = vmatprep.subr.mxu0 0.0
  %263 = vmatpush1.msra.mxu0 0.0
  %264 = vmatprep.subr.mxu0 0.0
  %265 = vmatpush1.msra.mxu0 0.0
  %266 = vmatprep.subr.mxu0 0.0
  %267 = vmatpush1.msra.mxu0 0.0
  %268 = vmatprep.subr.mxu0 0.0
  %269 = vmatpush1.msra.mxu0 0.0
  %270 = vmatprep.subr.mxu0 0.0
  %271 = vmatpush1.msra.mxu0 0.0
  %272 = vmatprep.subr.mxu0 0.0
  %273 = vmatpush1.msra.mxu0 0.0
  %274 = vmatprep.subr.mxu0 0.0
  %275 = vmatpush1.msra.mxu0 %v242
  %276 = vmatprep.subr.mxu0 0.0
  %277 = vmatpush2.msra.mxu0 0.0
  %278 = vmatprep.subr.mxu0 0.0
  %279 = vmatpush2.msra.mxu0 0.0
  %280 = vmatprep.subr.mxu0 0.0
  %281 = vmatpush2.msra.mxu0 0.0
  %282 = vmatprep.subr.mxu0 0.0
  %283 = vmatpush2.msra.mxu0 0.0
  %284 = vmatprep.subr.mxu0 0.0
  %285 = vmatpush2.msra.mxu0 0.0
  %286 = vmatprep.subr.mxu0 0.0
  %287 = vmatpush2.msra.mxu0 0.0
  %288 = vmatprep.subr.mxu0 0.0
  %289 = vmatpush2.msra.mxu0 0.0
  %290 = vmatprep.subr.mxu0 0.0
  %291 = vmatpush2.msra.mxu0 0.0
  %292 = vmatprep.subr.mxu0 0.0
  %293 = vmatpush2.msra.mxu0 0.0
  %294 = vmatprep.subr.mxu0 0.0
  %295 = vmatpush2.msra.mxu0 0.0
  %296 = vmatprep.subr.mxu0 0.0
  %297 = vmatpush2.msra.mxu0 0.0
  %298 = vmatprep.subr.mxu0 0.0
  %299 = vmatpush2.msra.mxu0 0.0
  %300 = vmatprep.subr.mxu0 0.0
  %301 = vmatpush2.msra.mxu0 0.0
  %302 = vmatprep.subr.mxu0 0.0
  %303 = vmatpush2.msra.mxu0 0.0
  %304 = vmatprep.subr.mxu0 0.0
  %305 = vmatpush2.msra.mxu0 0.0
  %306 = vmatprep.subr.mxu0 0.0
  %307 = vmatpush2.msra.mxu0 0.0
  %308 = vmatprep.mubr.f32.mxu0 0.0
  %309 = vmatmul.mubr.f32.gmra.mxu0 %v205
  %v310 = vpop.f32.mrf.mxu0
  %v311 = vadd.f32 0.0, %v310
  %v312 = vpop.f32.mrf.mxu0
  %313 = vmatprep.mubr.f32.mxu0 0.0
  %314 = vmatmul.mubr.f32.gmra.mxu0 %v208
  %v315 = vpop.f32.mrf.mxu0
  %v316 = vadd.f32 0.0, %v315
  %v317 = vpop.f32.mrf.mxu0
  %318 = vmatprep.mubr.f32.mxu0 0.0
  %319 = vmatmul.mubr.f32.gmra.mxu0 %v211
  %v320 = vpop.f32.mrf.mxu0
  %v321 = vadd.f32 0.0, %v320
  %v322 = vpop.f32.mrf.mxu0
  %323 = vmatprep.mubr.f32.mxu0 0.0
  %324 = vmatmul.mubr.f32.gmra.mxu0 %v214
  %v325 = vpop.f32.mrf.mxu0
  %v326 = vadd.f32 0.0, %v325
  %v327 = vpop.f32.mrf.mxu0
  %328 = vmatprep.mubr.f32.mxu0 0.0
  %329 = vmatmul.mubr.f32.gmra.mxu0 %v217
  %v330 = vpop.f32.mrf.mxu0
  %v331 = vadd.f32 0.0, %v330
  %v332 = vpop.f32.mrf.mxu0
  %333 = vmatprep.mubr.f32.mxu0 0.0
  %334 = vmatmul.mubr.f32.gmra.mxu0 %v220
  %v335 = vpop.f32.mrf.mxu0
  %v336 = vadd.f32 0.0, %v335
  %v337 = vpop.f32.mrf.mxu0
  %338 = vmatprep.mubr.f32.mxu0 0.0
  %339 = vmatmul.mubr.f32.gmra.mxu0 %v223
  %v340 = vpop.f32.mrf.mxu0
  %v341 = vadd.f32 0.0, %v340
  %v342 = vpop.f32.mrf.mxu0
  %343 = vmatprep.mubr.f32.mxu0 0.0
  %344 = vmatmul.mubr.f32.gmra.mxu0 %v226
  %v345 = vpop.f32.mrf.mxu0
  %v346 = vadd.f32 0.0, %v345
  %v347 = vpop.f32.mrf.mxu0
  %348 = vmatprep.mubr.f32.mxu0 0.0
  %349 = vmatmul.mubr.f32.gmra.mxu0 %v229
  %v350 = vpop.f32.mrf.mxu0
  %v351 = vadd.f32 0.0, %v350
  %v352 = vpop.f32.mrf.mxu0
  %353 = vmatprep.mubr.f32.mxu0 0.0
  %354 = vmatmul.mubr.f32.gmra.mxu0 %v232
  %v355 = vpop.f32.mrf.mxu0
  %v356 = vadd.f32 0.0, %v355
  %v357 = vpop.f32.mrf.mxu0
  %358 = vmatprep.mubr.f32.mxu0 0.0
  %359 = vmatmul.mubr.f32.gmra.mxu0 %v235
  %v360 = vpop.f32.mrf.mxu0
  %v361 = vadd.f32 0.0, %v360
  %v362 = vpop.f32.mrf.mxu0
  %363 = vmatprep.mubr.f32.mxu0 0.0
  %364 = vmatmul.mubr.f32.gmra.mxu0 %v238
  %v365 = vpop.f32.mrf.mxu0
  %v366 = vadd.f32 0.0, %v365
  %v367 = vpop.f32.mrf.mxu0
  %368 = vdwg.mxu0
  %v370 = vrot.slane %v366, 7
  %vm383 = vcmask 1040384
  %v384 = vrot.slane %v311, 7
  %v385 = vrot.slane %v316, 7
  %v386 = vsel %vm383, %v384, %v385
  %v387 = vrot.slane %v321, 7
  %v388 = vsel %vm383, %v385, %v387
  %v389 = vrot.slane %v326, 7
  %v390 = vsel %vm383, %v387, %v389
  %v391 = vrot.slane %v331, 7
  %v392 = vsel %vm383, %v389, %v391
  %v393 = vrot.slane %v336, 7
  %v394 = vsel %vm383, %v391, %v393
  %v395 = vrot.slane %v341, 7
  %v396 = vsel %vm383, %v393, %v395
  %v397 = vrot.slane %v346, 7
  %v398 = vsel %vm383, %v395, %v397
  %v399 = vrot.slane %v351, 7
  %v400 = vsel %vm383, %v397, %v399
  %v401 = vrot.slane %v356, 7
  %v402 = vsel %vm383, %v399, %v401
  %v403 = vrot.slane %v361, 7
  %v404 = vsel %vm383, %v401, %v403
  %v405 = vsel %vm383, %v403, %v370
  %v418 = vsel %vm383, %v370, %v384
  %420 = vset.pattern.permute.xlu0 0
  %421 = vperm.xlu0 %420, %v185
  %v422 = vpop.permute.xlu0 %421
  %425 = vset.pattern.permute.xlu0 0
  %426 = vperm.xlu0 %425, %v186
  %v427 = vpop.permute.xlu0 %426
  %430 = vset.pattern.permute.xlu0 0
  %431 = vperm.xlu0 %430, %v187
  %v432 = vpop.permute.xlu0 %431
  %435 = vset.pattern.permute.xlu0 0
  %436 = vperm.xlu0 %435, %v188
  %v437 = vpop.permute.xlu0 %436
  %440 = vset.pattern.permute.xlu0 0
  %441 = vperm.xlu0 %440, %v189
  %v442 = vpop.permute.xlu0 %441
  %445 = vset.pattern.permute.xlu0 0
  %446 = vperm.xlu0 %445, %v190
  %v447 = vpop.permute.xlu0 %446
  %450 = vset.pattern.permute.xlu0 0
  %451 = vperm.xlu0 %450, %v191
  %v452 = vpop.permute.xlu0 %451
  %455 = vset.pattern.permute.xlu0 0
  %456 = vperm.xlu0 %455, %v192
  %v457 = vpop.permute.xlu0 %456
  %460 = vset.pattern.permute.xlu0 0
  %461 = vperm.xlu0 %460, %v193
  %v462 = vpop.permute.xlu0 %461
  %465 = vset.pattern.permute.xlu0 0
  %466 = vperm.xlu0 %465, %v194
  %v467 = vpop.permute.xlu0 %466
  %470 = vset.pattern.permute.xlu0 0
  %471 = vperm.xlu0 %470, %v195
  %v472 = vpop.permute.xlu0 %471
  %475 = vset.pattern.permute.xlu0 0
  %476 = vperm.xlu0 %475, %v196
  %v477 = vpop.permute.xlu0 %476
  %v479 = vmul.f32 %v418, %v422
  %v480 = vmul.f32 %v386, %v427
  %v481 = vmul.f32 %v388, %v432
  %v482 = vmul.f32 %v390, %v437
  %v483 = vmul.f32 %v392, %v442
  %v484 = vmul.f32 %v394, %v447
  %v485 = vmul.f32 %v396, %v452
  %v486 = vmul.f32 %v398, %v457
  %v487 = vmul.f32 %v400, %v462
  %v488 = vmul.f32 %v402, %v467
  %v489 = vmul.f32 %v404, %v472
  %v490 = vmul.f32 %v405, %v477
  %vm491 = vcmask 1046528
  %v492 = vrot.slane %v311, 1
  %v493 = vrot.slane %v316, 1
  %v494 = vsel %vm491, %v492, %v493
  %v495 = vrot.slane %v321, 1
  %v496 = vsel %vm491, %v493, %v495
  %v497 = vrot.slane %v326, 1
  %v498 = vsel %vm491, %v495, %v497
  %v499 = vrot.slane %v331, 1
  %v500 = vsel %vm491, %v497, %v499
  %v501 = vrot.slane %v336, 1
  %v502 = vsel %vm491, %v499, %v501
  %v503 = vrot.slane %v341, 1
  %v504 = vsel %vm491, %v501, %v503
  %v505 = vrot.slane %v346, 1
  %v506 = vsel %vm491, %v503, %v505
  %v507 = vrot.slane %v351, 1
  %v508 = vsel %vm491, %v505, %v507
  %v509 = vrot.slane %v356, 1
  %v510 = vsel %vm491, %v507, %v509
  %v511 = vrot.slane %v361, 1
  %v512 = vsel %vm491, %v509, %v511
  %v513 = vrot.slane %v366, 1
  %v514 = vsel %vm491, %v511, %v513
  %v528 = vsel %vm491, %v513, %v492
  %529 = vset.pattern.permute.xlu0 7
  %530 = vperm.xlu0 %529, %v185
  %v531 = vpop.permute.xlu0 %530
  %533 = vset.pattern.permute.xlu0 7
  %534 = vperm.xlu0 %533, %v186
  %v535 = vpop.permute.xlu0 %534
  %537 = vset.pattern.permute.xlu0 7
  %538 = vperm.xlu0 %537, %v187
  %v539 = vpop.permute.xlu0 %538
  %541 = vset.pattern.permute.xlu0 7
  %542 = vperm.xlu0 %541, %v188
  %v543 = vpop.permute.xlu0 %542
  %545 = vset.pattern.permute.xlu0 7
  %546 = vperm.xlu0 %545, %v189
  %v547 = vpop.permute.xlu0 %546
  %549 = vset.pattern.permute.xlu0 7
  %550 = vperm.xlu0 %549, %v190
  %v551 = vpop.permute.xlu0 %550
  %553 = vset.pattern.permute.xlu0 7
  %554 = vperm.xlu0 %553, %v191
  %v555 = vpop.permute.xlu0 %554
  %557 = vset.pattern.permute.xlu0 7
  %558 = vperm.xlu0 %557, %v192
  %v559 = vpop.permute.xlu0 %558
  %561 = vset.pattern.permute.xlu0 7
  %562 = vperm.xlu0 %561, %v193
  %v563 = vpop.permute.xlu0 %562
  %565 = vset.pattern.permute.xlu0 7
  %566 = vperm.xlu0 %565, %v194
  %v567 = vpop.permute.xlu0 %566
  %569 = vset.pattern.permute.xlu0 7
  %570 = vperm.xlu0 %569, %v195
  %v571 = vpop.permute.xlu0 %570
  %573 = vset.pattern.permute.xlu0 7
  %574 = vperm.xlu0 %573, %v196
  %v575 = vpop.permute.xlu0 %574
  %v577 = vmul.f32 %v494, %v531
  %v578 = vmul.f32 %v496, %v535
  %v579 = vmul.f32 %v498, %v539
  %v580 = vmul.f32 %v500, %v543
  %v581 = vmul.f32 %v502, %v547
  %v582 = vmul.f32 %v504, %v551
  %v583 = vmul.f32 %v506, %v555
  %v584 = vmul.f32 %v508, %v559
  %v585 = vmul.f32 %v510, %v563
  %v586 = vmul.f32 %v512, %v567
  %v587 = vmul.f32 %v514, %v571
  %v588 = vmul.f32 %v528, %v575
  %589 = vrot.lane.b32.xlu0 %v311, 120
  %v590 = vpop.permute.xlu0 %589
  %591 = vrot.lane.b32.xlu0 %v316, 120
  %v592 = vpop.permute.xlu0 %591
  %593 = vrot.lane.b32.xlu0 %v321, 120
  %v594 = vpop.permute.xlu0 %593
  %595 = vrot.lane.b32.xlu0 %v326, 120
  %v596 = vpop.permute.xlu0 %595
  %597 = vrot.lane.b32.xlu0 %v331, 120
  %v598 = vpop.permute.xlu0 %597
  %599 = vrot.lane.b32.xlu0 %v336, 120
  %v600 = vpop.permute.xlu0 %599
  %601 = vrot.lane.b32.xlu0 %v341, 120
  %v602 = vpop.permute.xlu0 %601
  %603 = vrot.lane.b32.xlu0 %v346, 120
  %v604 = vpop.permute.xlu0 %603
  %605 = vrot.lane.b32.xlu0 %v351, 120
  %v606 = vpop.permute.xlu0 %605
  %607 = vrot.lane.b32.xlu0 %v356, 120
  %v608 = vpop.permute.xlu0 %607
  %609 = vrot.lane.b32.xlu0 %v361, 120
  %v610 = vpop.permute.xlu0 %609
  %611 = vrot.lane.b32.xlu0 %v366, 120
  %v612 = vpop.permute.xlu0 %611
  %v625 = vadd.f32 %v479, %v590
  %v626 = vadd.f32 %v480, %v592
  %v627 = vadd.f32 %v481, %v594
  %v628 = vadd.f32 %v482, %v596
  %v629 = vadd.f32 %v483, %v598
  %v630 = vadd.f32 %v484, %v600
  %v631 = vadd.f32 %v485, %v602
  %v632 = vadd.f32 %v486, %v604
  %v633 = vadd.f32 %v487, %v606
  %v634 = vadd.f32 %v488, %v608
  %v635 = vadd.f32 %v489, %v610
  %v636 = vadd.f32 %v490, %v612
  %649 = vrot.lane.b32.xlu0 %v577, 112
  %v650 = vpop.permute.xlu0 %649
  %651 = vrot.lane.b32.xlu0 %v578, 112
  %v652 = vpop.permute.xlu0 %651
  %653 = vrot.lane.b32.xlu0 %v579, 112
  %v654 = vpop.permute.xlu0 %653
  %655 = vrot.lane.b32.xlu0 %v580, 112
  %v656 = vpop.permute.xlu0 %655
  %657 = vrot.lane.b32.xlu0 %v581, 112
  %v658 = vpop.permute.xlu0 %657
  %659 = vrot.lane.b32.xlu0 %v582, 112
  %v660 = vpop.permute.xlu0 %659
  %661 = vrot.lane.b32.xlu0 %v583, 112
  %v662 = vpop.permute.xlu0 %661
  %663 = vrot.lane.b32.xlu0 %v584, 112
  %v664 = vpop.permute.xlu0 %663
  %665 = vrot.lane.b32.xlu0 %v585, 112
  %v666 = vpop.permute.xlu0 %665
  %667 = vrot.lane.b32.xlu0 %v586, 112
  %v668 = vpop.permute.xlu0 %667
  %669 = vrot.lane.b32.xlu0 %v587, 112
  %v670 = vpop.permute.xlu0 %669
  %671 = vrot.lane.b32.xlu0 %v588, 112
  %v672 = vpop.permute.xlu0 %671
  %v685 = vadd.f32 %v625, %v650
  %v686 = vadd.f32 %v626, %v652
  %v687 = vadd.f32 %v627, %v654
  %v688 = vadd.f32 %v628, %v656
  %v689 = vadd.f32 %v629, %v658
  %v690 = vadd.f32 %v630, %v660
  %v691 = vadd.f32 %v631, %v662
  %v692 = vadd.f32 %v632, %v664
  %v693 = vadd.f32 %v633, %v666
  %v694 = vadd.f32 %v634, %v668
  %v695 = vadd.f32 %v635, %v670
  %v696 = vadd.f32 %v636, %v672
  %v698 = vlaneseq
  %v699 = vshrl.u32 %v698, 7
  %v700 = vsub.s32 0, %v699
  %v701 = vrot.slane %v198, %v700
  %v703 = vadd.f32 %v685, %v701
  %v704 = vadd.f32 %v686, %v701
  %v705 = vadd.f32 %v687, %v701
  %v706 = vadd.f32 %v688, %v701
  %v707 = vadd.f32 %v689, %v701
  %v708 = vadd.f32 %v690, %v701
  %v709 = vadd.f32 %v691, %v701
  %v710 = vadd.f32 %v692, %v701
  %v711 = vadd.f32 %v693, %v701
  %v712 = vadd.f32 %v694, %v701
  %v713 = vadd.f32 %v695, %v701
  %v714 = vadd.f32 %v696, %v701
  %v715 = vmax.f32 %v703, 0.0
  %v716 = vmax.f32 %v704, 0.0
  %v717 = vmax.f32 %v705, 0.0
  %v718 = vmax.f32 %v706, 0.0
  %v719 = vmax.f32 %v707, 0.0
  %v720 = vmax.f32 %v708, 0.0
  %v721 = vmax.f32 %v709, 0.0
  %v722 = vmax.f32 %v710, 0.0
  %v723 = vmax.f32 %v711, 0.0
  %v724 = vmax.f32 %v712, 0.0
  %v725 = vmax.f32 %v713, 0.0
  %v726 = vmax.f32 %v714, 0.0
  %vm727 = vcmask 64512
  %v729 = vsel %vm727, %v715, 0
  %v732 = vsel %vm727, %v716, 0
  %v735 = vsel %vm727, %v717, 0
  %v738 = vsel %vm727, %v718, 0
  %v741 = vsel %vm727, %v719, 0
  %v744 = vsel %vm727, %v720, 0
  %v747 = vsel %vm727, %v721, 0
  %v750 = vsel %vm727, %v722, 0
  %v753 = vsel %vm727, %v723, 0
  %v756 = vsel %vm727, %v724, 0
  %v759 = vsel %vm727, %v725, 0
  %v762 = vsel %vm727, %v726, 0
  %764 = vmatprep.subr.mxu0 0.0
  %765 = vmatpush1.msra.mxu0 0.0
  %766 = vmatprep.subr.mxu0 0.0
  %767 = vmatpush1.msra.mxu0 0.0
  %768 = vmatprep.subr.mxu0 0.0
  %769 = vmatpush1.msra.mxu0 0.0
  %770 = vmatprep.subr.mxu0 0.0
  %771 = vmatpush1.msra.mxu0 0.0
  %772 = vmatprep.subr.mxu0 0.0
  %773 = vmatpush1.msra.mxu0 0.0
  %774 = vmatprep.subr.mxu0 0.0
  %775 = vmatpush1.msra.mxu0 0.0
  %776 = vmatprep.subr.mxu0 0.0
  %777 = vmatpush1.msra.mxu0 0.0
  %778 = vmatprep.subr.mxu0 0.0
  %779 = vmatpush1.msra.mxu0 0.0
  %780 = vmatprep.subr.mxu0 0.0
  %781 = vmatpush1.msra.mxu0 0.0
  %782 = vmatprep.subr.mxu0 0.0
  %783 = vmatpush1.msra.mxu0 0.0
  %784 = vmatprep.subr.mxu0 0.0
  %785 = vmatpush1.msra.mxu0 0.0
  %786 = vmatprep.subr.mxu0 0.0
  %787 = vmatpush1.msra.mxu0 0.0
  %788 = vmatprep.subr.mxu0 0.0
  %789 = vmatpush1.msra.mxu0 0.0
  %790 = vmatprep.subr.mxu0 0.0
  %791 = vmatpush1.msra.mxu0 0.0
  %792 = vmatprep.subr.mxu0 0.0
  %793 = vmatpush1.msra.mxu0 0.0
  %794 = vmatprep.subr.mxu0 0.0
  %795 = vmatpush1.msra.mxu0 %v199
  %796 = vmatprep.subr.mxu0 0.0
  %797 = vmatpush2.msra.mxu0 0.0
  %798 = vmatprep.subr.mxu0 0.0
  %799 = vmatpush2.msra.mxu0 0.0
  %800 = vmatprep.subr.mxu0 0.0
  %801 = vmatpush2.msra.mxu0 0.0
  %802 = vmatprep.subr.mxu0 0.0
  %803 = vmatpush2.msra.mxu0 0.0
  %804 = vmatprep.subr.mxu0 0.0
  %805 = vmatpush2.msra.mxu0 0.0
  %806 = vmatprep.subr.mxu0 0.0
  %807 = vmatpush2.msra.mxu0 0.0
  %808 = vmatprep.subr.mxu0 0.0
  %809 = vmatpush2.msra.mxu0 0.0
  %810 = vmatprep.subr.mxu0 0.0
  %811 = vmatpush2.msra.mxu0 0.0
  %812 = vmatprep.subr.mxu0 0.0
  %813 = vmatpush2.msra.mxu0 0.0
  %814 = vmatprep.subr.mxu0 0.0
  %815 = vmatpush2.msra.mxu0 0.0
  %816 = vmatprep.subr.mxu0 0.0
  %817 = vmatpush2.msra.mxu0 0.0
  %818 = vmatprep.subr.mxu0 0.0
  %819 = vmatpush2.msra.mxu0 0.0
  %820 = vmatprep.subr.mxu0 0.0
  %821 = vmatpush2.msra.mxu0 0.0
  %822 = vmatprep.subr.mxu0 0.0
  %823 = vmatpush2.msra.mxu0 0.0
  %824 = vmatprep.subr.mxu0 0.0
  %825 = vmatpush2.msra.mxu0 0.0
  %826 = vmatprep.subr.mxu0 0.0
  %827 = vmatpush2.msra.mxu0 0.0
  %828 = vmatprep.mubr.f32.mxu0 0.0
  %829 = vmatmul.mubr.f32.gmra.mxu0 %v729
  %v830 = vpop.f32.mrf.mxu0
  %v831 = vadd.f32 0.0, %v830
  %v832 = vpop.f32.mrf.mxu0
  %833 = vmatprep.mubr.f32.mxu0 0.0
  %834 = vmatmul.mubr.f32.gmra.mxu0 %v732
  %v835 = vpop.f32.mrf.mxu0
  %v836 = vadd.f32 0.0, %v835
  %v837 = vpop.f32.mrf.mxu0
  %838 = vmatprep.mubr.f32.mxu0 0.0
  %839 = vmatmul.mubr.f32.gmra.mxu0 %v735
  %v840 = vpop.f32.mrf.mxu0
  %v841 = vadd.f32 0.0, %v840
  %v842 = vpop.f32.mrf.mxu0
  %843 = vmatprep.mubr.f32.mxu0 0.0
  %844 = vmatmul.mubr.f32.gmra.mxu0 %v738
  %v845 = vpop.f32.mrf.mxu0
  %v846 = vadd.f32 0.0, %v845
  %v847 = vpop.f32.mrf.mxu0
  %848 = vmatprep.mubr.f32.mxu0 0.0
  %849 = vmatmul.mubr.f32.gmra.mxu0 %v741
  %v850 = vpop.f32.mrf.mxu0
  %v851 = vadd.f32 0.0, %v850
  %v852 = vpop.f32.mrf.mxu0
  %853 = vmatprep.mubr.f32.mxu0 0.0
  %854 = vmatmul.mubr.f32.gmra.mxu0 %v744
  %v855 = vpop.f32.mrf.mxu0
  %v856 = vadd.f32 0.0, %v855
  %v857 = vpop.f32.mrf.mxu0
  %858 = vmatprep.mubr.f32.mxu0 0.0
  %859 = vmatmul.mubr.f32.gmra.mxu0 %v747
  %v860 = vpop.f32.mrf.mxu0
  %v861 = vadd.f32 0.0, %v860
  %v862 = vpop.f32.mrf.mxu0
  %863 = vmatprep.mubr.f32.mxu0 0.0
  %864 = vmatmul.mubr.f32.gmra.mxu0 %v750
  %v865 = vpop.f32.mrf.mxu0
  %v866 = vadd.f32 0.0, %v865
  %v867 = vpop.f32.mrf.mxu0
  %868 = vmatprep.mubr.f32.mxu0 0.0
  %869 = vmatmul.mubr.f32.gmra.mxu0 %v753
  %v870 = vpop.f32.mrf.mxu0
  %v871 = vadd.f32 0.0, %v870
  %v872 = vpop.f32.mrf.mxu0
  %873 = vmatprep.mubr.f32.mxu0 0.0
  %874 = vmatmul.mubr.f32.gmra.mxu0 %v756
  %v875 = vpop.f32.mrf.mxu0
  %v876 = vadd.f32 0.0, %v875
  %v877 = vpop.f32.mrf.mxu0
  %878 = vmatprep.mubr.f32.mxu0 0.0
  %879 = vmatmul.mubr.f32.gmra.mxu0 %v759
  %v880 = vpop.f32.mrf.mxu0
  %v881 = vadd.f32 0.0, %v880
  %v882 = vpop.f32.mrf.mxu0
  %883 = vmatprep.mubr.f32.mxu0 0.0
  %884 = vmatmul.mubr.f32.gmra.mxu0 %v762
  %v885 = vpop.f32.mrf.mxu0
  %v886 = vadd.f32 0.0, %v885
  %v887 = vpop.f32.mrf.mxu0
  %888 = vdwg.mxu0
  %v890 = vrot.slane %v886, 7
  %v903 = vrot.slane %v831, 7
  %v904 = vrot.slane %v836, 7
  %v905 = vsel %vm383, %v903, %v904
  %v906 = vrot.slane %v841, 7
  %v907 = vsel %vm383, %v904, %v906
  %v908 = vrot.slane %v846, 7
  %v909 = vsel %vm383, %v906, %v908
  %v910 = vrot.slane %v851, 7
  %v911 = vsel %vm383, %v908, %v910
  %v912 = vrot.slane %v856, 7
  %v913 = vsel %vm383, %v910, %v912
  %v914 = vrot.slane %v861, 7
  %v915 = vsel %vm383, %v912, %v914
  %v916 = vrot.slane %v866, 7
  %v917 = vsel %vm383, %v914, %v916
  %v918 = vrot.slane %v871, 7
  %v919 = vsel %vm383, %v916, %v918
  %v920 = vrot.slane %v876, 7
  %v921 = vsel %vm383, %v918, %v920
  %v922 = vrot.slane %v881, 7
  %v923 = vsel %vm383, %v920, %v922
  %v924 = vsel %vm383, %v922, %v890
  %v937 = vsel %vm383, %v890, %v903
  %v938 = vmul.f32 %v937, %v422
  %v939 = vmul.f32 %v905, %v427
  %v940 = vmul.f32 %v907, %v432
  %v941 = vmul.f32 %v909, %v437
  %v942 = vmul.f32 %v911, %v442
  %v943 = vmul.f32 %v913, %v447
  %v944 = vmul.f32 %v915, %v452
  %v945 = vmul.f32 %v917, %v457
  %v946 = vmul.f32 %v919, %v462
  %v947 = vmul.f32 %v921, %v467
  %v948 = vmul.f32 %v923, %v472
  %v949 = vmul.f32 %v924, %v477
  %v950 = vrot.slane %v831, 1
  %v951 = vrot.slane %v836, 1
  %v952 = vsel %vm491, %v950, %v951
  %v953 = vrot.slane %v841, 1
  %v954 = vsel %vm491, %v951, %v953
  %v955 = vrot.slane %v846, 1
  %v956 = vsel %vm491, %v953, %v955
  %v957 = vrot.slane %v851, 1
  %v958 = vsel %vm491, %v955, %v957
  %v959 = vrot.slane %v856, 1
  %v960 = vsel %vm491, %v957, %v959
  %v961 = vrot.slane %v861, 1
  %v962 = vsel %vm491, %v959, %v961
  %v963 = vrot.slane %v866, 1
  %v964 = vsel %vm491, %v961, %v963
  %v965 = vrot.slane %v871, 1
  %v966 = vsel %vm491, %v963, %v965
  %v967 = vrot.slane %v876, 1
  %v968 = vsel %vm491, %v965, %v967
  %v969 = vrot.slane %v881, 1
  %v970 = vsel %vm491, %v967, %v969
  %v971 = vrot.slane %v886, 1
  %v972 = vsel %vm491, %v969, %v971
  %v986 = vsel %vm491, %v971, %v950
  %v987 = vmul.f32 %v952, %v531
  %v988 = vmul.f32 %v954, %v535
  %v989 = vmul.f32 %v956, %v539
  %v990 = vmul.f32 %v958, %v543
  %v991 = vmul.f32 %v960, %v547
  %v992 = vmul.f32 %v962, %v551
  %v993 = vmul.f32 %v964, %v555
  %v994 = vmul.f32 %v966, %v559
  %v995 = vmul.f32 %v968, %v563
  %v996 = vmul.f32 %v970, %v567
  %v997 = vmul.f32 %v972, %v571
  %v998 = vmul.f32 %v986, %v575
  %999 = vrot.lane.b32.xlu0 %v831, 120
  %v1000 = vpop.permute.xlu0 %999
  %1001 = vrot.lane.b32.xlu0 %v836, 120
  %v1002 = vpop.permute.xlu0 %1001
  %1003 = vrot.lane.b32.xlu0 %v841, 120
  %v1004 = vpop.permute.xlu0 %1003
  %1005 = vrot.lane.b32.xlu0 %v846, 120
  %v1006 = vpop.permute.xlu0 %1005
  %1007 = vrot.lane.b32.xlu0 %v851, 120
  %v1008 = vpop.permute.xlu0 %1007
  %1009 = vrot.lane.b32.xlu0 %v856, 120
  %v1010 = vpop.permute.xlu0 %1009
  %1011 = vrot.lane.b32.xlu0 %v861, 120
  %v1012 = vpop.permute.xlu0 %1011
  %1013 = vrot.lane.b32.xlu0 %v866, 120
  %v1014 = vpop.permute.xlu0 %1013
  %1015 = vrot.lane.b32.xlu0 %v871, 120
  %v1016 = vpop.permute.xlu0 %1015
  %1017 = vrot.lane.b32.xlu0 %v876, 120
  %v1018 = vpop.permute.xlu0 %1017
  %1019 = vrot.lane.b32.xlu0 %v881, 120
  %v1020 = vpop.permute.xlu0 %1019
  %1021 = vrot.lane.b32.xlu0 %v886, 120
  %v1022 = vpop.permute.xlu0 %1021
  %v1035 = vadd.f32 %v938, %v1000
  %v1036 = vadd.f32 %v939, %v1002
  %v1037 = vadd.f32 %v940, %v1004
  %v1038 = vadd.f32 %v941, %v1006
  %v1039 = vadd.f32 %v942, %v1008
  %v1040 = vadd.f32 %v943, %v1010
  %v1041 = vadd.f32 %v944, %v1012
  %v1042 = vadd.f32 %v945, %v1014
  %v1043 = vadd.f32 %v946, %v1016
  %v1044 = vadd.f32 %v947, %v1018
  %v1045 = vadd.f32 %v948, %v1020
  %v1046 = vadd.f32 %v949, %v1022
  %1059 = vrot.lane.b32.xlu0 %v987, 112
  %v1060 = vpop.permute.xlu0 %1059
  %1061 = vrot.lane.b32.xlu0 %v988, 112
  %v1062 = vpop.permute.xlu0 %1061
  %1063 = vrot.lane.b32.xlu0 %v989, 112
  %v1064 = vpop.permute.xlu0 %1063
  %1065 = vrot.lane.b32.xlu0 %v990, 112
  %v1066 = vpop.permute.xlu0 %1065
  %1067 = vrot.lane.b32.xlu0 %v991, 112
  %v1068 = vpop.permute.xlu0 %1067
  %1069 = vrot.lane.b32.xlu0 %v992, 112
  %v1070 = vpop.permute.xlu0 %1069
  %1071 = vrot.lane.b32.xlu0 %v993, 112
  %v1072 = vpop.permute.xlu0 %1071
  %1073 = vrot.lane.b32.xlu0 %v994, 112
  %v1074 = vpop.permute.xlu0 %1073
  %1075 = vrot.lane.b32.xlu0 %v995, 112
  %v1076 = vpop.permute.xlu0 %1075
  %1077 = vrot.lane.b32.xlu0 %v996, 112
  %v1078 = vpop.permute.xlu0 %1077
  %1079 = vrot.lane.b32.xlu0 %v997, 112
  %v1080 = vpop.permute.xlu0 %1079
  %1081 = vrot.lane.b32.xlu0 %v998, 112
  %v1082 = vpop.permute.xlu0 %1081
  %v1095 = vadd.f32 %v1035, %v1060
  %v1096 = vadd.f32 %v1036, %v1062
  %v1097 = vadd.f32 %v1037, %v1064
  %v1098 = vadd.f32 %v1038, %v1066
  %v1099 = vadd.f32 %v1039, %v1068
  %v1100 = vadd.f32 %v1040, %v1070
  %v1101 = vadd.f32 %v1041, %v1072
  %v1102 = vadd.f32 %v1042, %v1074
  %v1103 = vadd.f32 %v1043, %v1076
  %v1104 = vadd.f32 %v1044, %v1078
  %v1105 = vadd.f32 %v1045, %v1080
  %v1106 = vadd.f32 %v1046, %v1082
  %v1108 = vlaneseq
  %v1109 = vshrl.u32 %v1108, 7
  %v1110 = vsub.s32 0, %v1109
  %v1111 = vrot.slane %v200, %v1110
  %v1113 = vadd.f32 %v1095, %v1111
  %v1114 = vadd.f32 %v1096, %v1111
  %v1115 = vadd.f32 %v1097, %v1111
  %v1116 = vadd.f32 %v1098, %v1111
  %v1117 = vadd.f32 %v1099, %v1111
  %v1118 = vadd.f32 %v1100, %v1111
  %v1119 = vadd.f32 %v1101, %v1111
  %v1120 = vadd.f32 %v1102, %v1111
  %v1121 = vadd.f32 %v1103, %v1111
  %v1122 = vadd.f32 %v1104, %v1111
  %v1123 = vadd.f32 %v1105, %v1111
  %v1124 = vadd.f32 %v1106, %v1111
  %v1125 = vmax.f32 %v1113, 0.0
  %v1126 = vmax.f32 %v1114, 0.0
  %v1127 = vmax.f32 %v1115, 0.0
  %v1128 = vmax.f32 %v1116, 0.0
  %v1129 = vmax.f32 %v1117, 0.0
  %v1130 = vmax.f32 %v1118, 0.0
  %v1131 = vmax.f32 %v1119, 0.0
  %v1132 = vmax.f32 %v1120, 0.0
  %v1133 = vmax.f32 %v1121, 0.0
  %v1134 = vmax.f32 %v1122, 0.0
  %v1135 = vmax.f32 %v1123, 0.0
  %v1136 = vmax.f32 %v1124, 0.0
  %v1138 = vlaneseq
  %v1139 = vshrl.u32 %v1138, 7
  %v1140 = vsub.s32 0, %v1139
  %v1141 = vrot.slane %v202, %v1140
  %v1144 = vsel %vm240, %v201, 0
  %1146 = vmatprep.subr.mxu0 0.0
  %1147 = vmatpush1.msra.mxu0 0.0
  %1148 = vmatprep.subr.mxu0 0.0
  %1149 = vmatpush1.msra.mxu0 0.0
  %1150 = vmatprep.subr.mxu0 0.0
  %1151 = vmatpush1.msra.mxu0 0.0
  %1152 = vmatprep.subr.mxu0 0.0
  %1153 = vmatpush1.msra.mxu0 0.0
  %1154 = vmatprep.subr.mxu0 0.0
  %1155 = vmatpush1.msra.mxu0 0.0
  %1156 = vmatprep.subr.mxu0 0.0
  %1157 = vmatpush1.msra.mxu0 0.0
  %1158 = vmatprep.subr.mxu0 0.0
  %1159 = vmatpush1.msra.mxu0 0.0
  %1160 = vmatprep.subr.mxu0 0.0
  %1161 = vmatpush1.msra.mxu0 0.0
  %1162 = vmatprep.subr.mxu0 0.0
  %1163 = vmatpush1.msra.mxu0 0.0
  %1164 = vmatprep.subr.mxu0 0.0
  %1165 = vmatpush1.msra.mxu0 0.0
  %1166 = vmatprep.subr.mxu0 0.0
  %1167 = vmatpush1.msra.mxu0 0.0
  %1168 = vmatprep.subr.mxu0 0.0
  %1169 = vmatpush1.msra.mxu0 0.0
  %1170 = vmatprep.subr.mxu0 0.0
  %1171 = vmatpush1.msra.mxu0 0.0
  %1172 = vmatprep.subr.mxu0 0.0
  %1173 = vmatpush1.msra.mxu0 0.0
  %1174 = vmatprep.subr.mxu0 0.0
  %1175 = vmatpush1.msra.mxu0 0.0
  %1176 = vmatprep.subr.mxu0 0.0
  %1177 = vmatpush1.msra.mxu0 %v1144
  %1178 = vmatprep.subr.mxu0 0.0
  %1179 = vmatpush2.msra.mxu0 0.0
  %1180 = vmatprep.subr.mxu0 0.0
  %1181 = vmatpush2.msra.mxu0 0.0
  %1182 = vmatprep.subr.mxu0 0.0
  %1183 = vmatpush2.msra.mxu0 0.0
  %1184 = vmatprep.subr.mxu0 0.0
  %1185 = vmatpush2.msra.mxu0 0.0
  %1186 = vmatprep.subr.mxu0 0.0
  %1187 = vmatpush2.msra.mxu0 0.0
  %1188 = vmatprep.subr.mxu0 0.0
  %1189 = vmatpush2.msra.mxu0 0.0
  %1190 = vmatprep.subr.mxu0 0.0
  %1191 = vmatpush2.msra.mxu0 0.0
  %1192 = vmatprep.subr.mxu0 0.0
  %1193 = vmatpush2.msra.mxu0 0.0
  %1194 = vmatprep.subr.mxu0 0.0
  %1195 = vmatpush2.msra.mxu0 0.0
  %1196 = vmatprep.subr.mxu0 0.0
  %1197 = vmatpush2.msra.mxu0 0.0
  %1198 = vmatprep.subr.mxu0 0.0
  %1199 = vmatpush2.msra.mxu0 0.0
  %1200 = vmatprep.subr.mxu0 0.0
  %1201 = vmatpush2.msra.mxu0 0.0
  %1202 = vmatprep.subr.mxu0 0.0
  %1203 = vmatpush2.msra.mxu0 0.0
  %1204 = vmatprep.subr.mxu0 0.0
  %1205 = vmatpush2.msra.mxu0 0.0
  %1206 = vmatprep.subr.mxu0 0.0
  %1207 = vmatpush2.msra.mxu0 0.0
  %1208 = vmatprep.subr.mxu0 0.0
  %1209 = vmatpush2.msra.mxu0 0.0
  %1210 = vmatprep.mubr.f32.mxu0 0.0
  %1211 = vmatmul.mubr.f32.gmra.mxu0 %v205
  %v1212 = vpop.f32.mrf.mxu0
  %v1213 = vadd.f32 %v1141, %v1212
  %v1214 = vpop.f32.mrf.mxu0
  %1215 = vmatprep.mubr.f32.mxu0 0.0
  %1216 = vmatmul.mubr.f32.gmra.mxu0 %v208
  %v1217 = vpop.f32.mrf.mxu0
  %v1218 = vadd.f32 %v1141, %v1217
  %v1219 = vpop.f32.mrf.mxu0
  %1220 = vmatprep.mubr.f32.mxu0 0.0
  %1221 = vmatmul.mubr.f32.gmra.mxu0 %v211
  %v1222 = vpop.f32.mrf.mxu0
  %v1223 = vadd.f32 %v1141, %v1222
  %v1224 = vpop.f32.mrf.mxu0
  %1225 = vmatprep.mubr.f32.mxu0 0.0
  %1226 = vmatmul.mubr.f32.gmra.mxu0 %v214
  %v1227 = vpop.f32.mrf.mxu0
  %v1228 = vadd.f32 %v1141, %v1227
  %v1229 = vpop.f32.mrf.mxu0
  %1230 = vmatprep.mubr.f32.mxu0 0.0
  %1231 = vmatmul.mubr.f32.gmra.mxu0 %v217
  %v1232 = vpop.f32.mrf.mxu0
  %v1233 = vadd.f32 %v1141, %v1232
  %v1234 = vpop.f32.mrf.mxu0
  %1235 = vmatprep.mubr.f32.mxu0 0.0
  %1236 = vmatmul.mubr.f32.gmra.mxu0 %v220
  %v1237 = vpop.f32.mrf.mxu0
  %v1238 = vadd.f32 %v1141, %v1237
  %v1239 = vpop.f32.mrf.mxu0
  %1240 = vmatprep.mubr.f32.mxu0 0.0
  %1241 = vmatmul.mubr.f32.gmra.mxu0 %v223
  %v1242 = vpop.f32.mrf.mxu0
  %v1243 = vadd.f32 %v1141, %v1242
  %v1244 = vpop.f32.mrf.mxu0
  %1245 = vmatprep.mubr.f32.mxu0 0.0
  %1246 = vmatmul.mubr.f32.gmra.mxu0 %v226
  %v1247 = vpop.f32.mrf.mxu0
  %v1248 = vadd.f32 %v1141, %v1247
  %v1249 = vpop.f32.mrf.mxu0
  %1250 = vmatprep.mubr.f32.mxu0 0.0
  %1251 = vmatmul.mubr.f32.gmra.mxu0 %v229
  %v1252 = vpop.f32.mrf.mxu0
  %v1253 = vadd.f32 %v1141, %v1252
  %v1254 = vpop.f32.mrf.mxu0
  %1255 = vmatprep.mubr.f32.mxu0 0.0
  %1256 = vmatmul.mubr.f32.gmra.mxu0 %v232
  %v1257 = vpop.f32.mrf.mxu0
  %v1258 = vadd.f32 %v1141, %v1257
  %v1259 = vpop.f32.mrf.mxu0
  %1260 = vmatprep.mubr.f32.mxu0 0.0
  %1261 = vmatmul.mubr.f32.gmra.mxu0 %v235
  %v1262 = vpop.f32.mrf.mxu0
  %v1263 = vadd.f32 %v1141, %v1262
  %v1264 = vpop.f32.mrf.mxu0
  %1265 = vmatprep.mubr.f32.mxu0 0.0
  %1266 = vmatmul.mubr.f32.gmra.mxu0 %v238
  %v1267 = vpop.f32.mrf.mxu0
  %v1268 = vadd.f32 %v1141, %v1267
  %v1269 = vpop.f32.mrf.mxu0
  %1270 = vdwg.mxu0
  %v1271 = vadd.f32 %v1125, %v1213
  %v1272 = vadd.f32 %v1126, %v1218
  %v1273 = vadd.f32 %v1127, %v1223
  %v1274 = vadd.f32 %v1128, %v1228
  %v1275 = vadd.f32 %v1129, %v1233
  %v1276 = vadd.f32 %v1130, %v1238
  %v1277 = vadd.f32 %v1131, %v1243
  %v1278 = vadd.f32 %v1132, %v1248
  %v1279 = vadd.f32 %v1133, %v1253
  %v1280 = vadd.f32 %v1134, %v1258
  %v1281 = vadd.f32 %v1135, %v1263
  %v1282 = vadd.f32 %v1136, %v1268
  %v1283 = vmax.f32 %v1271, 0.0
  %v1284 = vmax.f32 %v1272, 0.0
  %v1285 = vmax.f32 %v1273, 0.0
  %v1286 = vmax.f32 %v1274, 0.0
  %v1287 = vmax.f32 %v1275, 0.0
  %v1288 = vmax.f32 %v1276, 0.0
  %v1289 = vmax.f32 %v1277, 0.0
  %v1290 = vmax.f32 %v1278, 0.0
  %v1291 = vmax.f32 %v1279, 0.0
  %v1292 = vmax.f32 %v1280, 0.0
  %v1293 = vmax.f32 %v1281, 0.0
  %v1294 = vmax.f32 %v1282, 0.0
  %vm1295 = vcmask 15360
  %v1297 = vsel %vm1295, %v149, 0
  %v1300 = vsel %vm1295, %v150, 0
  %v1303 = vsel %vm1295, %v151, 0
  %v1306 = vsel %vm1295, %v152, 0
  %v1309 = vsel %vm1295, %v153, 0
  %v1312 = vsel %vm1295, %v154, 0
  %v1315 = vsel %vm1295, %v155, 0
  %v1318 = vsel %vm1295, %v156, 0
  %v1321 = vsel %vm1295, %v157, 0
  %v1324 = vsel %vm1295, %v158, 0
  %v1327 = vsel %vm1295, %v159, 0
  %v1330 = vsel %vm1295, %v160, 0
  %1332 = vmatprep.subr.mxu0 0.0
  %1333 = vmatpush1.xpose.msra.mxu0 0.0
  %1334 = vmatprep.subr.mxu0 0.0
  %1335 = vmatpush1.xpose.msra.mxu0 0.0
  %1336 = vmatprep.subr.mxu0 0.0
  %1337 = vmatpush1.xpose.msra.mxu0 0.0
  %1338 = vmatprep.subr.mxu0 0.0
  %1339 = vmatpush1.xpose.msra.mxu0 0.0
  %1340 = vmatprep.subr.mxu0 0.0
  %1341 = vmatpush1.xpose.msra.mxu0 %v1330
  %1342 = vmatprep.subr.mxu0 0.0
  %1343 = vmatpush1.xpose.msra.mxu0 %v1327
  %1344 = vmatprep.subr.mxu0 0.0
  %1345 = vmatpush1.xpose.msra.mxu0 %v1324
  %1346 = vmatprep.subr.mxu0 0.0
  %1347 = vmatpush1.xpose.msra.mxu0 %v1321
  %1348 = vmatprep.subr.mxu0 0.0
  %1349 = vmatpush1.xpose.msra.mxu0 %v1318
  %1350 = vmatprep.subr.mxu0 0.0
  %1351 = vmatpush1.xpose.msra.mxu0 %v1315
  %1352 = vmatprep.subr.mxu0 0.0
  %1353 = vmatpush1.xpose.msra.mxu0 %v1312
  %1354 = vmatprep.subr.mxu0 0.0
  %1355 = vmatpush1.xpose.msra.mxu0 %v1309
  %1356 = vmatprep.subr.mxu0 0.0
  %1357 = vmatpush1.xpose.msra.mxu0 %v1306
  %1358 = vmatprep.subr.mxu0 0.0
  %1359 = vmatpush1.xpose.msra.mxu0 %v1303
  %1360 = vmatprep.subr.mxu0 0.0
  %1361 = vmatpush1.xpose.msra.mxu0 %v1300
  %1362 = vmatprep.subr.mxu0 0.0
  %1363 = vmatpush1.xpose.msra.mxu0 %v1297
  %1364 = vmatprep.subr.mxu0 0.0
  %1365 = vmatpush2.xpose.msra.mxu0 0.0
  %1366 = vmatprep.subr.mxu0 0.0
  %1367 = vmatpush2.xpose.msra.mxu0 0.0
  %1368 = vmatprep.subr.mxu0 0.0
  %1369 = vmatpush2.xpose.msra.mxu0 0.0
  %1370 = vmatprep.subr.mxu0 0.0
  %1371 = vmatpush2.xpose.msra.mxu0 0.0
  %1372 = vmatprep.subr.mxu0 0.0
  %1373 = vmatpush2.xpose.msra.mxu0 0.0
  %1374 = vmatprep.subr.mxu0 0.0
  %1375 = vmatpush2.xpose.msra.mxu0 0.0
  %1376 = vmatprep.subr.mxu0 0.0
  %1377 = vmatpush2.xpose.msra.mxu0 0.0
  %1378 = vmatprep.subr.mxu0 0.0
  %1379 = vmatpush2.xpose.msra.mxu0 0.0
  %1380 = vmatprep.subr.mxu0 0.0
  %1381 = vmatpush2.xpose.msra.mxu0 0.0
  %1382 = vmatprep.subr.mxu0 0.0
  %1383 = vmatpush2.xpose.msra.mxu0 0.0
  %1384 = vmatprep.subr.mxu0 0.0
  %1385 = vmatpush2.xpose.msra.mxu0 0.0
  %1386 = vmatprep.subr.mxu0 0.0
  %1387 = vmatpush2.xpose.msra.mxu0 0.0
  %1388 = vmatprep.subr.mxu0 0.0
  %1389 = vmatpush2.xpose.msra.mxu0 0.0
  %1390 = vmatprep.subr.mxu0 0.0
  %1391 = vmatpush2.xpose.msra.mxu0 0.0
  %1392 = vmatprep.subr.mxu0 0.0
  %1393 = vmatpush2.xpose.msra.mxu0 0.0
  %1394 = vmatprep.subr.mxu0 0.0
  %1395 = vmatpush2.xpose.msra.mxu0 0.0
  %1396 = vmatprep.mubr.f32.mxu0 0.0
  %1397 = vmatmul.mubr.f32.gmra.mxu0 %v1297
  %v1398 = vpop.f32.mrf.mxu0
  %v1399 = vadd.f32 0.0, %v1398
  %v1400 = vpop.f32.mrf.mxu0
  %1401 = vmatprep.mubr.f32.mxu0 0.0
  %1402 = vmatmul.mubr.f32.gmra.mxu0 %v1300
  %v1403 = vpop.f32.mrf.mxu0
  %v1404 = vadd.f32 0.0, %v1403
  %v1405 = vpop.f32.mrf.mxu0
  %1406 = vmatprep.mubr.f32.mxu0 0.0
  %1407 = vmatmul.mubr.f32.gmra.mxu0 %v1303
  %v1408 = vpop.f32.mrf.mxu0
  %v1409 = vadd.f32 0.0, %v1408
  %v1410 = vpop.f32.mrf.mxu0
  %1411 = vmatprep.mubr.f32.mxu0 0.0
  %1412 = vmatmul.mubr.f32.gmra.mxu0 %v1306
  %v1413 = vpop.f32.mrf.mxu0
  %v1414 = vadd.f32 0.0, %v1413
  %v1415 = vpop.f32.mrf.mxu0
  %1416 = vmatprep.mubr.f32.mxu0 0.0
  %1417 = vmatmul.mubr.f32.gmra.mxu0 %v1309
  %v1418 = vpop.f32.mrf.mxu0
  %v1419 = vadd.f32 0.0, %v1418
  %v1420 = vpop.f32.mrf.mxu0
  %1421 = vmatprep.mubr.f32.mxu0 0.0
  %1422 = vmatmul.mubr.f32.gmra.mxu0 %v1312
  %v1423 = vpop.f32.mrf.mxu0
  %v1424 = vadd.f32 0.0, %v1423
  %v1425 = vpop.f32.mrf.mxu0
  %1426 = vmatprep.mubr.f32.mxu0 0.0
  %1427 = vmatmul.mubr.f32.gmra.mxu0 %v1315
  %v1428 = vpop.f32.mrf.mxu0
  %v1429 = vadd.f32 0.0, %v1428
  %v1430 = vpop.f32.mrf.mxu0
  %1431 = vmatprep.mubr.f32.mxu0 0.0
  %1432 = vmatmul.mubr.f32.gmra.mxu0 %v1318
  %v1433 = vpop.f32.mrf.mxu0
  %v1434 = vadd.f32 0.0, %v1433
  %v1435 = vpop.f32.mrf.mxu0
  %1436 = vmatprep.mubr.f32.mxu0 0.0
  %1437 = vmatmul.mubr.f32.gmra.mxu0 %v1321
  %v1438 = vpop.f32.mrf.mxu0
  %v1439 = vadd.f32 0.0, %v1438
  %v1440 = vpop.f32.mrf.mxu0
  %1441 = vmatprep.mubr.f32.mxu0 0.0
  %1442 = vmatmul.mubr.f32.gmra.mxu0 %v1324
  %v1443 = vpop.f32.mrf.mxu0
  %v1444 = vadd.f32 0.0, %v1443
  %v1445 = vpop.f32.mrf.mxu0
  %1446 = vmatprep.mubr.f32.mxu0 0.0
  %1447 = vmatmul.mubr.f32.gmra.mxu0 %v1327
  %v1448 = vpop.f32.mrf.mxu0
  %v1449 = vadd.f32 0.0, %v1448
  %v1450 = vpop.f32.mrf.mxu0
  %1451 = vmatprep.mubr.f32.mxu0 0.0
  %1452 = vmatmul.mubr.f32.gmra.mxu0 %v1330
  %v1453 = vpop.f32.mrf.mxu0
  %v1454 = vadd.f32 0.0, %v1453
  %v1455 = vpop.f32.mrf.mxu0
  %1456 = vdwg.mxu0
  %v1458 = vsel %vm727, %v161, 0
  %v1461 = vsel %vm727, %v162, 0
  %v1464 = vsel %vm727, %v163, 0
  %v1467 = vsel %vm727, %v164, 0
  %v1470 = vsel %vm727, %v165, 0
  %v1473 = vsel %vm727, %v166, 0
  %v1476 = vsel %vm727, %v167, 0
  %v1479 = vsel %vm727, %v168, 0
  %v1482 = vsel %vm727, %v169, 0
  %v1485 = vsel %vm727, %v170, 0
  %v1488 = vsel %vm727, %v171, 0
  %v1491 = vsel %vm727, %v172, 0
  %1493 = vmatprep.subr.mxu0 0.0
  %1494 = vmatpush1.xpose.msra.mxu0 0.0
  %1495 = vmatprep.subr.mxu0 0.0
  %1496 = vmatpush1.xpose.msra.mxu0 0.0
  %1497 = vmatprep.subr.mxu0 0.0
  %1498 = vmatpush1.xpose.msra.mxu0 0.0
  %1499 = vmatprep.subr.mxu0 0.0
  %1500 = vmatpush1.xpose.msra.mxu0 0.0
  %1501 = vmatprep.subr.mxu0 0.0
  %1502 = vmatpush1.xpose.msra.mxu0 %v1491
  %1503 = vmatprep.subr.mxu0 0.0
  %1504 = vmatpush1.xpose.msra.mxu0 %v1488
  %1505 = vmatprep.subr.mxu0 0.0
  %1506 = vmatpush1.xpose.msra.mxu0 %v1485
  %1507 = vmatprep.subr.mxu0 0.0
  %1508 = vmatpush1.xpose.msra.mxu0 %v1482
  %1509 = vmatprep.subr.mxu0 0.0
  %1510 = vmatpush1.xpose.msra.mxu0 %v1479
  %1511 = vmatprep.subr.mxu0 0.0
  %1512 = vmatpush1.xpose.msra.mxu0 %v1476
  %1513 = vmatprep.subr.mxu0 0.0
  %1514 = vmatpush1.xpose.msra.mxu0 %v1473
  %1515 = vmatprep.subr.mxu0 0.0
  %1516 = vmatpush1.xpose.msra.mxu0 %v1470
  %1517 = vmatprep.subr.mxu0 0.0
  %1518 = vmatpush1.xpose.msra.mxu0 %v1467
  %1519 = vmatprep.subr.mxu0 0.0
  %1520 = vmatpush1.xpose.msra.mxu0 %v1464
  %1521 = vmatprep.subr.mxu0 0.0
  %1522 = vmatpush1.xpose.msra.mxu0 %v1461
  %1523 = vmatprep.subr.mxu0 0.0
  %1524 = vmatpush1.xpose.msra.mxu0 %v1458
  %1525 = vmatprep.subr.mxu0 0.0
  %1526 = vmatpush2.xpose.msra.mxu0 0.0
  %1527 = vmatprep.subr.mxu0 0.0
  %1528 = vmatpush2.xpose.msra.mxu0 0.0
  %1529 = vmatprep.subr.mxu0 0.0
  %1530 = vmatpush2.xpose.msra.mxu0 0.0
  %1531 = vmatprep.subr.mxu0 0.0
  %1532 = vmatpush2.xpose.msra.mxu0 0.0
  %1533 = vmatprep.subr.mxu0 0.0
  %1534 = vmatpush2.xpose.msra.mxu0 0.0
  %1535 = vmatprep.subr.mxu0 0.0
  %1536 = vmatpush2.xpose.msra.mxu0 0.0
  %1537 = vmatprep.subr.mxu0 0.0
  %1538 = vmatpush2.xpose.msra.mxu0 0.0
  %1539 = vmatprep.subr.mxu0 0.0
  %1540 = vmatpush2.xpose.msra.mxu0 0.0
  %1541 = vmatprep.subr.mxu0 0.0
  %1542 = vmatpush2.xpose.msra.mxu0 0.0
  %1543 = vmatprep.subr.mxu0 0.0
  %1544 = vmatpush2.xpose.msra.mxu0 0.0
  %1545 = vmatprep.subr.mxu0 0.0
  %1546 = vmatpush2.xpose.msra.mxu0 0.0
  %1547 = vmatprep.subr.mxu0 0.0
  %1548 = vmatpush2.xpose.msra.mxu0 0.0
  %1549 = vmatprep.subr.mxu0 0.0
  %1550 = vmatpush2.xpose.msra.mxu0 0.0
  %1551 = vmatprep.subr.mxu0 0.0
  %1552 = vmatpush2.xpose.msra.mxu0 0.0
  %1553 = vmatprep.subr.mxu0 0.0
  %1554 = vmatpush2.xpose.msra.mxu0 0.0
  %1555 = vmatprep.subr.mxu0 0.0
  %1556 = vmatpush2.xpose.msra.mxu0 0.0
  %1557 = vmatprep.mubr.f32.mxu0 0.0
  %1558 = vmatmul.mubr.f32.gmra.mxu0 %v1458
  %v1559 = vpop.f32.mrf.mxu0
  %v1560 = vadd.f32 0.0, %v1559
  %v1561 = vpop.f32.mrf.mxu0
  %1562 = vmatprep.mubr.f32.mxu0 0.0
  %1563 = vmatmul.mubr.f32.gmra.mxu0 %v1461
  %v1564 = vpop.f32.mrf.mxu0
  %v1565 = vadd.f32 0.0, %v1564
  %v1566 = vpop.f32.mrf.mxu0
  %1567 = vmatprep.mubr.f32.mxu0 0.0
  %1568 = vmatmul.mubr.f32.gmra.mxu0 %v1464
  %v1569 = vpop.f32.mrf.mxu0
  %v1570 = vadd.f32 0.0, %v1569
  %v1571 = vpop.f32.mrf.mxu0
  %1572 = vmatprep.mubr.f32.mxu0 0.0
  %1573 = vmatmul.mubr.f32.gmra.mxu0 %v1467
  %v1574 = vpop.f32.mrf.mxu0
  %v1575 = vadd.f32 0.0, %v1574
  %v1576 = vpop.f32.mrf.mxu0
  %1577 = vmatprep.mubr.f32.mxu0 0.0
  %1578 = vmatmul.mubr.f32.gmra.mxu0 %v1470
  %v1579 = vpop.f32.mrf.mxu0
  %v1580 = vadd.f32 0.0, %v1579
  %v1581 = vpop.f32.mrf.mxu0
  %1582 = vmatprep.mubr.f32.mxu0 0.0
  %1583 = vmatmul.mubr.f32.gmra.mxu0 %v1473
  %v1584 = vpop.f32.mrf.mxu0
  %v1585 = vadd.f32 0.0, %v1584
  %v1586 = vpop.f32.mrf.mxu0
  %1587 = vmatprep.mubr.f32.mxu0 0.0
  %1588 = vmatmul.mubr.f32.gmra.mxu0 %v1476
  %v1589 = vpop.f32.mrf.mxu0
  %v1590 = vadd.f32 0.0, %v1589
  %v1591 = vpop.f32.mrf.mxu0
  %1592 = vmatprep.mubr.f32.mxu0 0.0
  %1593 = vmatmul.mubr.f32.gmra.mxu0 %v1479
  %v1594 = vpop.f32.mrf.mxu0
  %v1595 = vadd.f32 0.0, %v1594
  %v1596 = vpop.f32.mrf.mxu0
  %1597 = vmatprep.mubr.f32.mxu0 0.0
  %1598 = vmatmul.mubr.f32.gmra.mxu0 %v1482
  %v1599 = vpop.f32.mrf.mxu0
  %v1600 = vadd.f32 0.0, %v1599
  %v1601 = vpop.f32.mrf.mxu0
  %1602 = vmatprep.mubr.f32.mxu0 0.0
  %1603 = vmatmul.mubr.f32.gmra.mxu0 %v1485
  %v1604 = vpop.f32.mrf.mxu0
  %v1605 = vadd.f32 0.0, %v1604
  %v1606 = vpop.f32.mrf.mxu0
  %1607 = vmatprep.mubr.f32.mxu0 0.0
  %1608 = vmatmul.mubr.f32.gmra.mxu0 %v1488
  %v1609 = vpop.f32.mrf.mxu0
  %v1610 = vadd.f32 0.0, %v1609
  %v1611 = vpop.f32.mrf.mxu0
  %1612 = vmatprep.mubr.f32.mxu0 0.0
  %1613 = vmatmul.mubr.f32.gmra.mxu0 %v1491
  %v1614 = vpop.f32.mrf.mxu0
  %v1615 = vadd.f32 0.0, %v1614
  %v1616 = vpop.f32.mrf.mxu0
  %1617 = vdwg.mxu0
  %v1618 = vmul.f32 %v1399, %v1560
  %v1619 = vmul.f32 %v1404, %v1565
  %v1620 = vmul.f32 %v1409, %v1570
  %v1621 = vmul.f32 %v1414, %v1575
  %v1622 = vmul.f32 %v1419, %v1580
  %v1623 = vmul.f32 %v1424, %v1585
  %v1624 = vmul.f32 %v1429, %v1590
  %v1625 = vmul.f32 %v1434, %v1595
  %v1626 = vmul.f32 %v1439, %v1600
  %v1627 = vmul.f32 %v1444, %v1605
  %v1628 = vmul.f32 %v1449, %v1610
  %v1629 = vmul.f32 %v1454, %v1615
  %v1630 = vld [vmem:[%s1] sm:$0x3f]
  %vm1631 = vcmp.ne.f32.partialorder %v1630, %v1630
  %v1632 = vsel %vm1631, 0.0, %v1630
  %vm1633 = vcmp.eq.f32.partialorder %v1632, inf
  %v1634 = vsel %vm1633, 3.4028235e+38, %v1632
  %vm1635 = vcmp.eq.f32.partialorder %v1634, -inf
  %v1636 = vsel %vm1635, -3.4028235e+38, %v1634
  %vm1637 = vcmask 48128
  %v1639 = vsel %vm1637, %v137, 0
  %v1642 = vsel %vm1637, %v138, 0
  %v1645 = vsel %vm1637, %v139, 0
  %v1648 = vsel %vm1637, %v140, 0
  %v1651 = vsel %vm1637, %v141, 0
  %v1654 = vsel %vm1637, %v142, 0
  %v1657 = vsel %vm1637, %v143, 0
  %v1660 = vsel %vm1637, %v144, 0
  %v1663 = vsel %vm1637, %v145, 0
  %v1666 = vsel %vm1637, %v146, 0
  %v1669 = vsel %vm1637, %v147, 0
  %v1672 = vsel %vm1637, %v148, 0
  %v1675 = vsel %vm1637, %v1636, 0
  %1677 = vmatprep.subr.mxu0 0.0
  %1678 = vmatpush1.xpose.msra.mxu0 0.0
  %1679 = vmatprep.subr.mxu0 0.0
  %1680 = vmatpush1.xpose.msra.mxu0 0.0
  %1681 = vmatprep.subr.mxu0 0.0
  %1682 = vmatpush1.xpose.msra.mxu0 0.0
  %1683 = vmatprep.subr.mxu0 0.0
  %1684 = vmatpush1.xpose.msra.mxu0 0.0
  %1685 = vmatprep.subr.mxu0 0.0
  %1686 = vmatpush1.xpose.msra.mxu0 0.0
  %1687 = vmatprep.subr.mxu0 0.0
  %1688 = vmatpush1.xpose.msra.mxu0 0.0
  %1689 = vmatprep.subr.mxu0 0.0
  %1690 = vmatpush1.xpose.msra.mxu0 0.0
  %1691 = vmatprep.subr.mxu0 0.0
  %1692 = vmatpush1.xpose.msra.mxu0 0.0
  %1693 = vmatprep.subr.mxu0 0.0
  %1694 = vmatpush1.xpose.msra.mxu0 0.0
  %1695 = vmatprep.subr.mxu0 0.0
  %1696 = vmatpush1.xpose.msra.mxu0 0.0
  %1697 = vmatprep.subr.mxu0 0.0
  %1698 = vmatpush1.xpose.msra.mxu0 0.0
  %1699 = vmatprep.subr.mxu0 0.0
  %1700 = vmatpush1.xpose.msra.mxu0 0.0
  %1701 = vmatprep.subr.mxu0 0.0
  %1702 = vmatpush1.xpose.msra.mxu0 0.0
  %1703 = vmatprep.subr.mxu0 0.0
  %1704 = vmatpush1.xpose.msra.mxu0 0.0
  %1705 = vmatprep.subr.mxu0 0.0
  %1706 = vmatpush1.xpose.msra.mxu0 0.0
  %1707 = vmatprep.subr.mxu0 0.0
  %1708 = vmatpush1.xpose.msra.mxu0 %v1675
  %1709 = vmatprep.subr.mxu0 0.0
  %1710 = vmatpush2.xpose.msra.mxu0 0.0
  %1711 = vmatprep.subr.mxu0 0.0
  %1712 = vmatpush2.xpose.msra.mxu0 0.0
  %1713 = vmatprep.subr.mxu0 0.0
  %1714 = vmatpush2.xpose.msra.mxu0 0.0
  %1715 = vmatprep.subr.mxu0 0.0
  %1716 = vmatpush2.xpose.msra.mxu0 0.0
  %1717 = vmatprep.subr.mxu0 0.0
  %1718 = vmatpush2.xpose.msra.mxu0 0.0
  %1719 = vmatprep.subr.mxu0 0.0
  %1720 = vmatpush2.xpose.msra.mxu0 0.0
  %1721 = vmatprep.subr.mxu0 0.0
  %1722 = vmatpush2.xpose.msra.mxu0 0.0
  %1723 = vmatprep.subr.mxu0 0.0
  %1724 = vmatpush2.xpose.msra.mxu0 0.0
  %1725 = vmatprep.subr.mxu0 0.0
  %1726 = vmatpush2.xpose.msra.mxu0 0.0
  %1727 = vmatprep.subr.mxu0 0.0
  %1728 = vmatpush2.xpose.msra.mxu0 0.0
  %1729 = vmatprep.subr.mxu0 0.0
  %1730 = vmatpush2.xpose.msra.mxu0 0.0
  %1731 = vmatprep.subr.mxu0 0.0
  %1732 = vmatpush2.xpose.msra.mxu0 0.0
  %1733 = vmatprep.subr.mxu0 0.0
  %1734 = vmatpush2.xpose.msra.mxu0 0.0
  %1735 = vmatprep.subr.mxu0 0.0
  %1736 = vmatpush2.xpose.msra.mxu0 0.0
  %1737 = vmatprep.subr.mxu0 0.0
  %1738 = vmatpush2.xpose.msra.mxu0 0.0
  %1739 = vmatprep.subr.mxu0 0.0
  %1740 = vmatpush2.xpose.msra.mxu0 0.0
  %1741 = vmatprep.mubr.f32.mxu0 0.0
  %1742 = vmatmul.mubr.f32.gmra.mxu0 %v1639
  %v1743 = vpop.f32.mrf.mxu0
  %v1744 = vadd.f32 0.0, %v1743
  %v1745 = vpop.f32.mrf.mxu0
  %1746 = vmatprep.mubr.f32.mxu0 0.0
  %1747 = vmatmul.mubr.f32.gmra.mxu0 %v1642
  %v1748 = vpop.f32.mrf.mxu0
  %v1749 = vadd.f32 0.0, %v1748
  %v1750 = vpop.f32.mrf.mxu0
  %1751 = vmatprep.mubr.f32.mxu0 0.0
  %1752 = vmatmul.mubr.f32.gmra.mxu0 %v1645
  %v1753 = vpop.f32.mrf.mxu0
  %v1754 = vadd.f32 0.0, %v1753
  %v1755 = vpop.f32.mrf.mxu0
  %1756 = vmatprep.mubr.f32.mxu0 0.0
  %1757 = vmatmul.mubr.f32.gmra.mxu0 %v1648
  %v1758 = vpop.f32.mrf.mxu0
  %v1759 = vadd.f32 0.0, %v1758
  %v1760 = vpop.f32.mrf.mxu0
  %1761 = vmatprep.mubr.f32.mxu0 0.0
  %1762 = vmatmul.mubr.f32.gmra.mxu0 %v1651
  %v1763 = vpop.f32.mrf.mxu0
  %v1764 = vadd.f32 0.0, %v1763
  %v1765 = vpop.f32.mrf.mxu0
  %1766 = vmatprep.mubr.f32.mxu0 0.0
  %1767 = vmatmul.mubr.f32.gmra.mxu0 %v1654
  %v1768 = vpop.f32.mrf.mxu0
  %v1769 = vadd.f32 0.0, %v1768
  %v1770 = vpop.f32.mrf.mxu0
  %1771 = vmatprep.mubr.f32.mxu0 0.0
  %1772 = vmatmul.mubr.f32.gmra.mxu0 %v1657
  %v1773 = vpop.f32.mrf.mxu0
  %v1774 = vadd.f32 0.0, %v1773
  %v1775 = vpop.f32.mrf.mxu0
  %1776 = vmatprep.mubr.f32.mxu0 0.0
  %1777 = vmatmul.mubr.f32.gmra.mxu0 %v1660
  %v1778 = vpop.f32.mrf.mxu0
  %v1779 = vadd.f32 0.0, %v1778
  %v1780 = vpop.f32.mrf.mxu0
  %1781 = vmatprep.mubr.f32.mxu0 0.0
  %1782 = vmatmul.mubr.f32.gmra.mxu0 %v1663
  %v1783 = vpop.f32.mrf.mxu0
  %v1784 = vadd.f32 0.0, %v1783
  %v1785 = vpop.f32.mrf.mxu0
  %1786 = vmatprep.mubr.f32.mxu0 0.0
  %1787 = vmatmul.mubr.f32.gmra.mxu0 %v1666
  %v1788 = vpop.f32.mrf.mxu0
  %v1789 = vadd.f32 0.0, %v1788
  %v1790 = vpop.f32.mrf.mxu0
  %1791 = vmatprep.mubr.f32.mxu0 0.0
  %1792 = vmatmul.mubr.f32.gmra.mxu0 %v1669
  %v1793 = vpop.f32.mrf.mxu0
  %v1794 = vadd.f32 0.0, %v1793
  %v1795 = vpop.f32.mrf.mxu0
  %1796 = vmatprep.mubr.f32.mxu0 0.0
  %1797 = vmatmul.mubr.f32.gmra.mxu0 %v1672
  %v1798 = vpop.f32.mrf.mxu0
  %v1799 = vadd.f32 0.0, %v1798
  %v1800 = vpop.f32.mrf.mxu0
  %1801 = vdwg.mxu0
  %v1803 = vsel %vm1637, %v1744, 0
  %v1806 = vsel %vm1637, %v1749, 0
  %v1809 = vsel %vm1637, %v1754, 0
  %v1812 = vsel %vm1637, %v1759, 0
  %v1815 = vsel %vm1637, %v1764, 0
  %v1818 = vsel %vm1637, %v1769, 0
  %v1821 = vsel %vm1637, %v1774, 0
  %v1824 = vsel %vm1637, %v1779, 0
  %v1827 = vsel %vm1637, %v1784, 0
  %v1830 = vsel %vm1637, %v1789, 0
  %v1833 = vsel %vm1637, %v1794, 0
  %v1836 = vsel %vm1637, %v1799, 0
  %1838 = vmatprep.subr.mxu0 0.0
  %1839 = vmatpush1.xpose.msra.mxu0 0.0
  %1840 = vmatprep.subr.mxu0 0.0
  %1841 = vmatpush1.xpose.msra.mxu0 0.0
  %1842 = vmatprep.subr.mxu0 0.0
  %1843 = vmatpush1.xpose.msra.mxu0 0.0
  %1844 = vmatprep.subr.mxu0 0.0
  %1845 = vmatpush1.xpose.msra.mxu0 0.0
  %1846 = vmatprep.subr.mxu0 0.0
  %1847 = vmatpush1.xpose.msra.mxu0 %v1672
  %1848 = vmatprep.subr.mxu0 0.0
  %1849 = vmatpush1.xpose.msra.mxu0 %v1669
  %1850 = vmatprep.subr.mxu0 0.0
  %1851 = vmatpush1.xpose.msra.mxu0 %v1666
  %1852 = vmatprep.subr.mxu0 0.0
  %1853 = vmatpush1.xpose.msra.mxu0 %v1663
  %1854 = vmatprep.subr.mxu0 0.0
  %1855 = vmatpush1.xpose.msra.mxu0 %v1660
  %1856 = vmatprep.subr.mxu0 0.0
  %1857 = vmatpush1.xpose.msra.mxu0 %v1657
  %1858 = vmatprep.subr.mxu0 0.0
  %1859 = vmatpush1.xpose.msra.mxu0 %v1654
  %1860 = vmatprep.subr.mxu0 0.0
  %1861 = vmatpush1.xpose.msra.mxu0 %v1651
  %1862 = vmatprep.subr.mxu0 0.0
  %1863 = vmatpush1.xpose.msra.mxu0 %v1648
  %1864 = vmatprep.subr.mxu0 0.0
  %1865 = vmatpush1.xpose.msra.mxu0 %v1645
  %1866 = vmatprep.subr.mxu0 0.0
  %1867 = vmatpush1.xpose.msra.mxu0 %v1642
  %1868 = vmatprep.subr.mxu0 0.0
  %1869 = vmatpush1.xpose.msra.mxu0 %v1639
  %1870 = vmatprep.subr.mxu0 0.0
  %1871 = vmatpush2.xpose.msra.mxu0 0.0
  %1872 = vmatprep.subr.mxu0 0.0
  %1873 = vmatpush2.xpose.msra.mxu0 0.0
  %1874 = vmatprep.subr.mxu0 0.0
  %1875 = vmatpush2.xpose.msra.mxu0 0.0
  %1876 = vmatprep.subr.mxu0 0.0
  %1877 = vmatpush2.xpose.msra.mxu0 0.0
  %1878 = vmatprep.subr.mxu0 0.0
  %1879 = vmatpush2.xpose.msra.mxu0 0.0
  %1880 = vmatprep.subr.mxu0 0.0
  %1881 = vmatpush2.xpose.msra.mxu0 0.0
  %1882 = vmatprep.subr.mxu0 0.0
  %1883 = vmatpush2.xpose.msra.mxu0 0.0
  %1884 = vmatprep.subr.mxu0 0.0
  %1885 = vmatpush2.xpose.msra.mxu0 0.0
  %1886 = vmatprep.subr.mxu0 0.0
  %1887 = vmatpush2.xpose.msra.mxu0 0.0
  %1888 = vmatprep.subr.mxu0 0.0
  %1889 = vmatpush2.xpose.msra.mxu0 0.0
  %1890 = vmatprep.subr.mxu0 0.0
  %1891 = vmatpush2.xpose.msra.mxu0 0.0
  %1892 = vmatprep.subr.mxu0 0.0
  %1893 = vmatpush2.xpose.msra.mxu0 0.0
  %1894 = vmatprep.subr.mxu0 0.0
  %1895 = vmatpush2.xpose.msra.mxu0 0.0
  %1896 = vmatprep.subr.mxu0 0.0
  %1897 = vmatpush2.xpose.msra.mxu0 0.0
  %1898 = vmatprep.subr.mxu0 0.0
  %1899 = vmatpush2.xpose.msra.mxu0 0.0
  %1900 = vmatprep.subr.mxu0 0.0
  %1901 = vmatpush2.xpose.msra.mxu0 0.0
  %1902 = vmatprep.mubr.f32.mxu0 0.0
  %1903 = vmatmul.mubr.f32.gmra.mxu0 %v1803
  %v1904 = vpop.f32.mrf.mxu0
  %v1905 = vadd.f32 0.0, %v1904
  %v1906 = vpop.f32.mrf.mxu0
  %1907 = vmatprep.mubr.f32.mxu0 0.0
  %1908 = vmatmul.mubr.f32.gmra.mxu0 %v1806
  %v1909 = vpop.f32.mrf.mxu0
  %v1910 = vadd.f32 0.0, %v1909
  %v1911 = vpop.f32.mrf.mxu0
  %1912 = vmatprep.mubr.f32.mxu0 0.0
  %1913 = vmatmul.mubr.f32.gmra.mxu0 %v1809
  %v1914 = vpop.f32.mrf.mxu0
  %v1915 = vadd.f32 0.0, %v1914
  %v1916 = vpop.f32.mrf.mxu0
  %1917 = vmatprep.mubr.f32.mxu0 0.0
  %1918 = vmatmul.mubr.f32.gmra.mxu0 %v1812
  %v1919 = vpop.f32.mrf.mxu0
  %v1920 = vadd.f32 0.0, %v1919
  %v1921 = vpop.f32.mrf.mxu0
  %1922 = vmatprep.mubr.f32.mxu0 0.0
  %1923 = vmatmul.mubr.f32.gmra.mxu0 %v1815
  %v1924 = vpop.f32.mrf.mxu0
  %v1925 = vadd.f32 0.0, %v1924
  %v1926 = vpop.f32.mrf.mxu0
  %1927 = vmatprep.mubr.f32.mxu0 0.0
  %1928 = vmatmul.mubr.f32.gmra.mxu0 %v1818
  %v1929 = vpop.f32.mrf.mxu0
  %v1930 = vadd.f32 0.0, %v1929
  %v1931 = vpop.f32.mrf.mxu0
  %1932 = vmatprep.mubr.f32.mxu0 0.0
  %1933 = vmatmul.mubr.f32.gmra.mxu0 %v1821
  %v1934 = vpop.f32.mrf.mxu0
  %v1935 = vadd.f32 0.0, %v1934
  %v1936 = vpop.f32.mrf.mxu0
  %1937 = vmatprep.mubr.f32.mxu0 0.0
  %1938 = vmatmul.mubr.f32.gmra.mxu0 %v1824
  %v1939 = vpop.f32.mrf.mxu0
  %v1940 = vadd.f32 0.0, %v1939
  %v1941 = vpop.f32.mrf.mxu0
  %1942 = vmatprep.mubr.f32.mxu0 0.0
  %1943 = vmatmul.mubr.f32.gmra.mxu0 %v1827
  %v1944 = vpop.f32.mrf.mxu0
  %v1945 = vadd.f32 0.0, %v1944
  %v1946 = vpop.f32.mrf.mxu0
  %1947 = vmatprep.mubr.f32.mxu0 0.0
  %1948 = vmatmul.mubr.f32.gmra.mxu0 %v1830
  %v1949 = vpop.f32.mrf.mxu0
  %v1950 = vadd.f32 0.0, %v1949
  %v1951 = vpop.f32.mrf.mxu0
  %1952 = vmatprep.mubr.f32.mxu0 0.0
  %1953 = vmatmul.mubr.f32.gmra.mxu0 %v1833
  %v1954 = vpop.f32.mrf.mxu0
  %v1955 = vadd.f32 0.0, %v1954
  %v1956 = vpop.f32.mrf.mxu0
  %1957 = vmatprep.mubr.f32.mxu0 0.0
  %1958 = vmatmul.mubr.f32.gmra.mxu0 %v1836
  %v1959 = vpop.f32.mrf.mxu0
  %v1960 = vadd.f32 0.0, %v1959
  %v1961 = vpop.f32.mrf.mxu0
  %1962 = vdwg.mxu0
  %1964 = vset.pattern.permute.xlu0 0
  %1965 = vperm.xlu0 %1964, %v173
  %v1966 = vpop.permute.xlu0 %1965
  %1969 = vset.pattern.permute.xlu0 0
  %1970 = vperm.xlu0 %1969, %v174
  %v1971 = vpop.permute.xlu0 %1970
  %1974 = vset.pattern.permute.xlu0 0
  %1975 = vperm.xlu0 %1974, %v175
  %v1976 = vpop.permute.xlu0 %1975
  %1979 = vset.pattern.permute.xlu0 0
  %1980 = vperm.xlu0 %1979, %v176
  %v1981 = vpop.permute.xlu0 %1980
  %1984 = vset.pattern.permute.xlu0 0
  %1985 = vperm.xlu0 %1984, %v177
  %v1986 = vpop.permute.xlu0 %1985
  %1989 = vset.pattern.permute.xlu0 0
  %1990 = vperm.xlu0 %1989, %v178
  %v1991 = vpop.permute.xlu0 %1990
  %1994 = vset.pattern.permute.xlu0 0
  %1995 = vperm.xlu0 %1994, %v179
  %v1996 = vpop.permute.xlu0 %1995
  %1999 = vset.pattern.permute.xlu0 0
  %2000 = vperm.xlu0 %1999, %v180
  %v2001 = vpop.permute.xlu0 %2000
  %2004 = vset.pattern.permute.xlu0 0
  %2005 = vperm.xlu0 %2004, %v181
  %v2006 = vpop.permute.xlu0 %2005
  %2009 = vset.pattern.permute.xlu0 0
  %2010 = vperm.xlu0 %2009, %v182
  %v2011 = vpop.permute.xlu0 %2010
  %2014 = vset.pattern.permute.xlu0 0
  %2015 = vperm.xlu0 %2014, %v183
  %v2016 = vpop.permute.xlu0 %2015
  %2019 = vset.pattern.permute.xlu0 0
  %2020 = vperm.xlu0 %2019, %v184
  %v2021 = vpop.permute.xlu0 %2020
  %v2023 = vmul.f32 %v1966, %v1905
  %v2024 = vmul.f32 %v1971, %v1910
  %v2025 = vmul.f32 %v1976, %v1915
  %v2026 = vmul.f32 %v1981, %v1920
  %v2027 = vmul.f32 %v1986, %v1925
  %v2028 = vmul.f32 %v1991, %v1930
  %v2029 = vmul.f32 %v1996, %v1935
  %v2030 = vmul.f32 %v2001, %v1940
  %v2031 = vmul.f32 %v2006, %v1945
  %v2032 = vmul.f32 %v2011, %v1950
  %v2033 = vmul.f32 %v2016, %v1955
  %v2034 = vmul.f32 %v2021, %v1960
  %s2035 = scalar_lea.vmem %s1, 8
  %v2036 = vld [vmem:[%s2035] sm:$0x3f]
  %vm2037 = vcmp.ne.f32.partialorder %v2036, %v2036
  %v2038 = vsel %vm2037, 0.0, %v2036
  %vm2039 = vcmp.eq.f32.partialorder %v2038, inf
  %v2040 = vsel %vm2039, 3.4028235e+38, %v2038
  %vm2041 = vcmp.eq.f32.partialorder %v2040, -inf
  %v2042 = vsel %vm2041, -3.4028235e+38, %v2040
  %v2044 = vsel %vm1637, %v2042, 0
  %2046 = vmatprep.subr.mxu0 0.0
  %2047 = vmatpush1.xpose.msra.mxu0 0.0
  %2048 = vmatprep.subr.mxu0 0.0
  %2049 = vmatpush1.xpose.msra.mxu0 0.0
  %2050 = vmatprep.subr.mxu0 0.0
  %2051 = vmatpush1.xpose.msra.mxu0 0.0
  %2052 = vmatprep.subr.mxu0 0.0
  %2053 = vmatpush1.xpose.msra.mxu0 0.0
  %2054 = vmatprep.subr.mxu0 0.0
  %2055 = vmatpush1.xpose.msra.mxu0 0.0
  %2056 = vmatprep.subr.mxu0 0.0
  %2057 = vmatpush1.xpose.msra.mxu0 0.0
  %2058 = vmatprep.subr.mxu0 0.0
  %2059 = vmatpush1.xpose.msra.mxu0 0.0
  %2060 = vmatprep.subr.mxu0 0.0
  %2061 = vmatpush1.xpose.msra.mxu0 0.0
  %2062 = vmatprep.subr.mxu0 0.0
  %2063 = vmatpush1.xpose.msra.mxu0 0.0
  %2064 = vmatprep.subr.mxu0 0.0
  %2065 = vmatpush1.xpose.msra.mxu0 0.0
  %2066 = vmatprep.subr.mxu0 0.0
  %2067 = vmatpush1.xpose.msra.mxu0 0.0
  %2068 = vmatprep.subr.mxu0 0.0
  %2069 = vmatpush1.xpose.msra.mxu0 0.0
  %2070 = vmatprep.subr.mxu0 0.0
  %2071 = vmatpush1.xpose.msra.mxu0 0.0
  %2072 = vmatprep.subr.mxu0 0.0
  %2073 = vmatpush1.xpose.msra.mxu0 0.0
  %2074 = vmatprep.subr.mxu0 0.0
  %2075 = vmatpush1.xpose.msra.mxu0 0.0
  %2076 = vmatprep.subr.mxu0 0.0
  %2077 = vmatpush1.xpose.msra.mxu0 %v2044
  %2078 = vmatprep.subr.mxu0 0.0
  %2079 = vmatpush2.xpose.msra.mxu0 0.0
  %2080 = vmatprep.subr.mxu0 0.0
  %2081 = vmatpush2.xpose.msra.mxu0 0.0
  %2082 = vmatprep.subr.mxu0 0.0
  %2083 = vmatpush2.xpose.msra.mxu0 0.0
  %2084 = vmatprep.subr.mxu0 0.0
  %2085 = vmatpush2.xpose.msra.mxu0 0.0
  %2086 = vmatprep.subr.mxu0 0.0
  %2087 = vmatpush2.xpose.msra.mxu0 0.0
  %2088 = vmatprep.subr.mxu0 0.0
  %2089 = vmatpush2.xpose.msra.mxu0 0.0
  %2090 = vmatprep.subr.mxu0 0.0
  %2091 = vmatpush2.xpose.msra.mxu0 0.0
  %2092 = vmatprep.subr.mxu0 0.0
  %2093 = vmatpush2.xpose.msra.mxu0 0.0
  %2094 = vmatprep.subr.mxu0 0.0
  %2095 = vmatpush2.xpose.msra.mxu0 0.0
  %2096 = vmatprep.subr.mxu0 0.0
  %2097 = vmatpush2.xpose.msra.mxu0 0.0
  %2098 = vmatprep.subr.mxu0 0.0
  %2099 = vmatpush2.xpose.msra.mxu0 0.0
  %2100 = vmatprep.subr.mxu0 0.0
  %2101 = vmatpush2.xpose.msra.mxu0 0.0
  %2102 = vmatprep.subr.mxu0 0.0
  %2103 = vmatpush2.xpose.msra.mxu0 0.0
  %2104 = vmatprep.subr.mxu0 0.0
  %2105 = vmatpush2.xpose.msra.mxu0 0.0
  %2106 = vmatprep.subr.mxu0 0.0
  %2107 = vmatpush2.xpose.msra.mxu0 0.0
  %2108 = vmatprep.subr.mxu0 0.0
  %2109 = vmatpush2.xpose.msra.mxu0 0.0
  %2110 = vmatprep.mubr.f32.mxu0 0.0
  %2111 = vmatmul.mubr.f32.gmra.mxu0 %v1639
  %v2112 = vpop.f32.mrf.mxu0
  %v2113 = vadd.f32 0.0, %v2112
  %v2114 = vpop.f32.mrf.mxu0
  %2115 = vmatprep.mubr.f32.mxu0 0.0
  %2116 = vmatmul.mubr.f32.gmra.mxu0 %v1642
  %v2117 = vpop.f32.mrf.mxu0
  %v2118 = vadd.f32 0.0, %v2117
  %v2119 = vpop.f32.mrf.mxu0
  %2120 = vmatprep.mubr.f32.mxu0 0.0
  %2121 = vmatmul.mubr.f32.gmra.mxu0 %v1645
  %v2122 = vpop.f32.mrf.mxu0
  %v2123 = vadd.f32 0.0, %v2122
  %v2124 = vpop.f32.mrf.mxu0
  %2125 = vmatprep.mubr.f32.mxu0 0.0
  %2126 = vmatmul.mubr.f32.gmra.mxu0 %v1648
  %v2127 = vpop.f32.mrf.mxu0
  %v2128 = vadd.f32 0.0, %v2127
  %v2129 = vpop.f32.mrf.mxu0
  %2130 = vmatprep.mubr.f32.mxu0 0.0
  %2131 = vmatmul.mubr.f32.gmra.mxu0 %v1651
  %v2132 = vpop.f32.mrf.mxu0
  %v2133 = vadd.f32 0.0, %v2132
  %v2134 = vpop.f32.mrf.mxu0
  %2135 = vmatprep.mubr.f32.mxu0 0.0
  %2136 = vmatmul.mubr.f32.gmra.mxu0 %v1654
  %v2137 = vpop.f32.mrf.mxu0
  %v2138 = vadd.f32 0.0, %v2137
  %v2139 = vpop.f32.mrf.mxu0
  %2140 = vmatprep.mubr.f32.mxu0 0.0
  %2141 = vmatmul.mubr.f32.gmra.mxu0 %v1657
  %v2142 = vpop.f32.mrf.mxu0
  %v2143 = vadd.f32 0.0, %v2142
  %v2144 = vpop.f32.mrf.mxu0
  %2145 = vmatprep.mubr.f32.mxu0 0.0
  %2146 = vmatmul.mubr.f32.gmra.mxu0 %v1660
  %v2147 = vpop.f32.mrf.mxu0
  %v2148 = vadd.f32 0.0, %v2147
  %v2149 = vpop.f32.mrf.mxu0
  %2150 = vmatprep.mubr.f32.mxu0 0.0
  %2151 = vmatmul.mubr.f32.gmra.mxu0 %v1663
  %v2152 = vpop.f32.mrf.mxu0
  %v2153 = vadd.f32 0.0, %v2152
  %v2154 = vpop.f32.mrf.mxu0
  %2155 = vmatprep.mubr.f32.mxu0 0.0
  %2156 = vmatmul.mubr.f32.gmra.mxu0 %v1666
  %v2157 = vpop.f32.mrf.mxu0
  %v2158 = vadd.f32 0.0, %v2157
  %v2159 = vpop.f32.mrf.mxu0
  %2160 = vmatprep.mubr.f32.mxu0 0.0
  %2161 = vmatmul.mubr.f32.gmra.mxu0 %v1669
  %v2162 = vpop.f32.mrf.mxu0
  %v2163 = vadd.f32 0.0, %v2162
  %v2164 = vpop.f32.mrf.mxu0
  %2165 = vmatprep.mubr.f32.mxu0 0.0
  %2166 = vmatmul.mubr.f32.gmra.mxu0 %v1672
  %v2167 = vpop.f32.mrf.mxu0
  %v2168 = vadd.f32 0.0, %v2167
  %v2169 = vpop.f32.mrf.mxu0
  %2170 = vdwg.mxu0
  %v2172 = vsel %vm1637, %v2113, 0
  %v2175 = vsel %vm1637, %v2118, 0
  %v2178 = vsel %vm1637, %v2123, 0
  %v2181 = vsel %vm1637, %v2128, 0
  %v2184 = vsel %vm1637, %v2133, 0
  %v2187 = vsel %vm1637, %v2138, 0
  %v2190 = vsel %vm1637, %v2143, 0
  %v2193 = vsel %vm1637, %v2148, 0
  %v2196 = vsel %vm1637, %v2153, 0
  %v2199 = vsel %vm1637, %v2158, 0
  %v2202 = vsel %vm1637, %v2163, 0
  %v2205 = vsel %vm1637, %v2168, 0
  %2207 = vmatprep.subr.mxu0 0.0
  %2208 = vmatpush1.xpose.msra.mxu0 0.0
  %2209 = vmatprep.subr.mxu0 0.0
  %2210 = vmatpush1.xpose.msra.mxu0 0.0
  %2211 = vmatprep.subr.mxu0 0.0
  %2212 = vmatpush1.xpose.msra.mxu0 0.0
  %2213 = vmatprep.subr.mxu0 0.0
  %2214 = vmatpush1.xpose.msra.mxu0 0.0
  %2215 = vmatprep.subr.mxu0 0.0
  %2216 = vmatpush1.xpose.msra.mxu0 %v1672
  %2217 = vmatprep.subr.mxu0 0.0
  %2218 = vmatpush1.xpose.msra.mxu0 %v1669
  %2219 = vmatprep.subr.mxu0 0.0
  %2220 = vmatpush1.xpose.msra.mxu0 %v1666
  %2221 = vmatprep.subr.mxu0 0.0
  %2222 = vmatpush1.xpose.msra.mxu0 %v1663
  %2223 = vmatprep.subr.mxu0 0.0
  %2224 = vmatpush1.xpose.msra.mxu0 %v1660
  %2225 = vmatprep.subr.mxu0 0.0
  %2226 = vmatpush1.xpose.msra.mxu0 %v1657
  %2227 = vmatprep.subr.mxu0 0.0
  %2228 = vmatpush1.xpose.msra.mxu0 %v1654
  %2229 = vmatprep.subr.mxu0 0.0
  %2230 = vmatpush1.xpose.msra.mxu0 %v1651
  %2231 = vmatprep.subr.mxu0 0.0
  %2232 = vmatpush1.xpose.msra.mxu0 %v1648
  %2233 = vmatprep.subr.mxu0 0.0
  %2234 = vmatpush1.xpose.msra.mxu0 %v1645
  %2235 = vmatprep.subr.mxu0 0.0
  %2236 = vmatpush1.xpose.msra.mxu0 %v1642
  %2237 = vmatprep.subr.mxu0 0.0
  %2238 = vmatpush1.xpose.msra.mxu0 %v1639
  %2239 = vmatprep.subr.mxu0 0.0
  %2240 = vmatpush2.xpose.msra.mxu0 0.0
  %2241 = vmatprep.subr.mxu0 0.0
  %2242 = vmatpush2.xpose.msra.mxu0 0.0
  %2243 = vmatprep.subr.mxu0 0.0
  %2244 = vmatpush2.xpose.msra.mxu0 0.0
  %2245 = vmatprep.subr.mxu0 0.0
  %2246 = vmatpush2.xpose.msra.mxu0 0.0
  %2247 = vmatprep.subr.mxu0 0.0
  %2248 = vmatpush2.xpose.msra.mxu0 0.0
  %2249 = vmatprep.subr.mxu0 0.0
  %2250 = vmatpush2.xpose.msra.mxu0 0.0
  %2251 = vmatprep.subr.mxu0 0.0
  %2252 = vmatpush2.xpose.msra.mxu0 0.0
  %2253 = vmatprep.subr.mxu0 0.0
  %2254 = vmatpush2.xpose.msra.mxu0 0.0
  %2255 = vmatprep.subr.mxu0 0.0
  %2256 = vmatpush2.xpose.msra.mxu0 0.0
  %2257 = vmatprep.subr.mxu0 0.0
  %2258 = vmatpush2.xpose.msra.mxu0 0.0
  %2259 = vmatprep.subr.mxu0 0.0
  %2260 = vmatpush2.xpose.msra.mxu0 0.0
  %2261 = vmatprep.subr.mxu0 0.0
  %2262 = vmatpush2.xpose.msra.mxu0 0.0
  %2263 = vmatprep.subr.mxu0 0.0
  %2264 = vmatpush2.xpose.msra.mxu0 0.0
  %2265 = vmatprep.subr.mxu0 0.0
  %2266 = vmatpush2.xpose.msra.mxu0 0.0
  %2267 = vmatprep.subr.mxu0 0.0
  %2268 = vmatpush2.xpose.msra.mxu0 0.0
  %2269 = vmatprep.subr.mxu0 0.0
  %2270 = vmatpush2.xpose.msra.mxu0 0.0
  %2271 = vmatprep.mubr.f32.mxu0 0.0
  %2272 = vmatmul.mubr.f32.gmra.mxu0 %v2172
  %v2273 = vpop.f32.mrf.mxu0
  %v2274 = vadd.f32 0.0, %v2273
  %v2275 = vpop.f32.mrf.mxu0
  %2276 = vmatprep.mubr.f32.mxu0 0.0
  %2277 = vmatmul.mubr.f32.gmra.mxu0 %v2175
  %v2278 = vpop.f32.mrf.mxu0
  %v2279 = vadd.f32 0.0, %v2278
  %v2280 = vpop.f32.mrf.mxu0
  %2281 = vmatprep.mubr.f32.mxu0 0.0
  %2282 = vmatmul.mubr.f32.gmra.mxu0 %v2178
  %v2283 = vpop.f32.mrf.mxu0
  %v2284 = vadd.f32 0.0, %v2283
  %v2285 = vpop.f32.mrf.mxu0
  %2286 = vmatprep.mubr.f32.mxu0 0.0
  %2287 = vmatmul.mubr.f32.gmra.mxu0 %v2181
  %v2288 = vpop.f32.mrf.mxu0
  %v2289 = vadd.f32 0.0, %v2288
  %v2290 = vpop.f32.mrf.mxu0
  %2291 = vmatprep.mubr.f32.mxu0 0.0
  %2292 = vmatmul.mubr.f32.gmra.mxu0 %v2184
  %v2293 = vpop.f32.mrf.mxu0
  %v2294 = vadd.f32 0.0, %v2293
  %v2295 = vpop.f32.mrf.mxu0
  %2296 = vmatprep.mubr.f32.mxu0 0.0
  %2297 = vmatmul.mubr.f32.gmra.mxu0 %v2187
  %v2298 = vpop.f32.mrf.mxu0
  %v2299 = vadd.f32 0.0, %v2298
  %v2300 = vpop.f32.mrf.mxu0
  %2301 = vmatprep.mubr.f32.mxu0 0.0
  %2302 = vmatmul.mubr.f32.gmra.mxu0 %v2190
  %v2303 = vpop.f32.mrf.mxu0
  %v2304 = vadd.f32 0.0, %v2303
  %v2305 = vpop.f32.mrf.mxu0
  %2306 = vmatprep.mubr.f32.mxu0 0.0
  %2307 = vmatmul.mubr.f32.gmra.mxu0 %v2193
  %v2308 = vpop.f32.mrf.mxu0
  %v2309 = vadd.f32 0.0, %v2308
  %v2310 = vpop.f32.mrf.mxu0
  %2311 = vmatprep.mubr.f32.mxu0 0.0
  %2312 = vmatmul.mubr.f32.gmra.mxu0 %v2196
  %v2313 = vpop.f32.mrf.mxu0
  %v2314 = vadd.f32 0.0, %v2313
  %v2315 = vpop.f32.mrf.mxu0
  %2316 = vmatprep.mubr.f32.mxu0 0.0
  %2317 = vmatmul.mubr.f32.gmra.mxu0 %v2199
  %v2318 = vpop.f32.mrf.mxu0
  %v2319 = vadd.f32 0.0, %v2318
  %v2320 = vpop.f32.mrf.mxu0
  %2321 = vmatprep.mubr.f32.mxu0 0.0
  %2322 = vmatmul.mubr.f32.gmra.mxu0 %v2202
  %v2323 = vpop.f32.mrf.mxu0
  %v2324 = vadd.f32 0.0, %v2323
  %v2325 = vpop.f32.mrf.mxu0
  %2326 = vmatprep.mubr.f32.mxu0 0.0
  %2327 = vmatmul.mubr.f32.gmra.mxu0 %v2205
  %v2328 = vpop.f32.mrf.mxu0
  %v2329 = vadd.f32 0.0, %v2328
  %v2330 = vpop.f32.mrf.mxu0
  %2331 = vdwg.mxu0
  %2332 = vset.pattern.permute.xlu0 1
  %2333 = vperm.xlu0 %2332, %v173
  %v2334 = vpop.permute.xlu0 %2333
  %2336 = vset.pattern.permute.xlu0 1
  %2337 = vperm.xlu0 %2336, %v174
  %v2338 = vpop.permute.xlu0 %2337
  %2340 = vset.pattern.permute.xlu0 1
  %2341 = vperm.xlu0 %2340, %v175
  %v2342 = vpop.permute.xlu0 %2341
  %2344 = vset.pattern.permute.xlu0 1
  %2345 = vperm.xlu0 %2344, %v176
  %v2346 = vpop.permute.xlu0 %2345
  %2348 = vset.pattern.permute.xlu0 1
  %2349 = vperm.xlu0 %2348, %v177
  %v2350 = vpop.permute.xlu0 %2349
  %2352 = vset.pattern.permute.xlu0 1
  %2353 = vperm.xlu0 %2352, %v178
  %v2354 = vpop.permute.xlu0 %2353
  %2356 = vset.pattern.permute.xlu0 1
  %2357 = vperm.xlu0 %2356, %v179
  %v2358 = vpop.permute.xlu0 %2357
  %2360 = vset.pattern.permute.xlu0 1
  %2361 = vperm.xlu0 %2360, %v180
  %v2362 = vpop.permute.xlu0 %2361
  %2364 = vset.pattern.permute.xlu0 1
  %2365 = vperm.xlu0 %2364, %v181
  %v2366 = vpop.permute.xlu0 %2365
  %2368 = vset.pattern.permute.xlu0 1
  %2369 = vperm.xlu0 %2368, %v182
  %v2370 = vpop.permute.xlu0 %2369
  %2372 = vset.pattern.permute.xlu0 1
  %2373 = vperm.xlu0 %2372, %v183
  %v2374 = vpop.permute.xlu0 %2373
  %2376 = vset.pattern.permute.xlu0 1
  %2377 = vperm.xlu0 %2376, %v184
  %v2378 = vpop.permute.xlu0 %2377
  %v2380 = vmul.f32 %v2334, %v2274
  %v2381 = vmul.f32 %v2338, %v2279
  %v2382 = vmul.f32 %v2342, %v2284
  %v2383 = vmul.f32 %v2346, %v2289
  %v2384 = vmul.f32 %v2350, %v2294
  %v2385 = vmul.f32 %v2354, %v2299
  %v2386 = vmul.f32 %v2358, %v2304
  %v2387 = vmul.f32 %v2362, %v2309
  %v2388 = vmul.f32 %v2366, %v2314
  %v2389 = vmul.f32 %v2370, %v2319
  %v2390 = vmul.f32 %v2374, %v2324
  %v2391 = vmul.f32 %v2378, %v2329
  %v2392 = vadd.f32 %v2023, %v2380
  %v2393 = vadd.f32 %v2024, %v2381
  %v2394 = vadd.f32 %v2025, %v2382
  %v2395 = vadd.f32 %v2026, %v2383
  %v2396 = vadd.f32 %v2027, %v2384
  %v2397 = vadd.f32 %v2028, %v2385
  %v2398 = vadd.f32 %v2029, %v2386
  %v2399 = vadd.f32 %v2030, %v2387
  %v2400 = vadd.f32 %v2031, %v2388
  %v2401 = vadd.f32 %v2032, %v2389
  %v2402 = vadd.f32 %v2033, %v2390
  %v2403 = vadd.f32 %v2034, %v2391
  %v2404 = vmul.f32 %v1618, %v2392
  %v2405 = vmul.f32 %v1619, %v2393
  %v2406 = vmul.f32 %v1620, %v2394
  %v2407 = vmul.f32 %v1621, %v2395
  %v2408 = vmul.f32 %v1622, %v2396
  %v2409 = vmul.f32 %v1623, %v2397
  %v2410 = vmul.f32 %v1624, %v2398
  %v2411 = vmul.f32 %v1625, %v2399
  %v2412 = vmul.f32 %v1626, %v2400
  %v2413 = vmul.f32 %v1627, %v2401
  %v2414 = vmul.f32 %v1628, %v2402
  %v2415 = vmul.f32 %v1629, %v2403
  %vm2416 = vcmask 785408
  %v2418 = vsel %vm2416, %v2404, 0
  %v2421 = vsel %vm2416, %v2405, 0
  %v2424 = vsel %vm2416, %v2406, 0
  %v2427 = vsel %vm2416, %v2407, 0
  %v2430 = vsel %vm2416, %v2408, 0
  %v2433 = vsel %vm2416, %v2409, 0
  %v2436 = vsel %vm2416, %v2410, 0
  %v2439 = vsel %vm2416, %v2411, 0
  %v2442 = vsel %vm2416, %v2412, 0
  %v2445 = vsel %vm2416, %v2413, 0
  %v2448 = vsel %vm2416, %v2414, 0
  %v2451 = vsel %vm2416, %v2415, 0
  %2453 = vmatprep.subr.mxu0 0.0
  %2454 = vmatpush1.msra.mxu0 0.0
  %2455 = vmatprep.subr.mxu0 0.0
  %2456 = vmatpush1.msra.mxu0 0.0
  %2457 = vmatprep.subr.mxu0 0.0
  %2458 = vmatpush1.msra.mxu0 0.0
  %2459 = vmatprep.subr.mxu0 0.0
  %2460 = vmatpush1.msra.mxu0 0.0
  %2461 = vmatprep.subr.mxu0 0.0
  %2462 = vmatpush1.msra.mxu0 %v1294
  %2463 = vmatprep.subr.mxu0 0.0
  %2464 = vmatpush1.msra.mxu0 %v1293
  %2465 = vmatprep.subr.mxu0 0.0
  %2466 = vmatpush1.msra.mxu0 %v1292
  %2467 = vmatprep.subr.mxu0 0.0
  %2468 = vmatpush1.msra.mxu0 %v1291
  %2469 = vmatprep.subr.mxu0 0.0
  %2470 = vmatpush1.msra.mxu0 %v1290
  %2471 = vmatprep.subr.mxu0 0.0
  %2472 = vmatpush1.msra.mxu0 %v1289
  %2473 = vmatprep.subr.mxu0 0.0
  %2474 = vmatpush1.msra.mxu0 %v1288
  %2475 = vmatprep.subr.mxu0 0.0
  %2476 = vmatpush1.msra.mxu0 %v1287
  %2477 = vmatprep.subr.mxu0 0.0
  %2478 = vmatpush1.msra.mxu0 %v1286
  %2479 = vmatprep.subr.mxu0 0.0
  %2480 = vmatpush1.msra.mxu0 %v1285
  %2481 = vmatprep.subr.mxu0 0.0
  %2482 = vmatpush1.msra.mxu0 %v1284
  %2483 = vmatprep.subr.mxu0 0.0
  %2484 = vmatpush1.msra.mxu0 %v1283
  %2485 = vmatprep.subr.mxu0 0.0
  %2486 = vmatpush2.msra.mxu0 0.0
  %2487 = vmatprep.subr.mxu0 0.0
  %2488 = vmatpush2.msra.mxu0 0.0
  %2489 = vmatprep.subr.mxu0 0.0
  %2490 = vmatpush2.msra.mxu0 0.0
  %2491 = vmatprep.subr.mxu0 0.0
  %2492 = vmatpush2.msra.mxu0 0.0
  %2493 = vmatprep.subr.mxu0 0.0
  %2494 = vmatpush2.msra.mxu0 0.0
  %2495 = vmatprep.subr.mxu0 0.0
  %2496 = vmatpush2.msra.mxu0 0.0
  %2497 = vmatprep.subr.mxu0 0.0
  %2498 = vmatpush2.msra.mxu0 0.0
  %2499 = vmatprep.subr.mxu0 0.0
  %2500 = vmatpush2.msra.mxu0 0.0
  %2501 = vmatprep.subr.mxu0 0.0
  %2502 = vmatpush2.msra.mxu0 0.0
  %2503 = vmatprep.subr.mxu0 0.0
  %2504 = vmatpush2.msra.mxu0 0.0
  %2505 = vmatprep.subr.mxu0 0.0
  %2506 = vmatpush2.msra.mxu0 0.0
  %2507 = vmatprep.subr.mxu0 0.0
  %2508 = vmatpush2.msra.mxu0 0.0
  %2509 = vmatprep.subr.mxu0 0.0
  %2510 = vmatpush2.msra.mxu0 0.0
  %2511 = vmatprep.subr.mxu0 0.0
  %2512 = vmatpush2.msra.mxu0 0.0
  %2513 = vmatprep.subr.mxu0 0.0
  %2514 = vmatpush2.msra.mxu0 0.0
  %2515 = vmatprep.subr.mxu0 0.0
  %2516 = vmatpush2.msra.mxu0 0.0
  %2517 = vmatprep.mubr.f32.mxu0 0.0
  %2518 = vmatmul.mubr.f32.gmra.mxu0 %v2418
  %v2519 = vpop.f32.mrf.mxu0
  %v2520 = vadd.f32 0.0, %v2519
  %v2521 = vpop.f32.mrf.mxu0
  %2522 = vmatprep.mubr.f32.mxu0 0.0
  %2523 = vmatmul.mubr.f32.gmra.mxu0 %v2421
  %v2524 = vpop.f32.mrf.mxu0
  %v2525 = vadd.f32 0.0, %v2524
  %v2526 = vpop.f32.mrf.mxu0
  %2527 = vmatprep.mubr.f32.mxu0 0.0
  %2528 = vmatmul.mubr.f32.gmra.mxu0 %v2424
  %v2529 = vpop.f32.mrf.mxu0
  %v2530 = vadd.f32 0.0, %v2529
  %v2531 = vpop.f32.mrf.mxu0
  %2532 = vmatprep.mubr.f32.mxu0 0.0
  %2533 = vmatmul.mubr.f32.gmra.mxu0 %v2427
  %v2534 = vpop.f32.mrf.mxu0
  %v2535 = vadd.f32 0.0, %v2534
  %v2536 = vpop.f32.mrf.mxu0
  %2537 = vmatprep.mubr.f32.mxu0 0.0
  %2538 = vmatmul.mubr.f32.gmra.mxu0 %v2430
  %v2539 = vpop.f32.mrf.mxu0
  %v2540 = vadd.f32 0.0, %v2539
  %v2541 = vpop.f32.mrf.mxu0
  %2542 = vmatprep.mubr.f32.mxu0 0.0
  %2543 = vmatmul.mubr.f32.gmra.mxu0 %v2433
  %v2544 = vpop.f32.mrf.mxu0
  %v2545 = vadd.f32 0.0, %v2544
  %v2546 = vpop.f32.mrf.mxu0
  %2547 = vmatprep.mubr.f32.mxu0 0.0
  %2548 = vmatmul.mubr.f32.gmra.mxu0 %v2436
  %v2549 = vpop.f32.mrf.mxu0
  %v2550 = vadd.f32 0.0, %v2549
  %v2551 = vpop.f32.mrf.mxu0
  %2552 = vmatprep.mubr.f32.mxu0 0.0
  %2553 = vmatmul.mubr.f32.gmra.mxu0 %v2439
  %v2554 = vpop.f32.mrf.mxu0
  %v2555 = vadd.f32 0.0, %v2554
  %v2556 = vpop.f32.mrf.mxu0
  %2557 = vmatprep.mubr.f32.mxu0 0.0
  %2558 = vmatmul.mubr.f32.gmra.mxu0 %v2442
  %v2559 = vpop.f32.mrf.mxu0
  %v2560 = vadd.f32 0.0, %v2559
  %v2561 = vpop.f32.mrf.mxu0
  %2562 = vmatprep.mubr.f32.mxu0 0.0
  %2563 = vmatmul.mubr.f32.gmra.mxu0 %v2445
  %v2564 = vpop.f32.mrf.mxu0
  %v2565 = vadd.f32 0.0, %v2564
  %v2566 = vpop.f32.mrf.mxu0
  %2567 = vmatprep.mubr.f32.mxu0 0.0
  %2568 = vmatmul.mubr.f32.gmra.mxu0 %v2448
  %v2569 = vpop.f32.mrf.mxu0
  %v2570 = vadd.f32 0.0, %v2569
  %v2571 = vpop.f32.mrf.mxu0
  %2572 = vmatprep.mubr.f32.mxu0 0.0
  %2573 = vmatmul.mubr.f32.gmra.mxu0 %v2451
  %v2574 = vpop.f32.mrf.mxu0
  %v2575 = vadd.f32 0.0, %v2574
  %v2576 = vpop.f32.mrf.mxu0
  %2577 = vdwg.mxu0
  %v2578 = vld [vmem:[%s12] sm:$0xff]
  %v2579 = vld [vmem:[%s13] sm:$0x1]
  %v2581 = vlaneseq
  %v2582 = vshrl.u32 %v2581, 7
  %v2583 = vsub.s32 0, %v2582
  %v2584 = vrot.slane %v2579, %v2583
  %v2587 = vsel %vm727, %v2520, 0
  %v2590 = vsel %vm727, %v2525, 0
  %v2593 = vsel %vm727, %v2530, 0
  %v2596 = vsel %vm727, %v2535, 0
  %v2599 = vsel %vm727, %v2540, 0
  %v2602 = vsel %vm727, %v2545, 0
  %v2605 = vsel %vm727, %v2550, 0
  %v2608 = vsel %vm727, %v2555, 0
  %v2611 = vsel %vm727, %v2560, 0
  %v2614 = vsel %vm727, %v2565, 0
  %v2617 = vsel %vm727, %v2570, 0
  %v2620 = vsel %vm727, %v2575, 0
  %2622 = vmatprep.subr.mxu0 0.0
  %2623 = vmatpush1.msra.mxu0 0.0
  %2624 = vmatprep.subr.mxu0 0.0
  %2625 = vmatpush1.msra.mxu0 0.0
  %2626 = vmatprep.subr.mxu0 0.0
  %2627 = vmatpush1.msra.mxu0 0.0
  %2628 = vmatprep.subr.mxu0 0.0
  %2629 = vmatpush1.msra.mxu0 0.0
  %2630 = vmatprep.subr.mxu0 0.0
  %2631 = vmatpush1.msra.mxu0 0.0
  %2632 = vmatprep.subr.mxu0 0.0
  %2633 = vmatpush1.msra.mxu0 0.0
  %2634 = vmatprep.subr.mxu0 0.0
  %2635 = vmatpush1.msra.mxu0 0.0
  %2636 = vmatprep.subr.mxu0 0.0
  %2637 = vmatpush1.msra.mxu0 0.0
  %2638 = vmatprep.subr.mxu0 0.0
  %2639 = vmatpush1.msra.mxu0 0.0
  %2640 = vmatprep.subr.mxu0 0.0
  %2641 = vmatpush1.msra.mxu0 0.0
  %2642 = vmatprep.subr.mxu0 0.0
  %2643 = vmatpush1.msra.mxu0 0.0
  %2644 = vmatprep.subr.mxu0 0.0
  %2645 = vmatpush1.msra.mxu0 0.0
  %2646 = vmatprep.subr.mxu0 0.0
  %2647 = vmatpush1.msra.mxu0 0.0
  %2648 = vmatprep.subr.mxu0 0.0
  %2649 = vmatpush1.msra.mxu0 0.0
  %2650 = vmatprep.subr.mxu0 0.0
  %2651 = vmatpush1.msra.mxu0 0.0
  %2652 = vmatprep.subr.mxu0 0.0
  %2653 = vmatpush1.msra.mxu0 %v2578
  %2654 = vmatprep.subr.mxu0 0.0
  %2655 = vmatpush2.msra.mxu0 0.0
  %2656 = vmatprep.subr.mxu0 0.0
  %2657 = vmatpush2.msra.mxu0 0.0
  %2658 = vmatprep.subr.mxu0 0.0
  %2659 = vmatpush2.msra.mxu0 0.0
  %2660 = vmatprep.subr.mxu0 0.0
  %2661 = vmatpush2.msra.mxu0 0.0
  %2662 = vmatprep.subr.mxu0 0.0
  %2663 = vmatpush2.msra.mxu0 0.0
  %2664 = vmatprep.subr.mxu0 0.0
  %2665 = vmatpush2.msra.mxu0 0.0
  %2666 = vmatprep.subr.mxu0 0.0
  %2667 = vmatpush2.msra.mxu0 0.0
  %2668 = vmatprep.subr.mxu0 0.0
  %2669 = vmatpush2.msra.mxu0 0.0
  %2670 = vmatprep.subr.mxu0 0.0
  %2671 = vmatpush2.msra.mxu0 0.0
  %2672 = vmatprep.subr.mxu0 0.0
  %2673 = vmatpush2.msra.mxu0 0.0
  %2674 = vmatprep.subr.mxu0 0.0
  %2675 = vmatpush2.msra.mxu0 0.0
  %2676 = vmatprep.subr.mxu0 0.0
  %2677 = vmatpush2.msra.mxu0 0.0
  %2678 = vmatprep.subr.mxu0 0.0
  %2679 = vmatpush2.msra.mxu0 0.0
  %2680 = vmatprep.subr.mxu0 0.0
  %2681 = vmatpush2.msra.mxu0 0.0
  %2682 = vmatprep.subr.mxu0 0.0
  %2683 = vmatpush2.msra.mxu0 0.0
  %2684 = vmatprep.subr.mxu0 0.0
  %2685 = vmatpush2.msra.mxu0 0.0
  %2686 = vmatprep.mubr.f32.mxu0 0.0
  %2687 = vmatmul.mubr.f32.gmra.mxu0 %v2587
  %v2688 = vpop.f32.mrf.mxu0
  %v2689 = vadd.f32 %v2584, %v2688
  %v2690 = vpop.f32.mrf.mxu0
  %2691 = vmatprep.mubr.f32.mxu0 0.0
  %2692 = vmatmul.mubr.f32.gmra.mxu0 %v2590
  %v2693 = vpop.f32.mrf.mxu0
  %v2694 = vadd.f32 %v2584, %v2693
  %v2695 = vpop.f32.mrf.mxu0
  %2696 = vmatprep.mubr.f32.mxu0 0.0
  %2697 = vmatmul.mubr.f32.gmra.mxu0 %v2593
  %v2698 = vpop.f32.mrf.mxu0
  %v2699 = vadd.f32 %v2584, %v2698
  %v2700 = vpop.f32.mrf.mxu0
  %2701 = vmatprep.mubr.f32.mxu0 0.0
  %2702 = vmatmul.mubr.f32.gmra.mxu0 %v2596
  %v2703 = vpop.f32.mrf.mxu0
  %v2704 = vadd.f32 %v2584, %v2703
  %v2705 = vpop.f32.mrf.mxu0
  %2706 = vmatprep.mubr.f32.mxu0 0.0
  %2707 = vmatmul.mubr.f32.gmra.mxu0 %v2599
  %v2708 = vpop.f32.mrf.mxu0
  %v2709 = vadd.f32 %v2584, %v2708
  %v2710 = vpop.f32.mrf.mxu0
  %2711 = vmatprep.mubr.f32.mxu0 0.0
  %2712 = vmatmul.mubr.f32.gmra.mxu0 %v2602
  %v2713 = vpop.f32.mrf.mxu0
  %v2714 = vadd.f32 %v2584, %v2713
  %v2715 = vpop.f32.mrf.mxu0
  %2716 = vmatprep.mubr.f32.mxu0 0.0
  %2717 = vmatmul.mubr.f32.gmra.mxu0 %v2605
  %v2718 = vpop.f32.mrf.mxu0
  %v2719 = vadd.f32 %v2584, %v2718
  %v2720 = vpop.f32.mrf.mxu0
  %2721 = vmatprep.mubr.f32.mxu0 0.0
  %2722 = vmatmul.mubr.f32.gmra.mxu0 %v2608
  %v2723 = vpop.f32.mrf.mxu0
  %v2724 = vadd.f32 %v2584, %v2723
  %v2725 = vpop.f32.mrf.mxu0
  %2726 = vmatprep.mubr.f32.mxu0 0.0
  %2727 = vmatmul.mubr.f32.gmra.mxu0 %v2611
  %v2728 = vpop.f32.mrf.mxu0
  %v2729 = vadd.f32 %v2584, %v2728
  %v2730 = vpop.f32.mrf.mxu0
  %2731 = vmatprep.mubr.f32.mxu0 0.0
  %2732 = vmatmul.mubr.f32.gmra.mxu0 %v2614
  %v2733 = vpop.f32.mrf.mxu0
  %v2734 = vadd.f32 %v2584, %v2733
  %v2735 = vpop.f32.mrf.mxu0
  %2736 = vmatprep.mubr.f32.mxu0 0.0
  %2737 = vmatmul.mubr.f32.gmra.mxu0 %v2617
  %v2738 = vpop.f32.mrf.mxu0
  %v2739 = vadd.f32 %v2584, %v2738
  %v2740 = vpop.f32.mrf.mxu0
  %2741 = vmatprep.mubr.f32.mxu0 0.0
  %2742 = vmatmul.mubr.f32.gmra.mxu0 %v2620
  %v2743 = vpop.f32.mrf.mxu0
  %v2744 = vadd.f32 %v2584, %v2743
  %v2745 = vpop.f32.mrf.mxu0
  %2746 = vdwg.mxu0
  %vm2747 = vcmask 130048
  %v2748 = vsel %vm2747, %v2689, 0.0
  %2749 = vadd.xlane.f32.xlu0 %v2748
  %v2750 = vpop.xlane.xlu0 %2749
  %v2751 = vsel %vm2747, %v2694, 0.0
  %2752 = vadd.xlane.f32.xlu0 %v2751
  %v2753 = vpop.xlane.xlu0 %2752
  %v2754 = vsel %vm2747, %v2699, 0.0
  %2755 = vadd.xlane.f32.xlu0 %v2754
  %v2756 = vpop.xlane.xlu0 %2755
  %v2757 = vsel %vm2747, %v2704, 0.0
  %2758 = vadd.xlane.f32.xlu0 %v2757
  %v2759 = vpop.xlane.xlu0 %2758
  %v2760 = vsel %vm2747, %v2709, 0.0
  %2761 = vadd.xlane.f32.xlu0 %v2760
  %v2762 = vpop.xlane.xlu0 %2761
  %v2763 = vsel %vm2747, %v2714, 0.0
  %2764 = vadd.xlane.f32.xlu0 %v2763
  %v2765 = vpop.xlane.xlu0 %2764
  %v2766 = vsel %vm2747, %v2719, 0.0
  %2767 = vadd.xlane.f32.xlu0 %v2766
  %v2768 = vpop.xlane.xlu0 %2767
  %v2769 = vsel %vm2747, %v2724, 0.0
  %2770 = vadd.xlane.f32.xlu0 %v2769
  %v2771 = vpop.xlane.xlu0 %2770
  %v2772 = vsel %vm2747, %v2729, 0.0
  %2773 = vadd.xlane.f32.xlu0 %v2772
  %v2774 = vpop.xlane.xlu0 %2773
  %v2775 = vsel %vm2747, %v2734, 0.0
  %2776 = vadd.xlane.f32.xlu0 %v2775
  %v2777 = vpop.xlane.xlu0 %2776
  %v2778 = vsel %vm2747, %v2739, 0.0
  %2779 = vadd.xlane.f32.xlu0 %v2778
  %v2780 = vpop.xlane.xlu0 %2779
  %v2781 = vsel %vm2747, %v2744, 0.0
  %2782 = vadd.xlane.f32.xlu0 %v2781
  %v2783 = vpop.xlane.xlu0 %2782
  %v2784 = vmul.f32 %v137, %v2750
  %v2785 = vmul.f32 %v138, %v2753
  %v2786 = vmul.f32 %v139, %v2756
  %v2787 = vmul.f32 %v140, %v2759
  %v2788 = vmul.f32 %v141, %v2762
  %v2789 = vmul.f32 %v142, %v2765
  %v2790 = vmul.f32 %v143, %v2768
  %v2791 = vmul.f32 %v144, %v2771
  %v2792 = vmul.f32 %v145, %v2774
  %v2793 = vmul.f32 %v146, %v2777
  %v2794 = vmul.f32 %v147, %v2780
  %v2795 = vmul.f32 %v148, %v2783
  %v2796 = vsel %vm1637, %v2784, 0.0
  %v2797 = vsel %vm1637, %v2785, 0.0
  %v2798 = vadd.f32 %v2796, %v2797
  %v2799 = vsel %vm1637, %v2786, 0.0
  %v2800 = vadd.f32 %v2798, %v2799
  %v2801 = vsel %vm1637, %v2787, 0.0
  %v2802 = vadd.f32 %v2800, %v2801
  %v2803 = vsel %vm1637, %v2788, 0.0
  %v2804 = vadd.f32 %v2802, %v2803
  %v2805 = vsel %vm1637, %v2789, 0.0
  %v2806 = vadd.f32 %v2804, %v2805
  %v2807 = vsel %vm1637, %v2790, 0.0
  %v2808 = vadd.f32 %v2806, %v2807
  %v2809 = vsel %vm1637, %v2791, 0.0
  %v2810 = vadd.f32 %v2808, %v2809
  %v2811 = vsel %vm1637, %v2792, 0.0
  %v2812 = vadd.f32 %v2810, %v2811
  %v2813 = vsel %vm1637, %v2793, 0.0
  %v2814 = vadd.f32 %v2812, %v2813
  %v2815 = vsel %vm1637, %v2794, 0.0
  %v2816 = vadd.f32 %v2814, %v2815
  %v2817 = vsel %vm1637, %v2795, 0.0
  %v2818 = vadd.f32 %v2816, %v2817
  %v2819 = vrot.slane %v2818, 4
  %v2820 = vadd.f32 %v2818, %v2819
  %v2821 = vrot.slane %v2820, 2
  %v2822 = vadd.f32 %v2820, %v2821
  %v2823 = vrot.slane %v2822, 1
  %v2824 = vadd.f32 %v2822, %v2823
  %v2825 = vrcp.pop 256.0
  %v2826 = vmul.f32 %v2824, %v2825
  %v2827 = vmul.f32 %v137, %v2826
  %v2828 = vmul.f32 %v138, %v2826
  %v2829 = vmul.f32 %v139, %v2826
  %v2830 = vmul.f32 %v140, %v2826
  %v2831 = vmul.f32 %v141, %v2826
  %v2832 = vmul.f32 %v142, %v2826
  %v2833 = vmul.f32 %v143, %v2826
  %v2834 = vmul.f32 %v144, %v2826
  %v2835 = vmul.f32 %v145, %v2826
  %v2836 = vmul.f32 %v146, %v2826
  %v2837 = vmul.f32 %v147, %v2826
  %v2838 = vmul.f32 %v148, %v2826
  %v2839 = vsel %vm1637, %v2827, 0.0
  %2840 = vadd.xlane.f32.xlu0 %v2839
  %v2841 = vpop.xlane.xlu0 %2840
  %v2842 = vsel %vm1637, %v2828, 0.0
  %2843 = vadd.xlane.f32.xlu0 %v2842
  %v2844 = vpop.xlane.xlu0 %2843
  %v2845 = vsel %vm1637, %v2829, 0.0
  %2846 = vadd.xlane.f32.xlu0 %v2845
  %v2847 = vpop.xlane.xlu0 %2846
  %v2848 = vsel %vm1637, %v2830, 0.0
  %2849 = vadd.xlane.f32.xlu0 %v2848
  %v2850 = vpop.xlane.xlu0 %2849
  %v2851 = vsel %vm1637, %v2831, 0.0
  %2852 = vadd.xlane.f32.xlu0 %v2851
  %v2853 = vpop.xlane.xlu0 %2852
  %v2854 = vsel %vm1637, %v2832, 0.0
  %2855 = vadd.xlane.f32.xlu0 %v2854
  %v2856 = vpop.xlane.xlu0 %2855
  %v2857 = vsel %vm1637, %v2833, 0.0
  %2858 = vadd.xlane.f32.xlu0 %v2857
  %v2859 = vpop.xlane.xlu0 %2858
  %v2860 = vsel %vm1637, %v2834, 0.0
  %2861 = vadd.xlane.f32.xlu0 %v2860
  %v2862 = vpop.xlane.xlu0 %2861
  %v2863 = vsel %vm1637, %v2835, 0.0
  %2864 = vadd.xlane.f32.xlu0 %v2863
  %v2865 = vpop.xlane.xlu0 %2864
  %v2866 = vsel %vm1637, %v2836, 0.0
  %2867 = vadd.xlane.f32.xlu0 %v2866
  %v2868 = vpop.xlane.xlu0 %2867
  %v2869 = vsel %vm1637, %v2837, 0.0
  %2870 = vadd.xlane.f32.xlu0 %v2869
  %v2871 = vpop.xlane.xlu0 %2870
  %v2872 = vsel %vm1637, %v2838, 0.0
  %2873 = vadd.xlane.f32.xlu0 %v2872
  %v2874 = vpop.xlane.xlu0 %2873
  %v2875 = vsub.f32 %v2689, %v2841
  %v2876 = vsub.f32 %v2694, %v2844
  %v2877 = vsub.f32 %v2699, %v2847
  %v2878 = vsub.f32 %v2704, %v2850
  %v2879 = vsub.f32 %v2709, %v2853
  %v2880 = vsub.f32 %v2714, %v2856
  %v2881 = vsub.f32 %v2719, %v2859
  %v2882 = vsub.f32 %v2724, %v2862
  %v2883 = vsub.f32 %v2729, %v2865
  %v2884 = vsub.f32 %v2734, %v2868
  %v2885 = vsub.f32 %v2739, %v2871
  %v2886 = vsub.f32 %v2744, %v2874
  %v2887 = vmul.f32 %v2875, %v2875
  %v2888 = vmul.f32 %v2876, %v2876
  %v2889 = vmul.f32 %v2877, %v2877
  %v2890 = vmul.f32 %v2878, %v2878
  %v2891 = vmul.f32 %v2879, %v2879
  %v2892 = vmul.f32 %v2880, %v2880
  %v2893 = vmul.f32 %v2881, %v2881
  %v2894 = vmul.f32 %v2882, %v2882
  %v2895 = vmul.f32 %v2883, %v2883
  %v2896 = vmul.f32 %v2884, %v2884
  %v2897 = vmul.f32 %v2885, %v2885
  %v2898 = vmul.f32 %v2886, %v2886
  %v2899 = vsel %vm2747, %v2887, 0.0
  %2900 = vadd.xlane.f32.xlu0 %v2899
  %v2901 = vpop.xlane.xlu0 %2900
  %v2902 = vsel %vm2747, %v2888, 0.0
  %2903 = vadd.xlane.f32.xlu0 %v2902
  %v2904 = vpop.xlane.xlu0 %2903
  %v2905 = vsel %vm2747, %v2889, 0.0
  %2906 = vadd.xlane.f32.xlu0 %v2905
  %v2907 = vpop.xlane.xlu0 %2906
  %v2908 = vsel %vm2747, %v2890, 0.0
  %2909 = vadd.xlane.f32.xlu0 %v2908
  %v2910 = vpop.xlane.xlu0 %2909
  %v2911 = vsel %vm2747, %v2891, 0.0
  %2912 = vadd.xlane.f32.xlu0 %v2911
  %v2913 = vpop.xlane.xlu0 %2912
  %v2914 = vsel %vm2747, %v2892, 0.0
  %2915 = vadd.xlane.f32.xlu0 %v2914
  %v2916 = vpop.xlane.xlu0 %2915
  %v2917 = vsel %vm2747, %v2893, 0.0
  %2918 = vadd.xlane.f32.xlu0 %v2917
  %v2919 = vpop.xlane.xlu0 %2918
  %v2920 = vsel %vm2747, %v2894, 0.0
  %2921 = vadd.xlane.f32.xlu0 %v2920
  %v2922 = vpop.xlane.xlu0 %2921
  %v2923 = vsel %vm2747, %v2895, 0.0
  %2924 = vadd.xlane.f32.xlu0 %v2923
  %v2925 = vpop.xlane.xlu0 %2924
  %v2926 = vsel %vm2747, %v2896, 0.0
  %2927 = vadd.xlane.f32.xlu0 %v2926
  %v2928 = vpop.xlane.xlu0 %2927
  %v2929 = vsel %vm2747, %v2897, 0.0
  %2930 = vadd.xlane.f32.xlu0 %v2929
  %v2931 = vpop.xlane.xlu0 %2930
  %v2932 = vsel %vm2747, %v2898, 0.0
  %2933 = vadd.xlane.f32.xlu0 %v2932
  %v2934 = vpop.xlane.xlu0 %2933
  %v2935 = vmul.f32 %v137, %v2901
  %v2936 = vmul.f32 %v138, %v2904
  %v2937 = vmul.f32 %v139, %v2907
  %v2938 = vmul.f32 %v140, %v2910
  %v2939 = vmul.f32 %v141, %v2913
  %v2940 = vmul.f32 %v142, %v2916
  %v2941 = vmul.f32 %v143, %v2919
  %v2942 = vmul.f32 %v144, %v2922
  %v2943 = vmul.f32 %v145, %v2925
  %v2944 = vmul.f32 %v146, %v2928
  %v2945 = vmul.f32 %v147, %v2931
  %v2946 = vmul.f32 %v148, %v2934
  %v2947 = vsel %vm1637, %v2935, 0.0
  %v2948 = vsel %vm1637, %v2936, 0.0
  %v2949 = vadd.f32 %v2947, %v2948
  %v2950 = vsel %vm1637, %v2937, 0.0
  %v2951 = vadd.f32 %v2949, %v2950
  %v2952 = vsel %vm1637, %v2938, 0.0
  %v2953 = vadd.f32 %v2951, %v2952
  %v2954 = vsel %vm1637, %v2939, 0.0
  %v2955 = vadd.f32 %v2953, %v2954
  %v2956 = vsel %vm1637, %v2940, 0.0
  %v2957 = vadd.f32 %v2955, %v2956
  %v2958 = vsel %vm1637, %v2941, 0.0
  %v2959 = vadd.f32 %v2957, %v2958
  %v2960 = vsel %vm1637, %v2942, 0.0
  %v2961 = vadd.f32 %v2959, %v2960
  %v2962 = vsel %vm1637, %v2943, 0.0
  %v2963 = vadd.f32 %v2961, %v2962
  %v2964 = vsel %vm1637, %v2944, 0.0
  %v2965 = vadd.f32 %v2963, %v2964
  %v2966 = vsel %vm1637, %v2945, 0.0
  %v2967 = vadd.f32 %v2965, %v2966
  %v2968 = vsel %vm1637, %v2946, 0.0
  %v2969 = vadd.f32 %v2967, %v2968
  %v2970 = vrot.slane %v2969, 4
  %v2971 = vadd.f32 %v2969, %v2970
  %v2972 = vrot.slane %v2971, 2
  %v2973 = vadd.f32 %v2971, %v2972
  %v2974 = vrot.slane %v2973, 1
  %v2975 = vadd.f32 %v2973, %v2974
  %v2976 = vmul.f32 %v2975, %v2825
  %v2977 = vld [vmem:[%s14] sm:$0x1]
  %v2978 = vadd.f32 %v2976, 1e-05
  %v2979 = vrsqrt.pop %v2978
  %v2980 = vmul.f32 %v2977, %v2979
  %v2982 = vlaneseq
  %v2983 = vshrl.u32 %v2982, 7
  %v2984 = vsub.s32 0, %v2983
  %v2985 = vrot.slane %v2980, %v2984
  %v2987 = vmul.f32 %v137, %v2985
  %v2988 = vmul.f32 %v138, %v2985
  %v2989 = vmul.f32 %v139, %v2985
  %v2990 = vmul.f32 %v140, %v2985
  %v2991 = vmul.f32 %v141, %v2985
  %v2992 = vmul.f32 %v142, %v2985
  %v2993 = vmul.f32 %v143, %v2985
  %v2994 = vmul.f32 %v144, %v2985
  %v2995 = vmul.f32 %v145, %v2985
  %v2996 = vmul.f32 %v146, %v2985
  %v2997 = vmul.f32 %v147, %v2985
  %v2998 = vmul.f32 %v148, %v2985
  %v2999 = vsel %vm1637, %v2987, 0.0
  %3000 = vadd.xlane.f32.xlu0 %v2999
  %v3001 = vpop.xlane.xlu0 %3000
  %v3002 = vsel %vm1637, %v2988, 0.0
  %3003 = vadd.xlane.f32.xlu0 %v3002
  %v3004 = vpop.xlane.xlu0 %3003
  %v3005 = vsel %vm1637, %v2989, 0.0
  %3006 = vadd.xlane.f32.xlu0 %v3005
  %v3007 = vpop.xlane.xlu0 %3006
  %v3008 = vsel %vm1637, %v2990, 0.0
  %3009 = vadd.xlane.f32.xlu0 %v3008
  %v3010 = vpop.xlane.xlu0 %3009
  %v3011 = vsel %vm1637, %v2991, 0.0
  %3012 = vadd.xlane.f32.xlu0 %v3011
  %v3013 = vpop.xlane.xlu0 %3012
  %v3014 = vsel %vm1637, %v2992, 0.0
  %3015 = vadd.xlane.f32.xlu0 %v3014
  %v3016 = vpop.xlane.xlu0 %3015
  %v3017 = vsel %vm1637, %v2993, 0.0
  %3018 = vadd.xlane.f32.xlu0 %v3017
  %v3019 = vpop.xlane.xlu0 %3018
  %v3020 = vsel %vm1637, %v2994, 0.0
  %3021 = vadd.xlane.f32.xlu0 %v3020
  %v3022 = vpop.xlane.xlu0 %3021
  %v3023 = vsel %vm1637, %v2995, 0.0
  %3024 = vadd.xlane.f32.xlu0 %v3023
  %v3025 = vpop.xlane.xlu0 %3024
  %v3026 = vsel %vm1637, %v2996, 0.0
  %3027 = vadd.xlane.f32.xlu0 %v3026
  %v3028 = vpop.xlane.xlu0 %3027
  %v3029 = vsel %vm1637, %v2997, 0.0
  %3030 = vadd.xlane.f32.xlu0 %v3029
  %v3031 = vpop.xlane.xlu0 %3030
  %v3032 = vsel %vm1637, %v2998, 0.0
  %3033 = vadd.xlane.f32.xlu0 %v3032
  %v3034 = vpop.xlane.xlu0 %3033
  %v3035 = vmul.f32 %v2875, %v3001
  %v3036 = vmul.f32 %v2876, %v3004
  %v3037 = vmul.f32 %v2877, %v3007
  %v3038 = vmul.f32 %v2878, %v3010
  %v3039 = vmul.f32 %v2879, %v3013
  %v3040 = vmul.f32 %v2880, %v3016
  %v3041 = vmul.f32 %v2881, %v3019
  %v3042 = vmul.f32 %v2882, %v3022
  %v3043 = vmul.f32 %v2883, %v3025
  %v3044 = vmul.f32 %v2884, %v3028
  %v3045 = vmul.f32 %v2885, %v3031
  %v3046 = vmul.f32 %v2886, %v3034
  %v3047 = vld [vmem:[%s15] sm:$0x1]
  %v3049 = vlaneseq
  %v3050 = vshrl.u32 %v3049, 7
  %v3051 = vsub.s32 0, %v3050
  %v3052 = vrot.slane %v3047, %v3051
  %v3054 = vmul.f32 %v137, %v3052
  %v3055 = vmul.f32 %v138, %v3052
  %v3056 = vmul.f32 %v139, %v3052
  %v3057 = vmul.f32 %v140, %v3052
  %v3058 = vmul.f32 %v141, %v3052
  %v3059 = vmul.f32 %v142, %v3052
  %v3060 = vmul.f32 %v143, %v3052
  %v3061 = vmul.f32 %v144, %v3052
  %v3062 = vmul.f32 %v145, %v3052
  %v3063 = vmul.f32 %v146, %v3052
  %v3064 = vmul.f32 %v147, %v3052
  %v3065 = vmul.f32 %v148, %v3052
  %v3066 = vsel %vm1637, %v3054, 0.0
  %3067 = vadd.xlane.f32.xlu0 %v3066
  %v3068 = vpop.xlane.xlu0 %3067
  %v3069 = vsel %vm1637, %v3055, 0.0
  %3070 = vadd.xlane.f32.xlu0 %v3069
  %v3071 = vpop.xlane.xlu0 %3070
  %v3072 = vsel %vm1637, %v3056, 0.0
  %3073 = vadd.xlane.f32.xlu0 %v3072
  %v3074 = vpop.xlane.xlu0 %3073
  %v3075 = vsel %vm1637, %v3057, 0.0
  %3076 = vadd.xlane.f32.xlu0 %v3075
  %v3077 = vpop.xlane.xlu0 %3076
  %v3078 = vsel %vm1637, %v3058, 0.0
  %3079 = vadd.xlane.f32.xlu0 %v3078
  %v3080 = vpop.xlane.xlu0 %3079
  %v3081 = vsel %vm1637, %v3059, 0.0
  %3082 = vadd.xlane.f32.xlu0 %v3081
  %v3083 = vpop.xlane.xlu0 %3082
  %v3084 = vsel %vm1637, %v3060, 0.0
  %3085 = vadd.xlane.f32.xlu0 %v3084
  %v3086 = vpop.xlane.xlu0 %3085
  %v3087 = vsel %vm1637, %v3061, 0.0
  %3088 = vadd.xlane.f32.xlu0 %v3087
  %v3089 = vpop.xlane.xlu0 %3088
  %v3090 = vsel %vm1637, %v3062, 0.0
  %3091 = vadd.xlane.f32.xlu0 %v3090
  %v3092 = vpop.xlane.xlu0 %3091
  %v3093 = vsel %vm1637, %v3063, 0.0
  %3094 = vadd.xlane.f32.xlu0 %v3093
  %v3095 = vpop.xlane.xlu0 %3094
  %v3096 = vsel %vm1637, %v3064, 0.0
  %3097 = vadd.xlane.f32.xlu0 %v3096
  %v3098 = vpop.xlane.xlu0 %3097
  %v3099 = vsel %vm1637, %v3065, 0.0
  %3100 = vadd.xlane.f32.xlu0 %v3099
  %v3101 = vpop.xlane.xlu0 %3100
  %v3102 = vadd.f32 %v3035, %v3068
  %v3103 = vadd.f32 %v3036, %v3071
  %v3104 = vadd.f32 %v3037, %v3074
  %v3105 = vadd.f32 %v3038, %v3077
  %v3106 = vadd.f32 %v3039, %v3080
  %v3107 = vadd.f32 %v3040, %v3083
  %v3108 = vadd.f32 %v3041, %v3086
  %v3109 = vadd.f32 %v3042, %v3089
  %v3110 = vadd.f32 %v3043, %v3092
  %v3111 = vadd.f32 %v3044, %v3095
  %v3112 = vadd.f32 %v3045, %v3098
  %v3113 = vadd.f32 %v3046, %v3101
  %3114 = vst.msk [vmem:[%s16] sm:$0xff] %vm2747, %v3102
  %3115 = vst.msk [vmem:[%s16 + $0x8] sm:$0xff] %vm2747, %v3103
  %3116 = vst.msk [vmem:[%s16 + $0x10] sm:$0xff] %vm2747, %v3104
  %3117 = vst.msk [vmem:[%s16 + $0x18] sm:$0xff] %vm2747, %v3105
  %3118 = vst.msk [vmem:[%s16 + $0x20] sm:$0xff] %vm2747, %v3106
  %3119 = vst.msk [vmem:[%s16 + $0x28] sm:$0xff] %vm2747, %v3107
  %3120 = vst.msk [vmem:[%s16 + $0x30] sm:$0xff] %vm2747, %v3108
  %3121 = vst.msk [vmem:[%s16 + $0x38] sm:$0xff] %vm2747, %v3109
  %3122 = vst.msk [vmem:[%s16 + $0x40] sm:$0xff] %vm2747, %v3110
  %3123 = vst.msk [vmem:[%s16 + $0x48] sm:$0xff] %vm2747, %v3111
  %3124 = vst.msk [vmem:[%s16 + $0x50] sm:$0xff] %vm2747, %v3112
  %3125 = vst.msk [vmem:[%s16 + $0x58] sm:$0xff] %vm2747, %v3113
  // Predicated region
  $region66: #{stgcn_block_forward.2} parent=0 // pred_check
    _
  $region67: #{stgcn_block_forward.2} parent=0 // pred_check_branch
    %3127 = sbr.rel (0) target = $region69
  $region68: #{stgcn_block_forward.2} parent=0 // pred_region
    _
  $region69: #{stgcn_block_forward.2} parent=0 // pred_fallthru
    _
  // Predicated region
  $region70: #{stgcn_block_forward.2} parent=0 // pred_check
    _
  $region71: #{stgcn_block_forward.2} parent=0 // pred_check_branch
    %3129 = sbr.rel (0) target = $region73
  $region72: #{stgcn_block_forward.2} parent=0 // pred_region
    _
  $region73: #{stgcn_block_forward.2} parent=0 // pred_fallthru
    _

</llo_original>
